<compile_context>
chip_gen: v7x
topology: tpu7x:2x2x1
jax: 0.10.0
libtpu: 0.0.40
codegen_flags: <defaults>
</compile_context>

<pallas_src>
import functools

import numpy as np
import jax
import jax.numpy as jnp
from jax import lax
from jax.experimental import pallas as pl
from jax.experimental.pallas import tpu as pltpu


# ----------------------------------------------------------------------------
# Pallas kernel
# ----------------------------------------------------------------------------
def upblock_kernel(x_ref, t_ref, mask_ref,
                   g1m_ref, g1mt_ref, gamma1_ref, beta1_ref,
                   wc1_ref, bc1_ref, wt_ref, bt_ref,
                   g2m_ref, g2mt_ref, gamma2_ref, beta2_ref,
                   wc2_ref, bc2_ref, wsc_ref, bsc_ref,
                   wp_ref, bp_ref, wo_ref, bo_ref,
                   out_ref, *, H, W, n_groups, has_attn, d_k):
    f32 = jnp.float32
    bf16 = jnp.bfloat16
    Bt, HW, Cin = x_ref.shape
    Cout = out_ref.shape[-1]
    M = Bt * HW                                  # fold batch into the MXU M dim

    x3 = x_ref[...].astype(f32)                  # (Bt, HW, Cin)

    def silu(v):
        return v * jax.nn.sigmoid(v)

    def group_norm(v3, gm_ref, gmt_ref, gamma_ref, beta_ref):
        # v3: (Bt, HW, C). PyTorch GroupNorm: per-(batch, group) stats over (C/g, H, W).
        # The four tiny one-hot matmuls are fused into two by stacking [s1; s2].
        C = v3.shape[-1]
        cnt = float((C // n_groups) * HW)
        s1 = jnp.sum(v3, axis=1)                               # (Bt, C)
        s2 = jnp.sum(v3 * v3, axis=1)                          # (Bt, C)
        s12 = jnp.concatenate([s1, s2], axis=0)                # (2Bt, C)
        g12 = jnp.dot(s12, gm_ref[...],
                      preferred_element_type=f32) * (1.0 / cnt)      # (2Bt, g)
        mc12 = jnp.dot(g12, gmt_ref[...], preferred_element_type=f32)  # (2Bt, C)
        mean_c = mc12[:Bt]
        var_c = jnp.maximum(mc12[Bt:] - mean_c * mean_c, 0.0)  # clamp cancellation
        vn = (v3 - mean_c[:, None, :]) * lax.rsqrt(var_c[:, None, :] + 1e-5)
        return vn * gamma_ref[...] + beta_ref[...]

    def im2col(v3):
        # v3: (Bt, HW, C) f32 -> (M, 9*C) bf16 of 3x3 same-padding neighborhoods.
        # Rolls go to the XLU slot; the boundary masks are precomputed host-side
        # and applied as one broadcast multiply per tap; each tap is cast to
        # bf16 immediately so the concat temporary is bf16.
        C = v3.shape[-1]
        v2 = v3.reshape(M, C)
        cols = []
        j = 0
        for dh in (-1, 0, 1):
            for dw in (-1, 0, 1):
                off = dh * W + dw
                if off == 0:
                    cols.append(v2.astype(bf16))               # center tap: always valid
                else:
                    shifted = pltpu.roll(v2, (-off) % M, axis=0)
                    cols.append((shifted * mask_ref[j]).astype(bf16))
                j += 1
        return jnp.concatenate(cols, axis=1)                   # (M, 9C) bf16

    def conv3x3(v3, w_ref, b_ref):
        patches = im2col(v3)                                             # (M, 9C) bf16
        y = jnp.dot(patches, w_ref[...], preferred_element_type=f32)     # (M, Cout)
        return y.reshape(Bt, HW, Cout) + b_ref[...]

    # ---------------- ResidualBlock ----------------
    h = conv3x3(silu(group_norm(x3, g1m_ref, g1mt_ref, gamma1_ref, beta1_ref)),
                wc1_ref, bc1_ref)

    t2 = t_ref[...].reshape(Bt, t_ref.shape[-1]).astype(f32)             # (Bt, Tc)
    temb = jnp.dot(silu(t2).astype(bf16), wt_ref[...],
                   preferred_element_type=f32) + bt_ref[...]             # (Bt, Cout)
    h = h + temb[:, None, :]

    # TODO(synk): dropout treated as identity (eval mode).
    h = conv3x3(silu(group_norm(h, g2m_ref, g2mt_ref, gamma2_ref, beta2_ref)),
                wc2_ref, bc2_ref)

    # 1x1 shortcut conv (in_channels != out_channels in UpBlock's residual)
    sc = jnp.dot(x3.reshape(M, Cin).astype(bf16), wsc_ref[...],
                 preferred_element_type=f32).reshape(Bt, HW, Cout) + bsc_ref[...]
    h = h + sc

    # ---------------- AttentionBlock (n_heads=1, d_k=Cout) ----------------
    if has_attn:
        xa = h                                                           # (Bt, HW, Cout) f32
        qkv = (jnp.dot(xa.reshape(M, Cout).astype(bf16), wp_ref[...],
                       preferred_element_type=f32).reshape(Bt, HW, 3 * d_k)
               + bp_ref[...])
        q = qkv[:, :, :d_k].astype(bf16)
        k = qkv[:, :, d_k:2 * d_k].astype(bf16)
        v = qkv[:, :, 2 * d_k:].astype(bf16)
        # TODO(synk): switch to flash-style KV tiling once HW*HW no longer fits VMEM.
        s = jnp.einsum('bid,bjd->bij', q, k,
                       preferred_element_type=f32) * (d_k ** -0.5)       # (Bt, HW, HW)
        s = s - jnp.max(s, axis=-1, keepdims=True)
        p = jnp.exp(s)
        # approx reciprocal (EUP vrcp): rows sum to ~1; use exact division for training.
        p = p * pl.reciprocal(jnp.sum(p, axis=-1, keepdims=True), approx=True)
        res = jnp.einsum('bij,bjd->bid', p.astype(bf16), v,
                         preferred_element_type=f32)                     # (Bt, HW, d_k)
        res = (jnp.dot(res.reshape(M, d_k).astype(bf16), wo_ref[...],
                       preferred_element_type=f32).reshape(Bt, HW, Cout)
               + bo_ref[...])
        h = res + xa

    # TODO(synk): out last dim is Cout (< 128 lanes) -> masked partial stores;
    #             a lane-dense (Bt, HW*Cout) slab would need an in-kernel
    #             relayout, deferred for lowering safety.
    out_ref[...] = h.astype(out_ref.dtype)


# ----------------------------------------------------------------------------
# Glue: constants, weight re-layout, pallas_call wrapper
# ----------------------------------------------------------------------------
def make_group_mat(C, n_groups):
    G = np.zeros((C, n_groups), np.float32)
    gs = C // n_groups
    for c in range(C):
        G[c, c // gs] = 1.0
    return jnp.asarray(G)


def make_tap_masks(H, W, btile):
    # (9, btile*H*W, 1) f32: validity of each 3x3 tap at each flattened position.
    hpos = np.repeat(np.arange(H), W)
    wpos = np.tile(np.arange(W), H)
    masks = []
    for dh in (-1, 0, 1):
        for dw in (-1, 0, 1):
            valid = ((hpos + dh >= 0) & (hpos + dh < H) &
                     (wpos + dw >= 0) & (wpos + dw < W))
            masks.append(np.tile(valid.astype(np.float32), btile))
    m = np.stack(masks, axis=0)[:, :, None]
    return jnp.asarray(m)


def upblock_forward(x_nchw, t, p, *, n_groups=16, has_attn=True, btile=None):
    B, Cin, H, W = x_nchw.shape
    HW = H * W
    Cout = p["wc1"].shape[0]
    Tc = t.shape[1]

    # Tile selection: fold btile*HW rows into the MXU M dim (target ~512), but
    # keep >= 2 grid steps whenever B >= 2 so the "parallel" batch axis shards
    # across the two TensorCores on v7x and input/output DMA pipelines.
    if btile is None:
        btile = max(1, min(B, max(1, 512 // HW)))
        if B >= 2:
            btile = min(btile, B // 2)
        btile = max(btile, 1)
        while B % btile:
            btile -= 1
    nb = B // btile
    M = btile * HW

    # layout: NCHW -> (B, HW, C) channel-last
    # TODO(synk): keep the surrounding model channels-last to avoid these relayouts.
    x_k = jnp.transpose(x_nchw.reshape(B, Cin, HW), (0, 2, 1))
    t_k = t.reshape(B, 1, Tc)          # 3-D block so the BlockSpec tiling rule holds

    G1 = make_group_mat(Cin, n_groups)
    G2 = make_group_mat(Cout, n_groups)
    masks = make_tap_masks(H, W, btile)

    bf16 = jnp.bfloat16
    row = lambda a: a.reshape(1, -1).astype(jnp.float32)
    # Conv OIHW -> (kh, kw, Cin, Cout) -> (9*Cin, Cout), matching the im2col column
    # order (dh, dw, c).  All MXU weight operands stored in bf16.
    wc1k = jnp.transpose(p["wc1"], (2, 3, 1, 0)).reshape(9 * Cin, Cout).astype(bf16)
    wc2k = jnp.transpose(p["wc2"], (2, 3, 1, 0)).reshape(9 * Cout, Cout).astype(bf16)
    wtk = p["wt"].T.astype(bf16)
    wsck = p["wsc"].T.astype(bf16)
    wpk = p["wp"].T.astype(bf16)
    wok = p["wo"].T.astype(bf16)

    args = (x_k, t_k, masks,
            G1, G1.T, row(p["gamma1"]), row(p["beta1"]),
            wc1k, row(p["bc1"]), wtk, row(p["bt"]),
            G2, G2.T, row(p["gamma2"]), row(p["beta2"]),
            wc2k, row(p["bc2"]), wsck, row(p["bsc"]),
            wpk, row(p["bp"]), wok, row(p["bo"]))

    def full_spec(a):
        nd = a.ndim
        return pl.BlockSpec(a.shape, lambda b, _n=nd: (0,) * _n)

    in_specs = [pl.BlockSpec((btile, HW, Cin), lambda b: (b, 0, 0)),
                pl.BlockSpec((btile, 1, Tc), lambda b: (b, 0, 0))]
    in_specs += [full_spec(a) for a in args[2:]]

    # VMEM budget: double-buffered activation blocks, double-buffered constants,
    # bf16 im2col columns + concat, f32 intermediates, attention score/prob
    # temporaries.  Clamp to ~85% of the physical per-core VMEM (64 MiB on v7x,
    # 128 MiB on v5e/v6e), 64 MiB fallback if the query fails.
    const_bytes = sum(int(np.prod(a.shape)) * a.dtype.itemsize for a in args[2:])
    Cmax = max(Cin, Cout)
    step_bytes = (2 * btile * HW * (Cin + Cout) * 4        # in/out blocks (x2 buffers)
                  + 2 * const_bytes                         # weights / masks (x2 buffers)
                  + 8 * M * Cmax * 4                        # f32 activation intermediates
                  + 2 * M * 9 * Cmax * 2                    # bf16 im2col cols + concat
                  + 8 * M * Cout * 4                        # qkv / attention temporaries
                  + 3 * btile * HW * HW * 4)                # attention scores / probs
    try:
        vmem_cap = int(pltpu.get_tpu_info().vmem_capacity_bytes)
    except Exception:
        vmem_cap = 64 << 20
    vmem_limit = int(min(max(2 * step_bytes, 32 << 20), int(0.85 * vmem_cap)))

    kernel = functools.partial(upblock_kernel, H=H, W=W, n_groups=n_groups,
                               has_attn=has_attn, d_k=Cout)

    out = pl.pallas_call(
        kernel,
        out_shape=jax.ShapeDtypeStruct((B, HW, Cout), x_nchw.dtype),
        grid_spec=pltpu.PrefetchScalarGridSpec(
            num_scalar_prefetch=0,
            grid=(nb,),
            in_specs=in_specs,
            out_specs=pl.BlockSpec((btile, HW, Cout), lambda b: (b, 0, 0)),
        ),
        compiler_params=pltpu.CompilerParams(
            dimension_semantics=("parallel",),
            vmem_limit_bytes=vmem_limit),
    )(*args)

    # (B, HW, Cout) -> NCHW
    return jnp.transpose(out, (0, 2, 1)).reshape(B, Cout, H, W)


# ----------------------------------------------------------------------------
# Pure-JAX reference (mirrors the PyTorch forward) for validation
# ----------------------------------------------------------------------------
def reference_forward(x, t, p, *, n_groups=16, has_attn=True):
    silu = jax.nn.silu

    def gn(h, gamma, beta, ng):
        B, C, H, W = h.shape
        hr = h.reshape(B, ng, -1)
        m = hr.mean(axis=2, keepdims=True)
        v = ((hr - m) ** 2).mean(axis=2, keepdims=True)
        hn = ((hr - m) / jnp.sqrt(v + 1e-5)).reshape(B, C, H, W)
        return hn * gamma[None, :, None, None] + beta[None, :, None, None]

    def conv(h, w, b):
        y = lax.conv_general_dilated(h, w, (1, 1), ((1, 1), (1, 1)),
                                     dimension_numbers=("NCHW", "OIHW", "NCHW"))
        return y + b[None, :, None, None]

    h = conv(silu(gn(x, p["gamma1"], p["beta1"], n_groups)), p["wc1"], p["bc1"])
    h = h + (silu(t) @ p["wt"].T + p["bt"])[:, :, None, None]
    h = conv(silu(gn(h, p["gamma2"], p["beta2"], n_groups)), p["wc2"], p["bc2"])
    sc = jnp.einsum("bchw,oc->bohw", x, p["wsc"]) + p["bsc"][None, :, None, None]
    h = h + sc

    if has_attn:
        B, C, H, W = h.shape
        xa = jnp.transpose(h.reshape(B, C, H * W), (0, 2, 1))          # (B, HW, C)
        qkv = xa @ p["wp"].T + p["bp"]
        q, k, v = jnp.split(qkv, 3, axis=-1)
        attn = jnp.einsum("bid,bjd->bij", q, k) * (C ** -0.5)
        attn = jax.nn.softmax(attn, axis=-1)
        res = jnp.einsum("bij,bjd->bid", attn, v)
        res = res @ p["wo"].T + p["bo"] + xa
        h = jnp.transpose(res, (0, 2, 1)).reshape(B, C, H, W)
    return h


# ----------------------------------------------------------------------------
def init_params(key, Cin, Cout, Tc):
    ks = jax.random.split(key, 16)
    n = lambda k, s, sc=0.1: sc * jax.random.normal(k, s, jnp.float32)
    return {
        "gamma1": 1.0 + n(ks[0], (Cin,)),  "beta1": n(ks[1], (Cin,)),
        "wc1": n(ks[2], (Cout, Cin, 3, 3)), "bc1": n(ks[3], (Cout,), 0.05),
        "wt": n(ks[4], (Cout, Tc)),         "bt": n(ks[5], (Cout,), 0.05),
        "gamma2": 1.0 + n(ks[6], (Cout,)), "beta2": n(ks[7], (Cout,)),
        "wc2": n(ks[8], (Cout, Cout, 3, 3)), "bc2": n(ks[9], (Cout,), 0.05),
        "wsc": n(ks[10], (Cout, Cin)),      "bsc": n(ks[11], (Cout,), 0.05),
        "wp": n(ks[12], (3 * Cout, Cout)),  "bp": n(ks[13], (3 * Cout,), 0.05),
        "wo": n(ks[14], (Cout, Cout)),      "bo": n(ks[15], (Cout,), 0.05),
    }


if __name__ == "__main__":
    B, H, W = 2, 8, 8
    in_channels, out_channels, time_channels = 32, 32, 32
    Cin = in_channels + out_channels          # UpBlock input = concat(skip, up)
    has_attn = True

    key = jax.random.PRNGKey(0)
    kx, kt, kp = jax.random.split(key, 3)
    x = jax.random.normal(kx, (B, Cin, H, W), jnp.float32)
    t = jax.random.normal(kt, (B, time_channels), jnp.float32)
    params = init_params(kp, Cin, out_channels, time_channels)

    out = upblock_forward(x, t, params, n_groups=16, has_attn=has_attn)
    out = jax.block_until_ready(out)

    ref = reference_forward(x, t, params, n_groups=16, has_attn=has_attn)
    assert out.shape == (B, out_channels, H, W)
    # MXU operands are bf16 (f32 accumulation), so compare against the f32
    # reference with a correspondingly relaxed tolerance.
    if not np.allclose(np.asarray(out), np.asarray(ref), atol=5e-2, rtol=5e-2):
        raise AssertionError("Pallas kernel does not match reference")

    print("KERNEL_OK")
</pallas_src>

<mosaic_0001>
module attributes {stable_mosaic.version = 11 : i64} {
  func.func @upblock_kernel(%arg0: i32, %arg1: memref<1x64x64xf32, #tpu.memory_space<vmem>>, %arg2: memref<1x1x32xf32, #tpu.memory_space<vmem>>, %arg3: memref<9x64x1xf32, #tpu.memory_space<vmem>>, %arg4: memref<64x16xf32, #tpu.memory_space<vmem>>, %arg5: memref<16x64xf32, #tpu.memory_space<vmem>>, %arg6: memref<1x64xf32, #tpu.memory_space<vmem>>, %arg7: memref<1x64xf32, #tpu.memory_space<vmem>>, %arg8: memref<576x32xbf16, #tpu.memory_space<vmem>>, %arg9: memref<1x32xf32, #tpu.memory_space<vmem>>, %arg10: memref<32x32xbf16, #tpu.memory_space<vmem>>, %arg11: memref<1x32xf32, #tpu.memory_space<vmem>>, %arg12: memref<32x16xf32, #tpu.memory_space<vmem>>, %arg13: memref<16x32xf32, #tpu.memory_space<vmem>>, %arg14: memref<1x32xf32, #tpu.memory_space<vmem>>, %arg15: memref<1x32xf32, #tpu.memory_space<vmem>>, %arg16: memref<288x32xbf16, #tpu.memory_space<vmem>>, %arg17: memref<1x32xf32, #tpu.memory_space<vmem>>, %arg18: memref<64x32xbf16, #tpu.memory_space<vmem>>, %arg19: memref<1x32xf32, #tpu.memory_space<vmem>>, %arg20: memref<32x96xbf16, #tpu.memory_space<vmem>>, %arg21: memref<1x96xf32, #tpu.memory_space<vmem>>, %arg22: memref<32x32xbf16, #tpu.memory_space<vmem>>, %arg23: memref<1x32xf32, #tpu.memory_space<vmem>>, %arg24: memref<1x64x32xf32, #tpu.memory_space<vmem>>) attributes {dimension_semantics = [#tpu.dimension_semantics<parallel>], iteration_bounds = array<i64: 2>, scalar_prefetch = 0 : i64, scratch_operands = 0 : i64, tpu.core_type = #tpu.core_type<tc>, window_params = [{transform_indices = @transform_0, window_bounds = array<i64: 1, 64, 64>}, {transform_indices = @transform_1, window_bounds = array<i64: 1, 1, 32>}, {pipeline_mode = #tpu.pipeline_mode<synchronous>, transform_indices = @transform_2, window_bounds = array<i64: 9, 64, 1>}, {pipeline_mode = #tpu.pipeline_mode<synchronous>, transform_indices = @transform_3, window_bounds = array<i64: 64, 16>}, {pipeline_mode = #tpu.pipeline_mode<synchronous>, transform_indices = @transform_4, window_bounds = array<i64: 16, 64>}, {pipeline_mode = #tpu.pipeline_mode<synchronous>, transform_indices = @transform_5, window_bounds = array<i64: 1, 64>}, {pipeline_mode = #tpu.pipeline_mode<synchronous>, transform_indices = @transform_6, window_bounds = array<i64: 1, 64>}, {pipeline_mode = #tpu.pipeline_mode<synchronous>, transform_indices = @transform_7, window_bounds = array<i64: 576, 32>}, {pipeline_mode = #tpu.pipeline_mode<synchronous>, transform_indices = @transform_8, window_bounds = array<i64: 1, 32>}, {pipeline_mode = #tpu.pipeline_mode<synchronous>, transform_indices = @transform_9, window_bounds = array<i64: 32, 32>}, {pipeline_mode = #tpu.pipeline_mode<synchronous>, transform_indices = @transform_10, window_bounds = array<i64: 1, 32>}, {pipeline_mode = #tpu.pipeline_mode<synchronous>, transform_indices = @transform_11, window_bounds = array<i64: 32, 16>}, {pipeline_mode = #tpu.pipeline_mode<synchronous>, transform_indices = @transform_12, window_bounds = array<i64: 16, 32>}, {pipeline_mode = #tpu.pipeline_mode<synchronous>, transform_indices = @transform_13, window_bounds = array<i64: 1, 32>}, {pipeline_mode = #tpu.pipeline_mode<synchronous>, transform_indices = @transform_14, window_bounds = array<i64: 1, 32>}, {pipeline_mode = #tpu.pipeline_mode<synchronous>, transform_indices = @transform_15, window_bounds = array<i64: 288, 32>}, {pipeline_mode = #tpu.pipeline_mode<synchronous>, transform_indices = @transform_16, window_bounds = array<i64: 1, 32>}, {pipeline_mode = #tpu.pipeline_mode<synchronous>, transform_indices = @transform_17, window_bounds = array<i64: 64, 32>}, {pipeline_mode = #tpu.pipeline_mode<synchronous>, transform_indices = @transform_18, window_bounds = array<i64: 1, 32>}, {pipeline_mode = #tpu.pipeline_mode<synchronous>, transform_indices = @transform_19, window_bounds = array<i64: 32, 96>}, {pipeline_mode = #tpu.pipeline_mode<synchronous>, transform_indices = @transform_20, window_bounds = array<i64: 1, 96>}, {pipeline_mode = #tpu.pipeline_mode<synchronous>, transform_indices = @transform_21, window_bounds = array<i64: 32, 32>}, {pipeline_mode = #tpu.pipeline_mode<synchronous>, transform_indices = @transform_22, window_bounds = array<i64: 1, 32>}, {transform_indices = @transform_23, window_bounds = array<i64: 1, 64, 32>}]} {
    %c0 = arith.constant 0 : index
    %c0_0 = arith.constant 0 : index
    %c0_1 = arith.constant 0 : index
    %0 = vector.load %arg1[%c0, %c0_0, %c0_1] : memref<1x64x64xf32, #tpu.memory_space<vmem>>, vector<1x64x64xf32>
    %cst = arith.constant dense<0.000000e+00> : vector<1x64xf32>
    %1 = vector.multi_reduction <add>, %0, %cst [1] : vector<1x64x64xf32> to vector<1x64xf32>
    %2 = arith.mulf %0, %0 : vector<1x64x64xf32>
    %cst_2 = arith.constant dense<0.000000e+00> : vector<1x64xf32>
    %3 = vector.multi_reduction <add>, %2, %cst_2 [1] : vector<1x64x64xf32> to vector<1x64xf32>
    %4 = tpu.concatenate %1, %3 in 0 : vector<1x64xf32>, vector<1x64xf32> -> vector<2x64xf32>
    %c0_3 = arith.constant 0 : index
    %c0_4 = arith.constant 0 : index
    %5 = vector.load %arg4[%c0_3, %c0_4] : memref<64x16xf32, #tpu.memory_space<vmem>>, vector<64x16xf32>
    %cst_5 = arith.constant dense<0.000000e+00> : vector<2x16xf32>
    %6 = tpu.matmul %4, %5, %cst_5 {dimension_numbers = #tpu.dot_dimension_numbers<[1], [0], [0], [1], [0, 0, 1, 1], [], []>} : vector<2x64xf32>, vector<64x16xf32>, vector<2x16xf32> -> vector<2x16xf32>
    %cst_6 = arith.constant 3.906250e-03 : f32
    %7 = vector.broadcast %cst_6 : f32 to vector<2x16xf32>
    %8 = arith.mulf %6, %7 : vector<2x16xf32>
    %c0_7 = arith.constant 0 : index
    %c0_8 = arith.constant 0 : index
    %9 = vector.load %arg5[%c0_7, %c0_8] : memref<16x64xf32, #tpu.memory_space<vmem>>, vector<16x64xf32>
    %cst_9 = arith.constant dense<0.000000e+00> : vector<2x64xf32>
    %10 = tpu.matmul %8, %9, %cst_9 {dimension_numbers = #tpu.dot_dimension_numbers<[1], [0], [0], [1], [0, 0, 1, 1], [], []>} : vector<2x16xf32>, vector<16x64xf32>, vector<2x64xf32> -> vector<2x64xf32>
    %11 = vector.extract_strided_slice %10 {offsets = [0, 0], sizes = [1, 64], strides = [1, 1]} : vector<2x64xf32> to vector<1x64xf32>
    %12 = vector.extract_strided_slice %10 {offsets = [1, 0], sizes = [1, 64], strides = [1, 1]} : vector<2x64xf32> to vector<1x64xf32>
    %13 = arith.mulf %11, %11 : vector<1x64xf32>
    %14 = arith.subf %12, %13 : vector<1x64xf32>
    %cst_10 = arith.constant 0.000000e+00 : f32
    %15 = vector.broadcast %cst_10 : f32 to vector<1x64xf32>
    %16 = arith.maximumf %14, %15 : vector<1x64xf32>
    %17 = vector.shape_cast %11 : vector<1x64xf32> to vector<1x1x64xf32>
    %18 = vector.broadcast %17 : vector<1x1x64xf32> to vector<1x64x64xf32>
    %19 = arith.subf %0, %18 : vector<1x64x64xf32>
    %20 = vector.shape_cast %16 : vector<1x64xf32> to vector<1x1x64xf32>
    %cst_11 = arith.constant 9.99999974E-6 : f32
    %21 = vector.broadcast %cst_11 : f32 to vector<1x1x64xf32>
    %22 = arith.addf %20, %21 : vector<1x1x64xf32>
    %23 = math.rsqrt %22 : vector<1x1x64xf32>
    %24 = vector.broadcast %23 : vector<1x1x64xf32> to vector<1x64x64xf32>
    %25 = arith.mulf %19, %24 : vector<1x64x64xf32>
    %c0_12 = arith.constant 0 : index
    %c0_13 = arith.constant 0 : index
    %26 = vector.load %arg6[%c0_12, %c0_13] : memref<1x64xf32, #tpu.memory_space<vmem>>, vector<1x64xf32>
    %27 = vector.shape_cast %26 : vector<1x64xf32> to vector<1x1x64xf32>
    %28 = vector.broadcast %27 : vector<1x1x64xf32> to vector<1x64x64xf32>
    %29 = arith.mulf %25, %28 : vector<1x64x64xf32>
    %c0_14 = arith.constant 0 : index
    %c0_15 = arith.constant 0 : index
    %30 = vector.load %arg7[%c0_14, %c0_15] : memref<1x64xf32, #tpu.memory_space<vmem>>, vector<1x64xf32>
    %31 = vector.shape_cast %30 : vector<1x64xf32> to vector<1x1x64xf32>
    %32 = vector.broadcast %31 : vector<1x1x64xf32> to vector<1x64x64xf32>
    %33 = arith.addf %29, %32 : vector<1x64x64xf32>
    %34 = arith.negf %33 : vector<1x64x64xf32>
    %35 = math.exp %34 : vector<1x64x64xf32>
    %cst_16 = arith.constant 1.000000e+00 : f32
    %36 = vector.broadcast %cst_16 : f32 to vector<1x64x64xf32>
    %37 = arith.addf %36, %35 : vector<1x64x64xf32>
    %38 = arith.divf %36, %37 : vector<1x64x64xf32>
    %39 = arith.mulf %33, %38 : vector<1x64x64xf32>
    %40 = vector.shape_cast %39 : vector<1x64x64xf32> to vector<64x64xf32>
    %c9_i32 = arith.constant 9 : i32
    %41 = tpu.dynamic_rotate %40 by %c9_i32 dim 0 : vector<64x64xf32>, i32 -> vector<64x64xf32>
    %c0_17 = arith.constant 0 : index
    %c0_18 = arith.constant 0 : index
    %c0_19 = arith.constant 0 : index
    %42 = vector.load %arg3[%c0_17, %c0_18, %c0_19] : memref<9x64x1xf32, #tpu.memory_space<vmem>>, vector<1x64x1xf32>
    %43 = vector.shape_cast %42 : vector<1x64x1xf32> to vector<64x1xf32>
    %44 = vector.broadcast %43 : vector<64x1xf32> to vector<64x64xf32>
    %45 = arith.mulf %41, %44 : vector<64x64xf32>
    %46 = arith.truncf %45 : vector<64x64xf32> to vector<64x64xbf16>
    %c8_i32 = arith.constant 8 : i32
    %47 = tpu.dynamic_rotate %40 by %c8_i32 dim 0 : vector<64x64xf32>, i32 -> vector<64x64xf32>
    %c1 = arith.constant 1 : index
    %c0_20 = arith.constant 0 : index
    %c0_21 = arith.constant 0 : index
    %48 = vector.load %arg3[%c1, %c0_20, %c0_21] : memref<9x64x1xf32, #tpu.memory_space<vmem>>, vector<1x64x1xf32>
    %49 = vector.shape_cast %48 : vector<1x64x1xf32> to vector<64x1xf32>
    %50 = vector.broadcast %49 : vector<64x1xf32> to vector<64x64xf32>
    %51 = arith.mulf %47, %50 : vector<64x64xf32>
    %52 = arith.truncf %51 : vector<64x64xf32> to vector<64x64xbf16>
    %c7_i32 = arith.constant 7 : i32
    %53 = tpu.dynamic_rotate %40 by %c7_i32 dim 0 : vector<64x64xf32>, i32 -> vector<64x64xf32>
    %c2 = arith.constant 2 : index
    %c0_22 = arith.constant 0 : index
    %c0_23 = arith.constant 0 : index
    %54 = vector.load %arg3[%c2, %c0_22, %c0_23] : memref<9x64x1xf32, #tpu.memory_space<vmem>>, vector<1x64x1xf32>
    %55 = vector.shape_cast %54 : vector<1x64x1xf32> to vector<64x1xf32>
    %56 = vector.broadcast %55 : vector<64x1xf32> to vector<64x64xf32>
    %57 = arith.mulf %53, %56 : vector<64x64xf32>
    %58 = arith.truncf %57 : vector<64x64xf32> to vector<64x64xbf16>
    %c1_i32 = arith.constant 1 : i32
    %59 = tpu.dynamic_rotate %40 by %c1_i32 dim 0 : vector<64x64xf32>, i32 -> vector<64x64xf32>
    %c3 = arith.constant 3 : index
    %c0_24 = arith.constant 0 : index
    %c0_25 = arith.constant 0 : index
    %60 = vector.load %arg3[%c3, %c0_24, %c0_25] : memref<9x64x1xf32, #tpu.memory_space<vmem>>, vector<1x64x1xf32>
    %61 = vector.shape_cast %60 : vector<1x64x1xf32> to vector<64x1xf32>
    %62 = vector.broadcast %61 : vector<64x1xf32> to vector<64x64xf32>
    %63 = arith.mulf %59, %62 : vector<64x64xf32>
    %64 = arith.truncf %63 : vector<64x64xf32> to vector<64x64xbf16>
    %65 = arith.truncf %40 : vector<64x64xf32> to vector<64x64xbf16>
    %c63_i32 = arith.constant 63 : i32
    %66 = tpu.dynamic_rotate %40 by %c63_i32 dim 0 : vector<64x64xf32>, i32 -> vector<64x64xf32>
    %c5 = arith.constant 5 : index
    %c0_26 = arith.constant 0 : index
    %c0_27 = arith.constant 0 : index
    %67 = vector.load %arg3[%c5, %c0_26, %c0_27] : memref<9x64x1xf32, #tpu.memory_space<vmem>>, vector<1x64x1xf32>
    %68 = vector.shape_cast %67 : vector<1x64x1xf32> to vector<64x1xf32>
    %69 = vector.broadcast %68 : vector<64x1xf32> to vector<64x64xf32>
    %70 = arith.mulf %66, %69 : vector<64x64xf32>
    %71 = arith.truncf %70 : vector<64x64xf32> to vector<64x64xbf16>
    %c57_i32 = arith.constant 57 : i32
    %72 = tpu.dynamic_rotate %40 by %c57_i32 dim 0 : vector<64x64xf32>, i32 -> vector<64x64xf32>
    %c6 = arith.constant 6 : index
    %c0_28 = arith.constant 0 : index
    %c0_29 = arith.constant 0 : index
    %73 = vector.load %arg3[%c6, %c0_28, %c0_29] : memref<9x64x1xf32, #tpu.memory_space<vmem>>, vector<1x64x1xf32>
    %74 = vector.shape_cast %73 : vector<1x64x1xf32> to vector<64x1xf32>
    %75 = vector.broadcast %74 : vector<64x1xf32> to vector<64x64xf32>
    %76 = arith.mulf %72, %75 : vector<64x64xf32>
    %77 = arith.truncf %76 : vector<64x64xf32> to vector<64x64xbf16>
    %c56_i32 = arith.constant 56 : i32
    %78 = tpu.dynamic_rotate %40 by %c56_i32 dim 0 : vector<64x64xf32>, i32 -> vector<64x64xf32>
    %c7 = arith.constant 7 : index
    %c0_30 = arith.constant 0 : index
    %c0_31 = arith.constant 0 : index
    %79 = vector.load %arg3[%c7, %c0_30, %c0_31] : memref<9x64x1xf32, #tpu.memory_space<vmem>>, vector<1x64x1xf32>
    %80 = vector.shape_cast %79 : vector<1x64x1xf32> to vector<64x1xf32>
    %81 = vector.broadcast %80 : vector<64x1xf32> to vector<64x64xf32>
    %82 = arith.mulf %78, %81 : vector<64x64xf32>
    %83 = arith.truncf %82 : vector<64x64xf32> to vector<64x64xbf16>
    %c55_i32 = arith.constant 55 : i32
    %84 = tpu.dynamic_rotate %40 by %c55_i32 dim 0 : vector<64x64xf32>, i32 -> vector<64x64xf32>
    %c8 = arith.constant 8 : index
    %c0_32 = arith.constant 0 : index
    %c0_33 = arith.constant 0 : index
    %85 = vector.load %arg3[%c8, %c0_32, %c0_33] : memref<9x64x1xf32, #tpu.memory_space<vmem>>, vector<1x64x1xf32>
    %86 = vector.shape_cast %85 : vector<1x64x1xf32> to vector<64x1xf32>
    %87 = vector.broadcast %86 : vector<64x1xf32> to vector<64x64xf32>
    %88 = arith.mulf %84, %87 : vector<64x64xf32>
    %89 = arith.truncf %88 : vector<64x64xf32> to vector<64x64xbf16>
    %90 = tpu.concatenate %46, %52, %58, %64, %65, %71, %77, %83, %89 in 1 : vector<64x64xbf16>, vector<64x64xbf16>, vector<64x64xbf16>, vector<64x64xbf16>, vector<64x64xbf16>, vector<64x64xbf16>, vector<64x64xbf16>, vector<64x64xbf16>, vector<64x64xbf16> -> vector<64x576xbf16>
    %c0_34 = arith.constant 0 : index
    %c0_35 = arith.constant 0 : index
    %91 = vector.load %arg8[%c0_34, %c0_35] : memref<576x32xbf16, #tpu.memory_space<vmem>>, vector<576x32xbf16>
    %cst_36 = arith.constant dense<0.000000e+00> : vector<64x32xf32>
    %92 = tpu.matmul %90, %91, %cst_36 {dimension_numbers = #tpu.dot_dimension_numbers<[1], [0], [0], [1], [0, 0, 1, 1], [], []>} : vector<64x576xbf16>, vector<576x32xbf16>, vector<64x32xf32> -> vector<64x32xf32>
    %93 = vector.shape_cast %92 : vector<64x32xf32> to vector<1x64x32xf32>
    %c0_37 = arith.constant 0 : index
    %c0_38 = arith.constant 0 : index
    %94 = vector.load %arg9[%c0_37, %c0_38] : memref<1x32xf32, #tpu.memory_space<vmem>>, vector<1x32xf32>
    %95 = vector.shape_cast %94 : vector<1x32xf32> to vector<1x1x32xf32>
    %96 = vector.broadcast %95 : vector<1x1x32xf32> to vector<1x64x32xf32>
    %97 = arith.addf %93, %96 : vector<1x64x32xf32>
    %c0_39 = arith.constant 0 : index
    %c0_40 = arith.constant 0 : index
    %c0_41 = arith.constant 0 : index
    %98 = vector.load %arg2[%c0_39, %c0_40, %c0_41] : memref<1x1x32xf32, #tpu.memory_space<vmem>>, vector<1x1x32xf32>
    %99 = vector.shape_cast %98 : vector<1x1x32xf32> to vector<1x32xf32>
    %100 = arith.negf %99 : vector<1x32xf32>
    %101 = math.exp %100 : vector<1x32xf32>
    %cst_42 = arith.constant 1.000000e+00 : f32
    %102 = vector.broadcast %cst_42 : f32 to vector<1x32xf32>
    %103 = arith.addf %102, %101 : vector<1x32xf32>
    %104 = arith.divf %102, %103 : vector<1x32xf32>
    %105 = arith.mulf %99, %104 : vector<1x32xf32>
    %106 = arith.truncf %105 : vector<1x32xf32> to vector<1x32xbf16>
    %c0_43 = arith.constant 0 : index
    %c0_44 = arith.constant 0 : index
    %107 = vector.load %arg10[%c0_43, %c0_44] : memref<32x32xbf16, #tpu.memory_space<vmem>>, vector<32x32xbf16>
    %cst_45 = arith.constant dense<0.000000e+00> : vector<1x32xf32>
    %108 = tpu.matmul %106, %107, %cst_45 {dimension_numbers = #tpu.dot_dimension_numbers<[1], [0], [0], [1], [0, 0, 1, 1], [], []>} : vector<1x32xbf16>, vector<32x32xbf16>, vector<1x32xf32> -> vector<1x32xf32>
    %c0_46 = arith.constant 0 : index
    %c0_47 = arith.constant 0 : index
    %109 = vector.load %arg11[%c0_46, %c0_47] : memref<1x32xf32, #tpu.memory_space<vmem>>, vector<1x32xf32>
    %110 = arith.addf %108, %109 : vector<1x32xf32>
    %111 = vector.shape_cast %110 : vector<1x32xf32> to vector<1x1x32xf32>
    %112 = vector.broadcast %111 : vector<1x1x32xf32> to vector<1x64x32xf32>
    %113 = arith.addf %97, %112 : vector<1x64x32xf32>
    %cst_48 = arith.constant dense<0.000000e+00> : vector<1x32xf32>
    %114 = vector.multi_reduction <add>, %113, %cst_48 [1] : vector<1x64x32xf32> to vector<1x32xf32>
    %115 = arith.mulf %113, %113 : vector<1x64x32xf32>
    %cst_49 = arith.constant dense<0.000000e+00> : vector<1x32xf32>
    %116 = vector.multi_reduction <add>, %115, %cst_49 [1] : vector<1x64x32xf32> to vector<1x32xf32>
    %117 = tpu.concatenate %114, %116 in 0 : vector<1x32xf32>, vector<1x32xf32> -> vector<2x32xf32>
    %c0_50 = arith.constant 0 : index
    %c0_51 = arith.constant 0 : index
    %118 = vector.load %arg12[%c0_50, %c0_51] : memref<32x16xf32, #tpu.memory_space<vmem>>, vector<32x16xf32>
    %cst_52 = arith.constant dense<0.000000e+00> : vector<2x16xf32>
    %119 = tpu.matmul %117, %118, %cst_52 {dimension_numbers = #tpu.dot_dimension_numbers<[1], [0], [0], [1], [0, 0, 1, 1], [], []>} : vector<2x32xf32>, vector<32x16xf32>, vector<2x16xf32> -> vector<2x16xf32>
    %cst_53 = arith.constant 7.812500e-03 : f32
    %120 = vector.broadcast %cst_53 : f32 to vector<2x16xf32>
    %121 = arith.mulf %119, %120 : vector<2x16xf32>
    %c0_54 = arith.constant 0 : index
    %c0_55 = arith.constant 0 : index
    %122 = vector.load %arg13[%c0_54, %c0_55] : memref<16x32xf32, #tpu.memory_space<vmem>>, vector<16x32xf32>
    %cst_56 = arith.constant dense<0.000000e+00> : vector<2x32xf32>
    %123 = tpu.matmul %121, %122, %cst_56 {dimension_numbers = #tpu.dot_dimension_numbers<[1], [0], [0], [1], [0, 0, 1, 1], [], []>} : vector<2x16xf32>, vector<16x32xf32>, vector<2x32xf32> -> vector<2x32xf32>
    %124 = vector.extract_strided_slice %123 {offsets = [0, 0], sizes = [1, 32], strides = [1, 1]} : vector<2x32xf32> to vector<1x32xf32>
    %125 = vector.extract_strided_slice %123 {offsets = [1, 0], sizes = [1, 32], strides = [1, 1]} : vector<2x32xf32> to vector<1x32xf32>
    %126 = arith.mulf %124, %124 : vector<1x32xf32>
    %127 = arith.subf %125, %126 : vector<1x32xf32>
    %cst_57 = arith.constant 0.000000e+00 : f32
    %128 = vector.broadcast %cst_57 : f32 to vector<1x32xf32>
    %129 = arith.maximumf %127, %128 : vector<1x32xf32>
    %130 = vector.shape_cast %124 : vector<1x32xf32> to vector<1x1x32xf32>
    %131 = vector.broadcast %130 : vector<1x1x32xf32> to vector<1x64x32xf32>
    %132 = arith.subf %113, %131 : vector<1x64x32xf32>
    %133 = vector.shape_cast %129 : vector<1x32xf32> to vector<1x1x32xf32>
    %cst_58 = arith.constant 9.99999974E-6 : f32
    %134 = vector.broadcast %cst_58 : f32 to vector<1x1x32xf32>
    %135 = arith.addf %133, %134 : vector<1x1x32xf32>
    %136 = math.rsqrt %135 : vector<1x1x32xf32>
    %137 = vector.broadcast %136 : vector<1x1x32xf32> to vector<1x64x32xf32>
    %138 = arith.mulf %132, %137 : vector<1x64x32xf32>
    %c0_59 = arith.constant 0 : index
    %c0_60 = arith.constant 0 : index
    %139 = vector.load %arg14[%c0_59, %c0_60] : memref<1x32xf32, #tpu.memory_space<vmem>>, vector<1x32xf32>
    %140 = vector.shape_cast %139 : vector<1x32xf32> to vector<1x1x32xf32>
    %141 = vector.broadcast %140 : vector<1x1x32xf32> to vector<1x64x32xf32>
    %142 = arith.mulf %138, %141 : vector<1x64x32xf32>
    %c0_61 = arith.constant 0 : index
    %c0_62 = arith.constant 0 : index
    %143 = vector.load %arg15[%c0_61, %c0_62] : memref<1x32xf32, #tpu.memory_space<vmem>>, vector<1x32xf32>
    %144 = vector.shape_cast %143 : vector<1x32xf32> to vector<1x1x32xf32>
    %145 = vector.broadcast %144 : vector<1x1x32xf32> to vector<1x64x32xf32>
    %146 = arith.addf %142, %145 : vector<1x64x32xf32>
    %147 = arith.negf %146 : vector<1x64x32xf32>
    %148 = math.exp %147 : vector<1x64x32xf32>
    %cst_63 = arith.constant 1.000000e+00 : f32
    %149 = vector.broadcast %cst_63 : f32 to vector<1x64x32xf32>
    %150 = arith.addf %149, %148 : vector<1x64x32xf32>
    %151 = arith.divf %149, %150 : vector<1x64x32xf32>
    %152 = arith.mulf %146, %151 : vector<1x64x32xf32>
    %153 = vector.shape_cast %152 : vector<1x64x32xf32> to vector<64x32xf32>
    %c9_i32_64 = arith.constant 9 : i32
    %154 = tpu.dynamic_rotate %153 by %c9_i32_64 dim 0 : vector<64x32xf32>, i32 -> vector<64x32xf32>
    %c0_65 = arith.constant 0 : index
    %c0_66 = arith.constant 0 : index
    %c0_67 = arith.constant 0 : index
    %155 = vector.load %arg3[%c0_65, %c0_66, %c0_67] : memref<9x64x1xf32, #tpu.memory_space<vmem>>, vector<1x64x1xf32>
    %156 = vector.shape_cast %155 : vector<1x64x1xf32> to vector<64x1xf32>
    %157 = vector.broadcast %156 : vector<64x1xf32> to vector<64x32xf32>
    %158 = arith.mulf %154, %157 : vector<64x32xf32>
    %159 = arith.truncf %158 : vector<64x32xf32> to vector<64x32xbf16>
    %c8_i32_68 = arith.constant 8 : i32
    %160 = tpu.dynamic_rotate %153 by %c8_i32_68 dim 0 : vector<64x32xf32>, i32 -> vector<64x32xf32>
    %c1_69 = arith.constant 1 : index
    %c0_70 = arith.constant 0 : index
    %c0_71 = arith.constant 0 : index
    %161 = vector.load %arg3[%c1_69, %c0_70, %c0_71] : memref<9x64x1xf32, #tpu.memory_space<vmem>>, vector<1x64x1xf32>
    %162 = vector.shape_cast %161 : vector<1x64x1xf32> to vector<64x1xf32>
    %163 = vector.broadcast %162 : vector<64x1xf32> to vector<64x32xf32>
    %164 = arith.mulf %160, %163 : vector<64x32xf32>
    %165 = arith.truncf %164 : vector<64x32xf32> to vector<64x32xbf16>
    %c7_i32_72 = arith.constant 7 : i32
    %166 = tpu.dynamic_rotate %153 by %c7_i32_72 dim 0 : vector<64x32xf32>, i32 -> vector<64x32xf32>
    %c2_73 = arith.constant 2 : index
    %c0_74 = arith.constant 0 : index
    %c0_75 = arith.constant 0 : index
    %167 = vector.load %arg3[%c2_73, %c0_74, %c0_75] : memref<9x64x1xf32, #tpu.memory_space<vmem>>, vector<1x64x1xf32>
    %168 = vector.shape_cast %167 : vector<1x64x1xf32> to vector<64x1xf32>
    %169 = vector.broadcast %168 : vector<64x1xf32> to vector<64x32xf32>
    %170 = arith.mulf %166, %169 : vector<64x32xf32>
    %171 = arith.truncf %170 : vector<64x32xf32> to vector<64x32xbf16>
    %c1_i32_76 = arith.constant 1 : i32
    %172 = tpu.dynamic_rotate %153 by %c1_i32_76 dim 0 : vector<64x32xf32>, i32 -> vector<64x32xf32>
    %c3_77 = arith.constant 3 : index
    %c0_78 = arith.constant 0 : index
    %c0_79 = arith.constant 0 : index
    %173 = vector.load %arg3[%c3_77, %c0_78, %c0_79] : memref<9x64x1xf32, #tpu.memory_space<vmem>>, vector<1x64x1xf32>
    %174 = vector.shape_cast %173 : vector<1x64x1xf32> to vector<64x1xf32>
    %175 = vector.broadcast %174 : vector<64x1xf32> to vector<64x32xf32>
    %176 = arith.mulf %172, %175 : vector<64x32xf32>
    %177 = arith.truncf %176 : vector<64x32xf32> to vector<64x32xbf16>
    %178 = arith.truncf %153 : vector<64x32xf32> to vector<64x32xbf16>
    %c63_i32_80 = arith.constant 63 : i32
    %179 = tpu.dynamic_rotate %153 by %c63_i32_80 dim 0 : vector<64x32xf32>, i32 -> vector<64x32xf32>
    %c5_81 = arith.constant 5 : index
    %c0_82 = arith.constant 0 : index
    %c0_83 = arith.constant 0 : index
    %180 = vector.load %arg3[%c5_81, %c0_82, %c0_83] : memref<9x64x1xf32, #tpu.memory_space<vmem>>, vector<1x64x1xf32>
    %181 = vector.shape_cast %180 : vector<1x64x1xf32> to vector<64x1xf32>
    %182 = vector.broadcast %181 : vector<64x1xf32> to vector<64x32xf32>
    %183 = arith.mulf %179, %182 : vector<64x32xf32>
    %184 = arith.truncf %183 : vector<64x32xf32> to vector<64x32xbf16>
    %c57_i32_84 = arith.constant 57 : i32
    %185 = tpu.dynamic_rotate %153 by %c57_i32_84 dim 0 : vector<64x32xf32>, i32 -> vector<64x32xf32>
    %c6_85 = arith.constant 6 : index
    %c0_86 = arith.constant 0 : index
    %c0_87 = arith.constant 0 : index
    %186 = vector.load %arg3[%c6_85, %c0_86, %c0_87] : memref<9x64x1xf32, #tpu.memory_space<vmem>>, vector<1x64x1xf32>
    %187 = vector.shape_cast %186 : vector<1x64x1xf32> to vector<64x1xf32>
    %188 = vector.broadcast %187 : vector<64x1xf32> to vector<64x32xf32>
    %189 = arith.mulf %185, %188 : vector<64x32xf32>
    %190 = arith.truncf %189 : vector<64x32xf32> to vector<64x32xbf16>
    %c56_i32_88 = arith.constant 56 : i32
    %191 = tpu.dynamic_rotate %153 by %c56_i32_88 dim 0 : vector<64x32xf32>, i32 -> vector<64x32xf32>
    %c7_89 = arith.constant 7 : index
    %c0_90 = arith.constant 0 : index
    %c0_91 = arith.constant 0 : index
    %192 = vector.load %arg3[%c7_89, %c0_90, %c0_91] : memref<9x64x1xf32, #tpu.memory_space<vmem>>, vector<1x64x1xf32>
    %193 = vector.shape_cast %192 : vector<1x64x1xf32> to vector<64x1xf32>
    %194 = vector.broadcast %193 : vector<64x1xf32> to vector<64x32xf32>
    %195 = arith.mulf %191, %194 : vector<64x32xf32>
    %196 = arith.truncf %195 : vector<64x32xf32> to vector<64x32xbf16>
    %c55_i32_92 = arith.constant 55 : i32
    %197 = tpu.dynamic_rotate %153 by %c55_i32_92 dim 0 : vector<64x32xf32>, i32 -> vector<64x32xf32>
    %c8_93 = arith.constant 8 : index
    %c0_94 = arith.constant 0 : index
    %c0_95 = arith.constant 0 : index
    %198 = vector.load %arg3[%c8_93, %c0_94, %c0_95] : memref<9x64x1xf32, #tpu.memory_space<vmem>>, vector<1x64x1xf32>
    %199 = vector.shape_cast %198 : vector<1x64x1xf32> to vector<64x1xf32>
    %200 = vector.broadcast %199 : vector<64x1xf32> to vector<64x32xf32>
    %201 = arith.mulf %197, %200 : vector<64x32xf32>
    %202 = arith.truncf %201 : vector<64x32xf32> to vector<64x32xbf16>
    %203 = tpu.concatenate %159, %165, %171, %177, %178, %184, %190, %196, %202 in 1 : vector<64x32xbf16>, vector<64x32xbf16>, vector<64x32xbf16>, vector<64x32xbf16>, vector<64x32xbf16>, vector<64x32xbf16>, vector<64x32xbf16>, vector<64x32xbf16>, vector<64x32xbf16> -> vector<64x288xbf16>
    %c0_96 = arith.constant 0 : index
    %c0_97 = arith.constant 0 : index
    %204 = vector.load %arg16[%c0_96, %c0_97] : memref<288x32xbf16, #tpu.memory_space<vmem>>, vector<288x32xbf16>
    %cst_98 = arith.constant dense<0.000000e+00> : vector<64x32xf32>
    %205 = tpu.matmul %203, %204, %cst_98 {dimension_numbers = #tpu.dot_dimension_numbers<[1], [0], [0], [1], [0, 0, 1, 1], [], []>} : vector<64x288xbf16>, vector<288x32xbf16>, vector<64x32xf32> -> vector<64x32xf32>
    %206 = vector.shape_cast %205 : vector<64x32xf32> to vector<1x64x32xf32>
    %c0_99 = arith.constant 0 : index
    %c0_100 = arith.constant 0 : index
    %207 = vector.load %arg17[%c0_99, %c0_100] : memref<1x32xf32, #tpu.memory_space<vmem>>, vector<1x32xf32>
    %208 = vector.shape_cast %207 : vector<1x32xf32> to vector<1x1x32xf32>
    %209 = vector.broadcast %208 : vector<1x1x32xf32> to vector<1x64x32xf32>
    %210 = arith.addf %206, %209 : vector<1x64x32xf32>
    %211 = vector.shape_cast %0 : vector<1x64x64xf32> to vector<64x64xf32>
    %212 = arith.truncf %211 : vector<64x64xf32> to vector<64x64xbf16>
    %c0_101 = arith.constant 0 : index
    %c0_102 = arith.constant 0 : index
    %213 = vector.load %arg18[%c0_101, %c0_102] : memref<64x32xbf16, #tpu.memory_space<vmem>>, vector<64x32xbf16>
    %cst_103 = arith.constant dense<0.000000e+00> : vector<64x32xf32>
    %214 = tpu.matmul %212, %213, %cst_103 {dimension_numbers = #tpu.dot_dimension_numbers<[1], [0], [0], [1], [0, 0, 1, 1], [], []>} : vector<64x64xbf16>, vector<64x32xbf16>, vector<64x32xf32> -> vector<64x32xf32>
    %215 = vector.shape_cast %214 : vector<64x32xf32> to vector<1x64x32xf32>
    %c0_104 = arith.constant 0 : index
    %c0_105 = arith.constant 0 : index
    %216 = vector.load %arg19[%c0_104, %c0_105] : memref<1x32xf32, #tpu.memory_space<vmem>>, vector<1x32xf32>
    %217 = vector.shape_cast %216 : vector<1x32xf32> to vector<1x1x32xf32>
    %218 = vector.broadcast %217 : vector<1x1x32xf32> to vector<1x64x32xf32>
    %219 = arith.addf %215, %218 : vector<1x64x32xf32>
    %220 = arith.addf %210, %219 : vector<1x64x32xf32>
    %221 = vector.shape_cast %220 : vector<1x64x32xf32> to vector<64x32xf32>
    %222 = arith.truncf %221 : vector<64x32xf32> to vector<64x32xbf16>
    %c0_106 = arith.constant 0 : index
    %c0_107 = arith.constant 0 : index
    %223 = vector.load %arg20[%c0_106, %c0_107] : memref<32x96xbf16, #tpu.memory_space<vmem>>, vector<32x96xbf16>
    %cst_108 = arith.constant dense<0.000000e+00> : vector<64x96xf32>
    %224 = tpu.matmul %222, %223, %cst_108 {dimension_numbers = #tpu.dot_dimension_numbers<[1], [0], [0], [1], [0, 0, 1, 1], [], []>} : vector<64x32xbf16>, vector<32x96xbf16>, vector<64x96xf32> -> vector<64x96xf32>
    %225 = vector.shape_cast %224 : vector<64x96xf32> to vector<1x64x96xf32>
    %c0_109 = arith.constant 0 : index
    %c0_110 = arith.constant 0 : index
    %226 = vector.load %arg21[%c0_109, %c0_110] : memref<1x96xf32, #tpu.memory_space<vmem>>, vector<1x96xf32>
    %227 = vector.shape_cast %226 : vector<1x96xf32> to vector<1x1x96xf32>
    %228 = vector.broadcast %227 : vector<1x1x96xf32> to vector<1x64x96xf32>
    %229 = arith.addf %225, %228 : vector<1x64x96xf32>
    %230 = vector.extract_strided_slice %229 {offsets = [0, 0, 0], sizes = [1, 64, 32], strides = [1, 1, 1]} : vector<1x64x96xf32> to vector<1x64x32xf32>
    %231 = arith.truncf %230 : vector<1x64x32xf32> to vector<1x64x32xbf16>
    %232 = vector.extract_strided_slice %229 {offsets = [0, 0, 32], sizes = [1, 64, 32], strides = [1, 1, 1]} : vector<1x64x96xf32> to vector<1x64x32xf32>
    %233 = arith.truncf %232 : vector<1x64x32xf32> to vector<1x64x32xbf16>
    %234 = vector.extract_strided_slice %229 {offsets = [0, 0, 64], sizes = [1, 64, 32], strides = [1, 1, 1]} : vector<1x64x96xf32> to vector<1x64x32xf32>
    %235 = arith.truncf %234 : vector<1x64x32xf32> to vector<1x64x32xbf16>
    "tpu.trace_start"() <{level = 10 : i32, message = "bid,bjd->bij"}> : () -> ()
    %cst_111 = arith.constant dense<0.000000e+00> : vector<1x64x64xf32>
    %236 = tpu.matmul %231, %233, %cst_111 {dimension_numbers = #tpu.dot_dimension_numbers<[2], [2], [1], [1], [0, 0, 0, 1, 1, 1], [0], [0]>} : vector<1x64x32xbf16>, vector<1x64x32xbf16>, vector<1x64x64xf32> -> vector<1x64x64xf32>
    "tpu.trace_stop"() : () -> ()
    %cst_112 = arith.constant 0.176776692 : f32
    %237 = vector.broadcast %cst_112 : f32 to vector<1x64x64xf32>
    %238 = arith.mulf %236, %237 : vector<1x64x64xf32>
    %cst_113 = arith.constant dense<0xFF800000> : vector<1x64xf32>
    %239 = vector.multi_reduction <maximumf>, %238, %cst_113 [2] : vector<1x64x64xf32> to vector<1x64xf32>
    %240 = vector.shape_cast %239 : vector<1x64xf32> to vector<1x64x1xf32>
    %241 = vector.broadcast %240 : vector<1x64x1xf32> to vector<1x64x64xf32>
    %242 = arith.subf %238, %241 : vector<1x64x64xf32>
    %243 = math.exp %242 : vector<1x64x64xf32>
    %cst_114 = arith.constant dense<0.000000e+00> : vector<1x64xf32>
    %244 = vector.multi_reduction <add>, %243, %cst_114 [2] : vector<1x64x64xf32> to vector<1x64xf32>
    %245 = vector.shape_cast %244 : vector<1x64xf32> to vector<1x64x1xf32>
    %246 = tpu.reciprocal %245 {approx = true} : vector<1x64x1xf32> -> vector<1x64x1xf32>
    %247 = vector.broadcast %246 : vector<1x64x1xf32> to vector<1x64x64xf32>
    %248 = arith.mulf %243, %247 : vector<1x64x64xf32>
    %249 = arith.truncf %248 : vector<1x64x64xf32> to vector<1x64x64xbf16>
    "tpu.trace_start"() <{level = 10 : i32, message = "bij,bjd->bid"}> : () -> ()
    %cst_115 = arith.constant dense<0.000000e+00> : vector<1x64x32xf32>
    %250 = tpu.matmul %249, %235, %cst_115 {dimension_numbers = #tpu.dot_dimension_numbers<[2], [1], [1], [2], [0, 0, 0, 1, 1, 2], [0], [0]>} : vector<1x64x64xbf16>, vector<1x64x32xbf16>, vector<1x64x32xf32> -> vector<1x64x32xf32>
    "tpu.trace_stop"() : () -> ()
    %251 = vector.shape_cast %250 : vector<1x64x32xf32> to vector<64x32xf32>
    %252 = arith.truncf %251 : vector<64x32xf32> to vector<64x32xbf16>
    %c0_116 = arith.constant 0 : index
    %c0_117 = arith.constant 0 : index
    %253 = vector.load %arg22[%c0_116, %c0_117] : memref<32x32xbf16, #tpu.memory_space<vmem>>, vector<32x32xbf16>
    %cst_118 = arith.constant dense<0.000000e+00> : vector<64x32xf32>
    %254 = tpu.matmul %252, %253, %cst_118 {dimension_numbers = #tpu.dot_dimension_numbers<[1], [0], [0], [1], [0, 0, 1, 1], [], []>} : vector<64x32xbf16>, vector<32x32xbf16>, vector<64x32xf32> -> vector<64x32xf32>
    %255 = vector.shape_cast %254 : vector<64x32xf32> to vector<1x64x32xf32>
    %c0_119 = arith.constant 0 : index
    %c0_120 = arith.constant 0 : index
    %256 = vector.load %arg23[%c0_119, %c0_120] : memref<1x32xf32, #tpu.memory_space<vmem>>, vector<1x32xf32>
    %257 = vector.shape_cast %256 : vector<1x32xf32> to vector<1x1x32xf32>
    %258 = vector.broadcast %257 : vector<1x1x32xf32> to vector<1x64x32xf32>
    %259 = arith.addf %255, %258 : vector<1x64x32xf32>
    %260 = arith.addf %259, %220 : vector<1x64x32xf32>
    %c0_121 = arith.constant 0 : index
    %c0_122 = arith.constant 0 : index
    %c0_123 = arith.constant 0 : index
    %261 = vector.load %arg24[%c0_121, %c0_122, %c0_123] : memref<1x64x32xf32, #tpu.memory_space<vmem>>, vector<1x64x32xf32>
    tpu.vector_store %arg24[%c0_121, %c0_122, %c0_123], %260 {strides = array<i32>} : memref<1x64x32xf32, #tpu.memory_space<vmem>>, vector<1x64x32xf32>,
    return
  }
  func.func @transform_0(%arg0: i32) -> (i32, i32, i32) {
    %c0_i32 = arith.constant 0 : i32
    %c0_i32_0 = arith.constant 0 : i32
    %c0_i32_1 = arith.constant 0 : i32
    return %arg0, %c0_i32, %c0_i32_0 : i32, i32, i32
  }
  func.func @transform_1(%arg0: i32) -> (i32, i32, i32) {
    %c0_i32 = arith.constant 0 : i32
    %c0_i32_0 = arith.constant 0 : i32
    %c0_i32_1 = arith.constant 0 : i32
    return %arg0, %c0_i32, %c0_i32_0 : i32, i32, i32
  }
  func.func @transform_2(%arg0: i32) -> (i32, i32, i32) {
    %c0_i32 = arith.constant 0 : i32
    %c0_i32_0 = arith.constant 0 : i32
    %c0_i32_1 = arith.constant 0 : i32
    %c0_i32_2 = arith.constant 0 : i32
    return %c0_i32, %c0_i32_0, %c0_i32_1 : i32, i32, i32
  }
  func.func @transform_3(%arg0: i32) -> (i32, i32) {
    %c0_i32 = arith.constant 0 : i32
    %c0_i32_0 = arith.constant 0 : i32
    %c0_i32_1 = arith.constant 0 : i32
    return %c0_i32, %c0_i32_0 : i32, i32
  }
  func.func @transform_4(%arg0: i32) -> (i32, i32) {
    %c0_i32 = arith.constant 0 : i32
    %c0_i32_0 = arith.constant 0 : i32
    %c0_i32_1 = arith.constant 0 : i32
    return %c0_i32, %c0_i32_0 : i32, i32
  }
  func.func @transform_5(%arg0: i32) -> (i32, i32) {
    %c0_i32 = arith.constant 0 : i32
    %c0_i32_0 = arith.constant 0 : i32
    %c0_i32_1 = arith.constant 0 : i32
    return %c0_i32, %c0_i32_0 : i32, i32
  }
  func.func @transform_6(%arg0: i32) -> (i32, i32) {
    %c0_i32 = arith.constant 0 : i32
    %c0_i32_0 = arith.constant 0 : i32
    %c0_i32_1 = arith.constant 0 : i32
    return %c0_i32, %c0_i32_0 : i32, i32
  }
  func.func @transform_7(%arg0: i32) -> (i32, i32) {
    %c0_i32 = arith.constant 0 : i32
    %c0_i32_0 = arith.constant 0 : i32
    %c0_i32_1 = arith.constant 0 : i32
    return %c0_i32, %c0_i32_0 : i32, i32
  }
  func.func @transform_8(%arg0: i32) -> (i32, i32) {
    %c0_i32 = arith.constant 0 : i32
    %c0_i32_0 = arith.constant 0 : i32
    %c0_i32_1 = arith.constant 0 : i32
    return %c0_i32, %c0_i32_0 : i32, i32
  }
  func.func @transform_9(%arg0: i32) -> (i32, i32) {
    %c0_i32 = arith.constant 0 : i32
    %c0_i32_0 = arith.constant 0 : i32
    %c0_i32_1 = arith.constant 0 : i32
    return %c0_i32, %c0_i32_0 : i32, i32
  }
  func.func @transform_10(%arg0: i32) -> (i32, i32) {
    %c0_i32 = arith.constant 0 : i32
    %c0_i32_0 = arith.constant 0 : i32
    %c0_i32_1 = arith.constant 0 : i32
    return %c0_i32, %c0_i32_0 : i32, i32
  }
  func.func @transform_11(%arg0: i32) -> (i32, i32) {
    %c0_i32 = arith.constant 0 : i32
    %c0_i32_0 = arith.constant 0 : i32
    %c0_i32_1 = arith.constant 0 : i32
    return %c0_i32, %c0_i32_0 : i32, i32
  }
  func.func @transform_12(%arg0: i32) -> (i32, i32) {
    %c0_i32 = arith.constant 0 : i32
    %c0_i32_0 = arith.constant 0 : i32
    %c0_i32_1 = arith.constant 0 : i32
    return %c0_i32, %c0_i32_0 : i32, i32
  }
  func.func @transform_13(%arg0: i32) -> (i32, i32) {
    %c0_i32 = arith.constant 0 : i32
    %c0_i32_0 = arith.constant 0 : i32
    %c0_i32_1 = arith.constant 0 : i32
    return %c0_i32, %c0_i32_0 : i32, i32
  }
  func.func @transform_14(%arg0: i32) -> (i32, i32) {
    %c0_i32 = arith.constant 0 : i32
    %c0_i32_0 = arith.constant 0 : i32
    %c0_i32_1 = arith.constant 0 : i32
    return %c0_i32, %c0_i32_0 : i32, i32
  }
  func.func @transform_15(%arg0: i32) -> (i32, i32) {
    %c0_i32 = arith.constant 0 : i32
    %c0_i32_0 = arith.constant 0 : i32
    %c0_i32_1 = arith.constant 0 : i32
    return %c0_i32, %c0_i32_0 : i32, i32
  }
  func.func @transform_16(%arg0: i32) -> (i32, i32) {
    %c0_i32 = arith.constant 0 : i32
    %c0_i32_0 = arith.constant 0 : i32
    %c0_i32_1 = arith.constant 0 : i32
    return %c0_i32, %c0_i32_0 : i32, i32
  }
  func.func @transform_17(%arg0: i32) -> (i32, i32) {
    %c0_i32 = arith.constant 0 : i32
    %c0_i32_0 = arith.constant 0 : i32
    %c0_i32_1 = arith.constant 0 : i32
    return %c0_i32, %c0_i32_0 : i32, i32
  }
  func.func @transform_18(%arg0: i32) -> (i32, i32) {
    %c0_i32 = arith.constant 0 : i32
    %c0_i32_0 = arith.constant 0 : i32
    %c0_i32_1 = arith.constant 0 : i32
    return %c0_i32, %c0_i32_0 : i32, i32
  }
  func.func @transform_19(%arg0: i32) -> (i32, i32) {
    %c0_i32 = arith.constant 0 : i32
    %c0_i32_0 = arith.constant 0 : i32
    %c0_i32_1 = arith.constant 0 : i32
    return %c0_i32, %c0_i32_0 : i32, i32
  }
  func.func @transform_20(%arg0: i32) -> (i32, i32) {
    %c0_i32 = arith.constant 0 : i32
    %c0_i32_0 = arith.constant 0 : i32
    %c0_i32_1 = arith.constant 0 : i32
    return %c0_i32, %c0_i32_0 : i32, i32
  }
  func.func @transform_21(%arg0: i32) -> (i32, i32) {
    %c0_i32 = arith.constant 0 : i32
    %c0_i32_0 = arith.constant 0 : i32
    %c0_i32_1 = arith.constant 0 : i32
    return %c0_i32, %c0_i32_0 : i32, i32
  }
  func.func @transform_22(%arg0: i32) -> (i32, i32) {
    %c0_i32 = arith.constant 0 : i32
    %c0_i32_0 = arith.constant 0 : i32
    %c0_i32_1 = arith.constant 0 : i32
    return %c0_i32, %c0_i32_0 : i32, i32
  }
  func.func @transform_23(%arg0: i32) -> (i32, i32, i32) {
    %c0_i32 = arith.constant 0 : i32
    %c0_i32_0 = arith.constant 0 : i32
    %c0_i32_1 = arith.constant 0 : i32
    return %arg0, %c0_i32, %c0_i32_0 : i32, i32, i32
  }
}

</mosaic_0001>

<llo_original>
// kernel: tpu_custom_call.1
$region0: #{tpu_custom_call.1}
  #allocation0 [shape = 'u32[]', space=smem, size = 0x4, offset = 0x4, fixed_abs, tag = 'smem constant byte address 0x4 - core index']
  #allocation1 [shape = 'u32[144,128]{1,0:T(1,128)}', space=vmem, size = 0x12000, scoped, tag = 'internal scratch']
  %s0 = inlined_call_operand.vmem [shape: f32[2,64,64], index: 0, kind: input, shape index: {}]
  %s1 = inlined_call_operand.vmem [shape: f32[2,1,32], index: 1, kind: input, shape index: {}]
  %s2 = inlined_call_operand.vmem [shape: f32[9,64,1], index: 2, kind: input, shape index: {}]
  %s3 = inlined_call_operand.vmem [shape: f32[64,16], index: 3, kind: input, shape index: {}]
  %s4 = inlined_call_operand.vmem [shape: f32[16,64], index: 4, kind: input, shape index: {}]
  %s5 = inlined_call_operand.vmem [shape: f32[1,64], index: 5, kind: input, shape index: {}]
  %s6 = inlined_call_operand.vmem [shape: f32[1,64], index: 6, kind: input, shape index: {}]
  %s7 = inlined_call_operand.vmem [shape: bf16[576,32], index: 7, kind: input, shape index: {}]
  %s8 = inlined_call_operand.vmem [shape: f32[1,32], index: 8, kind: input, shape index: {}]
  %s9 = inlined_call_operand.vmem [shape: bf16[32,32], index: 9, kind: input, shape index: {}]
  %s10 = inlined_call_operand.vmem [shape: f32[1,32], index: 10, kind: input, shape index: {}]
  %s11 = inlined_call_operand.vmem [shape: f32[32,16], index: 11, kind: input, shape index: {}]
  %s12 = inlined_call_operand.vmem [shape: f32[16,32], index: 12, kind: input, shape index: {}]
  %s13 = inlined_call_operand.vmem [shape: f32[1,32], index: 13, kind: input, shape index: {}]
  %s14 = inlined_call_operand.vmem [shape: f32[1,32], index: 14, kind: input, shape index: {}]
  %s15 = inlined_call_operand.vmem [shape: bf16[288,32], index: 15, kind: input, shape index: {}]
  %s16 = inlined_call_operand.vmem [shape: f32[1,32], index: 16, kind: input, shape index: {}]
  %s17 = inlined_call_operand.vmem [shape: bf16[64,32], index: 17, kind: input, shape index: {}]
  %s18 = inlined_call_operand.vmem [shape: f32[1,32], index: 18, kind: input, shape index: {}]
  %s19 = inlined_call_operand.vmem [shape: bf16[32,96], index: 19, kind: input, shape index: {}]
  %s20 = inlined_call_operand.vmem [shape: f32[1,96], index: 20, kind: input, shape index: {}]
  %s21 = inlined_call_operand.vmem [shape: bf16[32,32], index: 21, kind: input, shape index: {}]
  %s22 = inlined_call_operand.vmem [shape: f32[1,32], index: 22, kind: input, shape index: {}]
  %s23 = inlined_call_operand.vmem [shape: f32[2,64,32], index: 23, kind: output, shape index: {}]
  %s24 = sld [smem:[#allocation0]]
  $region125: #{tpu_custom_call.1} parent=0
    _
  %s26 = ssub.s32 1, %s24
  %s27 = scalar_select 0, %s26, %s24
  loop: start=0, step=1, limit=4
  $region2: #{tpu_custom_call.1} parent=0 // loop_pre_header
    _
  $region3: #{tpu_custom_call.1} parent=0 // loop_header
    %s29 = sphi 0, %s33
    %p30 = scmp.ge.s32.totalorder %s29, 4
    %s39 = sphi 0, %s41
    %s42 = sphi 0, %s39
    %s43 = sphi 0, %s42
    %s59 = sphi 0, %s43
    %s65 = sphi 0, %s67
    %s68 = sphi 0, %s65
    %s69 = sphi 0, %s68
    %s85 = sphi 0, %s69
    %s89 = sphi 0, %s89
    %s91 = sphi 0, %s89
    %s92 = sphi 0, %s91
    %s106 = sphi 0, %s92
    %s110 = sphi 0, %s110
    %s112 = sphi 0, %s110
    %s113 = sphi 0, %s112
    %s127 = sphi 0, %s113
    %s131 = sphi 0, %s131
    %s133 = sphi 0, %s131
    %s134 = sphi 0, %s133
    %s148 = sphi 0, %s134
    %s152 = sphi 0, %s152
    %s154 = sphi 0, %s152
    %s155 = sphi 0, %s154
    %s169 = sphi 0, %s155
    %s173 = sphi 0, %s173
    %s175 = sphi 0, %s173
    %s176 = sphi 0, %s175
    %s190 = sphi 0, %s176
    %s194 = sphi 0, %s194
    %s196 = sphi 0, %s194
    %s197 = sphi 0, %s196
    %s211 = sphi 0, %s197
    %s215 = sphi 0, %s215
    %s217 = sphi 0, %s215
    %s218 = sphi 0, %s217
    %s232 = sphi 0, %s218
    %s236 = sphi 0, %s236
    %s238 = sphi 0, %s236
    %s239 = sphi 0, %s238
    %s253 = sphi 0, %s239
    %s257 = sphi 0, %s257
    %s259 = sphi 0, %s257
    %s260 = sphi 0, %s259
    %s274 = sphi 0, %s260
    %s278 = sphi 0, %s278
    %s280 = sphi 0, %s278
    %s281 = sphi 0, %s280
    %s295 = sphi 0, %s281
    %s299 = sphi 0, %s299
    %s301 = sphi 0, %s299
    %s302 = sphi 0, %s301
    %s316 = sphi 0, %s302
    %s320 = sphi 0, %s320
    %s322 = sphi 0, %s320
    %s323 = sphi 0, %s322
    %s337 = sphi 0, %s323
    %s341 = sphi 0, %s341
    %s343 = sphi 0, %s341
    %s344 = sphi 0, %s343
    %s358 = sphi 0, %s344
    %s362 = sphi 0, %s362
    %s364 = sphi 0, %s362
    %s365 = sphi 0, %s364
    %s379 = sphi 0, %s365
    %s383 = sphi 0, %s383
    %s385 = sphi 0, %s383
    %s386 = sphi 0, %s385
    %s400 = sphi 0, %s386
    %s404 = sphi 0, %s404
    %s406 = sphi 0, %s404
    %s407 = sphi 0, %s406
    %s421 = sphi 0, %s407
    %s425 = sphi 0, %s425
    %s427 = sphi 0, %s425
    %s428 = sphi 0, %s427
    %s442 = sphi 0, %s428
    %s446 = sphi 0, %s446
    %s448 = sphi 0, %s446
    %s449 = sphi 0, %s448
    %s463 = sphi 0, %s449
    %s467 = sphi 0, %s467
    %s469 = sphi 0, %s467
    %s470 = sphi 0, %s469
    %s484 = sphi 0, %s470
    %s488 = sphi 0, %s488
    %s490 = sphi 0, %s488
    %s491 = sphi 0, %s490
    %s505 = sphi 0, %s491
    %s509 = sphi 0, %s509
    %s511 = sphi 0, %s509
    %s512 = sphi 0, %s511
    %s526 = sphi 0, %s512
    %s532 = sphi 0, %s534
    %s535 = sphi 0, %s532
    %s536 = sphi 0, %s535
    %s552 = sphi 0, %s536
  $region4: #{tpu_custom_call.1} parent=0 // loop_header_branch
    %32 = sbr.rel (%p30) target = $region8
  $region5: #{tpu_custom_call.1} parent=0 // loop_body
    %s34 = ssub.s32 %s29, 1
    %s35 = ssub.s32 %s29, 2
    %s36 = sadd.s32 %s29, 1
    %s37 = ssub.s32 %s29, %s36
    %p38 = scmp.eq.s32.totalorder %s37, 0
    %s40 = sadd.s32 %s39, 1
    %s41 = scalar_select %p38, %s39, %s40
    %p44 = pneg %p38
    %p45 = scmp.eq.s32.totalorder %s29, 1
    %p46 = por %p44, %p45
    %p47 = scmp.ne.s32.totalorder %s39, %s42
    %p48 = scmp.eq.s32.totalorder %s29, 0
    %p49 = por %p47, %p48
    %p50 = scmp.ne.s32.totalorder %s39, %s42
    %p51 = scmp.eq.s32.totalorder %s34, 1
    %p52 = por %p50, %p51
    %p53 = scmp.ne.s32.totalorder %s42, %s43
    %p54 = scmp.eq.s32.totalorder %s34, 0
    %p55 = por %p53, %p54
    %p56 = scmp.ne.s32.totalorder %s42, %s43
    %p57 = scmp.eq.s32.totalorder %s35, 1
    %p58 = por %p56, %p57
    %p60 = scmp.ne.s32.totalorder %s43, %s59
    %p61 = scmp.eq.s32.totalorder %s35, 0
    %p62 = por %p60, %p61
    %s63 = ssub.s32 %s29, %s36
    %p64 = scmp.eq.s32.totalorder %s63, 0
    %s66 = sadd.s32 %s65, 1
    %s67 = scalar_select %p64, %s65, %s66
    %p70 = pneg %p64
    %p71 = scmp.eq.s32.totalorder %s29, 1
    %p72 = por %p70, %p71
    %p73 = scmp.ne.s32.totalorder %s65, %s68
    %p74 = scmp.eq.s32.totalorder %s29, 0
    %p75 = por %p73, %p74
    %p76 = scmp.ne.s32.totalorder %s65, %s68
    %p77 = scmp.eq.s32.totalorder %s34, 1
    %p78 = por %p76, %p77
    %p79 = scmp.ne.s32.totalorder %s68, %s69
    %p80 = scmp.eq.s32.totalorder %s34, 0
    %p81 = por %p79, %p80
    %p82 = scmp.ne.s32.totalorder %s68, %s69
    %p83 = scmp.eq.s32.totalorder %s35, 1
    %p84 = por %p82, %p83
    %p86 = scmp.ne.s32.totalorder %s69, %s85
    %p87 = scmp.eq.s32.totalorder %s35, 0
    %p88 = por %p86, %p87
    %s90 = sadd.s32 %s89, 1
    %p93 = scmp.eq.s32.totalorder %s29, 1
    %p94 = scmp.ne.s32.totalorder %s89, %s91
    %p95 = scmp.eq.s32.totalorder %s29, 0
    %p96 = por %p94, %p95
    %p97 = scmp.ne.s32.totalorder %s89, %s91
    %p98 = scmp.eq.s32.totalorder %s34, 1
    %p99 = por %p97, %p98
    %p100 = scmp.ne.s32.totalorder %s91, %s92
    %p101 = scmp.eq.s32.totalorder %s34, 0
    %p102 = por %p100, %p101
    %p103 = scmp.ne.s32.totalorder %s91, %s92
    %p104 = scmp.eq.s32.totalorder %s35, 1
    %p105 = por %p103, %p104
    %p107 = scmp.ne.s32.totalorder %s92, %s106
    %p108 = scmp.eq.s32.totalorder %s35, 0
    %p109 = por %p107, %p108
    %s111 = sadd.s32 %s110, 1
    %p114 = scmp.eq.s32.totalorder %s29, 1
    %p115 = scmp.ne.s32.totalorder %s110, %s112
    %p116 = scmp.eq.s32.totalorder %s29, 0
    %p117 = por %p115, %p116
    %p118 = scmp.ne.s32.totalorder %s110, %s112
    %p119 = scmp.eq.s32.totalorder %s34, 1
    %p120 = por %p118, %p119
    %p121 = scmp.ne.s32.totalorder %s112, %s113
    %p122 = scmp.eq.s32.totalorder %s34, 0
    %p123 = por %p121, %p122
    %p124 = scmp.ne.s32.totalorder %s112, %s113
    %p125 = scmp.eq.s32.totalorder %s35, 1
    %p126 = por %p124, %p125
    %p128 = scmp.ne.s32.totalorder %s113, %s127
    %p129 = scmp.eq.s32.totalorder %s35, 0
    %p130 = por %p128, %p129
    %s132 = sadd.s32 %s131, 1
    %p135 = scmp.eq.s32.totalorder %s29, 1
    %p136 = scmp.ne.s32.totalorder %s131, %s133
    %p137 = scmp.eq.s32.totalorder %s29, 0
    %p138 = por %p136, %p137
    %p139 = scmp.ne.s32.totalorder %s131, %s133
    %p140 = scmp.eq.s32.totalorder %s34, 1
    %p141 = por %p139, %p140
    %p142 = scmp.ne.s32.totalorder %s133, %s134
    %p143 = scmp.eq.s32.totalorder %s34, 0
    %p144 = por %p142, %p143
    %p145 = scmp.ne.s32.totalorder %s133, %s134
    %p146 = scmp.eq.s32.totalorder %s35, 1
    %p147 = por %p145, %p146
    %p149 = scmp.ne.s32.totalorder %s134, %s148
    %p150 = scmp.eq.s32.totalorder %s35, 0
    %p151 = por %p149, %p150
    %s153 = sadd.s32 %s152, 1
    %p156 = scmp.eq.s32.totalorder %s29, 1
    %p157 = scmp.ne.s32.totalorder %s152, %s154
    %p158 = scmp.eq.s32.totalorder %s29, 0
    %p159 = por %p157, %p158
    %p160 = scmp.ne.s32.totalorder %s152, %s154
    %p161 = scmp.eq.s32.totalorder %s34, 1
    %p162 = por %p160, %p161
    %p163 = scmp.ne.s32.totalorder %s154, %s155
    %p164 = scmp.eq.s32.totalorder %s34, 0
    %p165 = por %p163, %p164
    %p166 = scmp.ne.s32.totalorder %s154, %s155
    %p167 = scmp.eq.s32.totalorder %s35, 1
    %p168 = por %p166, %p167
    %p170 = scmp.ne.s32.totalorder %s155, %s169
    %p171 = scmp.eq.s32.totalorder %s35, 0
    %p172 = por %p170, %p171
    %s174 = sadd.s32 %s173, 1
    %p177 = scmp.eq.s32.totalorder %s29, 1
    %p178 = scmp.ne.s32.totalorder %s173, %s175
    %p179 = scmp.eq.s32.totalorder %s29, 0
    %p180 = por %p178, %p179
    %p181 = scmp.ne.s32.totalorder %s173, %s175
    %p182 = scmp.eq.s32.totalorder %s34, 1
    %p183 = por %p181, %p182
    %p184 = scmp.ne.s32.totalorder %s175, %s176
    %p185 = scmp.eq.s32.totalorder %s34, 0
    %p186 = por %p184, %p185
    %p187 = scmp.ne.s32.totalorder %s175, %s176
    %p188 = scmp.eq.s32.totalorder %s35, 1
    %p189 = por %p187, %p188
    %p191 = scmp.ne.s32.totalorder %s176, %s190
    %p192 = scmp.eq.s32.totalorder %s35, 0
    %p193 = por %p191, %p192
    %s195 = sadd.s32 %s194, 1
    %p198 = scmp.eq.s32.totalorder %s29, 1
    %p199 = scmp.ne.s32.totalorder %s194, %s196
    %p200 = scmp.eq.s32.totalorder %s29, 0
    %p201 = por %p199, %p200
    %p202 = scmp.ne.s32.totalorder %s194, %s196
    %p203 = scmp.eq.s32.totalorder %s34, 1
    %p204 = por %p202, %p203
    %p205 = scmp.ne.s32.totalorder %s196, %s197
    %p206 = scmp.eq.s32.totalorder %s34, 0
    %p207 = por %p205, %p206
    %p208 = scmp.ne.s32.totalorder %s196, %s197
    %p209 = scmp.eq.s32.totalorder %s35, 1
    %p210 = por %p208, %p209
    %p212 = scmp.ne.s32.totalorder %s197, %s211
    %p213 = scmp.eq.s32.totalorder %s35, 0
    %p214 = por %p212, %p213
    %s216 = sadd.s32 %s215, 1
    %p219 = scmp.eq.s32.totalorder %s29, 1
    %p220 = scmp.ne.s32.totalorder %s215, %s217
    %p221 = scmp.eq.s32.totalorder %s29, 0
    %p222 = por %p220, %p221
    %p223 = scmp.ne.s32.totalorder %s215, %s217
    %p224 = scmp.eq.s32.totalorder %s34, 1
    %p225 = por %p223, %p224
    %p226 = scmp.ne.s32.totalorder %s217, %s218
    %p227 = scmp.eq.s32.totalorder %s34, 0
    %p228 = por %p226, %p227
    %p229 = scmp.ne.s32.totalorder %s217, %s218
    %p230 = scmp.eq.s32.totalorder %s35, 1
    %p231 = por %p229, %p230
    %p233 = scmp.ne.s32.totalorder %s218, %s232
    %p234 = scmp.eq.s32.totalorder %s35, 0
    %p235 = por %p233, %p234
    %s237 = sadd.s32 %s236, 1
    %p240 = scmp.eq.s32.totalorder %s29, 1
    %p241 = scmp.ne.s32.totalorder %s236, %s238
    %p242 = scmp.eq.s32.totalorder %s29, 0
    %p243 = por %p241, %p242
    %p244 = scmp.ne.s32.totalorder %s236, %s238
    %p245 = scmp.eq.s32.totalorder %s34, 1
    %p246 = por %p244, %p245
    %p247 = scmp.ne.s32.totalorder %s238, %s239
    %p248 = scmp.eq.s32.totalorder %s34, 0
    %p249 = por %p247, %p248
    %p250 = scmp.ne.s32.totalorder %s238, %s239
    %p251 = scmp.eq.s32.totalorder %s35, 1
    %p252 = por %p250, %p251
    %p254 = scmp.ne.s32.totalorder %s239, %s253
    %p255 = scmp.eq.s32.totalorder %s35, 0
    %p256 = por %p254, %p255
    %s258 = sadd.s32 %s257, 1
    %p261 = scmp.eq.s32.totalorder %s29, 1
    %p262 = scmp.ne.s32.totalorder %s257, %s259
    %p263 = scmp.eq.s32.totalorder %s29, 0
    %p264 = por %p262, %p263
    %p265 = scmp.ne.s32.totalorder %s257, %s259
    %p266 = scmp.eq.s32.totalorder %s34, 1
    %p267 = por %p265, %p266
    %p268 = scmp.ne.s32.totalorder %s259, %s260
    %p269 = scmp.eq.s32.totalorder %s34, 0
    %p270 = por %p268, %p269
    %p271 = scmp.ne.s32.totalorder %s259, %s260
    %p272 = scmp.eq.s32.totalorder %s35, 1
    %p273 = por %p271, %p272
    %p275 = scmp.ne.s32.totalorder %s260, %s274
    %p276 = scmp.eq.s32.totalorder %s35, 0
    %p277 = por %p275, %p276
    %s279 = sadd.s32 %s278, 1
    %p282 = scmp.eq.s32.totalorder %s29, 1
    %p283 = scmp.ne.s32.totalorder %s278, %s280
    %p284 = scmp.eq.s32.totalorder %s29, 0
    %p285 = por %p283, %p284
    %p286 = scmp.ne.s32.totalorder %s278, %s280
    %p287 = scmp.eq.s32.totalorder %s34, 1
    %p288 = por %p286, %p287
    %p289 = scmp.ne.s32.totalorder %s280, %s281
    %p290 = scmp.eq.s32.totalorder %s34, 0
    %p291 = por %p289, %p290
    %p292 = scmp.ne.s32.totalorder %s280, %s281
    %p293 = scmp.eq.s32.totalorder %s35, 1
    %p294 = por %p292, %p293
    %p296 = scmp.ne.s32.totalorder %s281, %s295
    %p297 = scmp.eq.s32.totalorder %s35, 0
    %p298 = por %p296, %p297
    %s300 = sadd.s32 %s299, 1
    %p303 = scmp.eq.s32.totalorder %s29, 1
    %p304 = scmp.ne.s32.totalorder %s299, %s301
    %p305 = scmp.eq.s32.totalorder %s29, 0
    %p306 = por %p304, %p305
    %p307 = scmp.ne.s32.totalorder %s299, %s301
    %p308 = scmp.eq.s32.totalorder %s34, 1
    %p309 = por %p307, %p308
    %p310 = scmp.ne.s32.totalorder %s301, %s302
    %p311 = scmp.eq.s32.totalorder %s34, 0
    %p312 = por %p310, %p311
    %p313 = scmp.ne.s32.totalorder %s301, %s302
    %p314 = scmp.eq.s32.totalorder %s35, 1
    %p315 = por %p313, %p314
    %p317 = scmp.ne.s32.totalorder %s302, %s316
    %p318 = scmp.eq.s32.totalorder %s35, 0
    %p319 = por %p317, %p318
    %s321 = sadd.s32 %s320, 1
    %p324 = scmp.eq.s32.totalorder %s29, 1
    %p325 = scmp.ne.s32.totalorder %s320, %s322
    %p326 = scmp.eq.s32.totalorder %s29, 0
    %p327 = por %p325, %p326
    %p328 = scmp.ne.s32.totalorder %s320, %s322
    %p329 = scmp.eq.s32.totalorder %s34, 1
    %p330 = por %p328, %p329
    %p331 = scmp.ne.s32.totalorder %s322, %s323
    %p332 = scmp.eq.s32.totalorder %s34, 0
    %p333 = por %p331, %p332
    %p334 = scmp.ne.s32.totalorder %s322, %s323
    %p335 = scmp.eq.s32.totalorder %s35, 1
    %p336 = por %p334, %p335
    %p338 = scmp.ne.s32.totalorder %s323, %s337
    %p339 = scmp.eq.s32.totalorder %s35, 0
    %p340 = por %p338, %p339
    %s342 = sadd.s32 %s341, 1
    %p345 = scmp.eq.s32.totalorder %s29, 1
    %p346 = scmp.ne.s32.totalorder %s341, %s343
    %p347 = scmp.eq.s32.totalorder %s29, 0
    %p348 = por %p346, %p347
    %p349 = scmp.ne.s32.totalorder %s341, %s343
    %p350 = scmp.eq.s32.totalorder %s34, 1
    %p351 = por %p349, %p350
    %p352 = scmp.ne.s32.totalorder %s343, %s344
    %p353 = scmp.eq.s32.totalorder %s34, 0
    %p354 = por %p352, %p353
    %p355 = scmp.ne.s32.totalorder %s343, %s344
    %p356 = scmp.eq.s32.totalorder %s35, 1
    %p357 = por %p355, %p356
    %p359 = scmp.ne.s32.totalorder %s344, %s358
    %p360 = scmp.eq.s32.totalorder %s35, 0
    %p361 = por %p359, %p360
    %s363 = sadd.s32 %s362, 1
    %p366 = scmp.eq.s32.totalorder %s29, 1
    %p367 = scmp.ne.s32.totalorder %s362, %s364
    %p368 = scmp.eq.s32.totalorder %s29, 0
    %p369 = por %p367, %p368
    %p370 = scmp.ne.s32.totalorder %s362, %s364
    %p371 = scmp.eq.s32.totalorder %s34, 1
    %p372 = por %p370, %p371
    %p373 = scmp.ne.s32.totalorder %s364, %s365
    %p374 = scmp.eq.s32.totalorder %s34, 0
    %p375 = por %p373, %p374
    %p376 = scmp.ne.s32.totalorder %s364, %s365
    %p377 = scmp.eq.s32.totalorder %s35, 1
    %p378 = por %p376, %p377
    %p380 = scmp.ne.s32.totalorder %s365, %s379
    %p381 = scmp.eq.s32.totalorder %s35, 0
    %p382 = por %p380, %p381
    %s384 = sadd.s32 %s383, 1
    %p387 = scmp.eq.s32.totalorder %s29, 1
    %p388 = scmp.ne.s32.totalorder %s383, %s385
    %p389 = scmp.eq.s32.totalorder %s29, 0
    %p390 = por %p388, %p389
    %p391 = scmp.ne.s32.totalorder %s383, %s385
    %p392 = scmp.eq.s32.totalorder %s34, 1
    %p393 = por %p391, %p392
    %p394 = scmp.ne.s32.totalorder %s385, %s386
    %p395 = scmp.eq.s32.totalorder %s34, 0
    %p396 = por %p394, %p395
    %p397 = scmp.ne.s32.totalorder %s385, %s386
    %p398 = scmp.eq.s32.totalorder %s35, 1
    %p399 = por %p397, %p398
    %p401 = scmp.ne.s32.totalorder %s386, %s400
    %p402 = scmp.eq.s32.totalorder %s35, 0
    %p403 = por %p401, %p402
    %s405 = sadd.s32 %s404, 1
    %p408 = scmp.eq.s32.totalorder %s29, 1
    %p409 = scmp.ne.s32.totalorder %s404, %s406
    %p410 = scmp.eq.s32.totalorder %s29, 0
    %p411 = por %p409, %p410
    %p412 = scmp.ne.s32.totalorder %s404, %s406
    %p413 = scmp.eq.s32.totalorder %s34, 1
    %p414 = por %p412, %p413
    %p415 = scmp.ne.s32.totalorder %s406, %s407
    %p416 = scmp.eq.s32.totalorder %s34, 0
    %p417 = por %p415, %p416
    %p418 = scmp.ne.s32.totalorder %s406, %s407
    %p419 = scmp.eq.s32.totalorder %s35, 1
    %p420 = por %p418, %p419
    %p422 = scmp.ne.s32.totalorder %s407, %s421
    %p423 = scmp.eq.s32.totalorder %s35, 0
    %p424 = por %p422, %p423
    %s426 = sadd.s32 %s425, 1
    %p429 = scmp.eq.s32.totalorder %s29, 1
    %p430 = scmp.ne.s32.totalorder %s425, %s427
    %p431 = scmp.eq.s32.totalorder %s29, 0
    %p432 = por %p430, %p431
    %p433 = scmp.ne.s32.totalorder %s425, %s427
    %p434 = scmp.eq.s32.totalorder %s34, 1
    %p435 = por %p433, %p434
    %p436 = scmp.ne.s32.totalorder %s427, %s428
    %p437 = scmp.eq.s32.totalorder %s34, 0
    %p438 = por %p436, %p437
    %p439 = scmp.ne.s32.totalorder %s427, %s428
    %p440 = scmp.eq.s32.totalorder %s35, 1
    %p441 = por %p439, %p440
    %p443 = scmp.ne.s32.totalorder %s428, %s442
    %p444 = scmp.eq.s32.totalorder %s35, 0
    %p445 = por %p443, %p444
    %s447 = sadd.s32 %s446, 1
    %p450 = scmp.eq.s32.totalorder %s29, 1
    %p451 = scmp.ne.s32.totalorder %s446, %s448
    %p452 = scmp.eq.s32.totalorder %s29, 0
    %p453 = por %p451, %p452
    %p454 = scmp.ne.s32.totalorder %s446, %s448
    %p455 = scmp.eq.s32.totalorder %s34, 1
    %p456 = por %p454, %p455
    %p457 = scmp.ne.s32.totalorder %s448, %s449
    %p458 = scmp.eq.s32.totalorder %s34, 0
    %p459 = por %p457, %p458
    %p460 = scmp.ne.s32.totalorder %s448, %s449
    %p461 = scmp.eq.s32.totalorder %s35, 1
    %p462 = por %p460, %p461
    %p464 = scmp.ne.s32.totalorder %s449, %s463
    %p465 = scmp.eq.s32.totalorder %s35, 0
    %p466 = por %p464, %p465
    %s468 = sadd.s32 %s467, 1
    %p471 = scmp.eq.s32.totalorder %s29, 1
    %p472 = scmp.ne.s32.totalorder %s467, %s469
    %p473 = scmp.eq.s32.totalorder %s29, 0
    %p474 = por %p472, %p473
    %p475 = scmp.ne.s32.totalorder %s467, %s469
    %p476 = scmp.eq.s32.totalorder %s34, 1
    %p477 = por %p475, %p476
    %p478 = scmp.ne.s32.totalorder %s469, %s470
    %p479 = scmp.eq.s32.totalorder %s34, 0
    %p480 = por %p478, %p479
    %p481 = scmp.ne.s32.totalorder %s469, %s470
    %p482 = scmp.eq.s32.totalorder %s35, 1
    %p483 = por %p481, %p482
    %p485 = scmp.ne.s32.totalorder %s470, %s484
    %p486 = scmp.eq.s32.totalorder %s35, 0
    %p487 = por %p485, %p486
    %s489 = sadd.s32 %s488, 1
    %p492 = scmp.eq.s32.totalorder %s29, 1
    %p493 = scmp.ne.s32.totalorder %s488, %s490
    %p494 = scmp.eq.s32.totalorder %s29, 0
    %p495 = por %p493, %p494
    %p496 = scmp.ne.s32.totalorder %s488, %s490
    %p497 = scmp.eq.s32.totalorder %s34, 1
    %p498 = por %p496, %p497
    %p499 = scmp.ne.s32.totalorder %s490, %s491
    %p500 = scmp.eq.s32.totalorder %s34, 0
    %p501 = por %p499, %p500
    %p502 = scmp.ne.s32.totalorder %s490, %s491
    %p503 = scmp.eq.s32.totalorder %s35, 1
    %p504 = por %p502, %p503
    %p506 = scmp.ne.s32.totalorder %s491, %s505
    %p507 = scmp.eq.s32.totalorder %s35, 0
    %p508 = por %p506, %p507
    %s510 = sadd.s32 %s509, 1
    %p513 = scmp.eq.s32.totalorder %s29, 1
    %p514 = scmp.ne.s32.totalorder %s509, %s511
    %p515 = scmp.eq.s32.totalorder %s29, 0
    %p516 = por %p514, %p515
    %p517 = scmp.ne.s32.totalorder %s509, %s511
    %p518 = scmp.eq.s32.totalorder %s34, 1
    %p519 = por %p517, %p518
    %p520 = scmp.ne.s32.totalorder %s511, %s512
    %p521 = scmp.eq.s32.totalorder %s34, 0
    %p522 = por %p520, %p521
    %p523 = scmp.ne.s32.totalorder %s511, %s512
    %p524 = scmp.eq.s32.totalorder %s35, 1
    %p525 = por %p523, %p524
    %p527 = scmp.ne.s32.totalorder %s512, %s526
    %p528 = scmp.eq.s32.totalorder %s35, 0
    %p529 = por %p527, %p528
    %s530 = ssub.s32 %s29, %s36
    %p531 = scmp.eq.s32.totalorder %s530, 0
    %s533 = sadd.s32 %s532, 1
    %s534 = scalar_select %p531, %s532, %s533
    %p537 = pneg %p531
    %p538 = scmp.eq.s32.totalorder %s29, 1
    %p539 = por %p537, %p538
    %p540 = scmp.ne.s32.totalorder %s532, %s535
    %p541 = scmp.eq.s32.totalorder %s29, 0
    %p542 = por %p540, %p541
    %p543 = scmp.ne.s32.totalorder %s532, %s535
    %p544 = scmp.eq.s32.totalorder %s34, 1
    %p545 = por %p543, %p544
    %p546 = scmp.ne.s32.totalorder %s535, %s536
    %p547 = scmp.eq.s32.totalorder %s34, 0
    %p548 = por %p546, %p547
    %p549 = scmp.ne.s32.totalorder %s535, %s536
    %p550 = scmp.eq.s32.totalorder %s35, 1
    %p551 = por %p549, %p550
    %p553 = scmp.ne.s32.totalorder %s536, %s552
    %p554 = scmp.eq.s32.totalorder %s35, 0
    %p555 = por %p553, %p554
    %p556 = scmp.le.s32.totalorder 1, %s29
    %p557 = scmp.lt.s32.totalorder %s29, 3
    %p558 = pnand %p556, %p557
    %p559 = pneg %p558
    // Predicated region
    $region9: #{tpu_custom_call.1} parent=5 // pred_check
      _
    $region10: #{tpu_custom_call.1} parent=5 // pred_check_branch
      %561 = sbr.rel (%p558) target = $region12
    $region11: #{tpu_custom_call.1} parent=5 // pred_region
      %s562 = ssub.s32 %s29, 1
      // Predicated region
      $region13: #{tpu_custom_call.1} parent=11 // pred_check
        %p563 = pneg %p102
      $region14: #{tpu_custom_call.1} parent=11 // pred_check_branch
        %565 = sbr.rel (%p563) target = $region16
      $region15: #{tpu_custom_call.1} parent=11 // pred_region
        _
      $region16: #{tpu_custom_call.1} parent=11 // pred_fallthru
        _
      // Predicated region
      $region17: #{tpu_custom_call.1} parent=11 // pred_check
        %p566 = pneg %p123
      $region18: #{tpu_custom_call.1} parent=11 // pred_check_branch
        %568 = sbr.rel (%p566) target = $region20
      $region19: #{tpu_custom_call.1} parent=11 // pred_region
        _
      $region20: #{tpu_custom_call.1} parent=11 // pred_fallthru
        _
      // Predicated region
      $region21: #{tpu_custom_call.1} parent=11 // pred_check
        %p569 = pneg %p144
      $region22: #{tpu_custom_call.1} parent=11 // pred_check_branch
        %571 = sbr.rel (%p569) target = $region24
      $region23: #{tpu_custom_call.1} parent=11 // pred_region
        _
      $region24: #{tpu_custom_call.1} parent=11 // pred_fallthru
        _
      // Predicated region
      $region25: #{tpu_custom_call.1} parent=11 // pred_check
        %p572 = pneg %p165
      $region26: #{tpu_custom_call.1} parent=11 // pred_check_branch
        %574 = sbr.rel (%p572) target = $region28
      $region27: #{tpu_custom_call.1} parent=11 // pred_region
        _
      $region28: #{tpu_custom_call.1} parent=11 // pred_fallthru
        _
      // Predicated region
      $region29: #{tpu_custom_call.1} parent=11 // pred_check
        %p575 = pneg %p186
      $region30: #{tpu_custom_call.1} parent=11 // pred_check_branch
        %577 = sbr.rel (%p575) target = $region32
      $region31: #{tpu_custom_call.1} parent=11 // pred_region
        _
      $region32: #{tpu_custom_call.1} parent=11 // pred_fallthru
        _
      // Predicated region
      $region33: #{tpu_custom_call.1} parent=11 // pred_check
        %p578 = pneg %p207
      $region34: #{tpu_custom_call.1} parent=11 // pred_check_branch
        %580 = sbr.rel (%p578) target = $region36
      $region35: #{tpu_custom_call.1} parent=11 // pred_region
        _
      $region36: #{tpu_custom_call.1} parent=11 // pred_fallthru
        _
      // Predicated region
      $region37: #{tpu_custom_call.1} parent=11 // pred_check
        %p581 = pneg %p228
      $region38: #{tpu_custom_call.1} parent=11 // pred_check_branch
        %583 = sbr.rel (%p581) target = $region40
      $region39: #{tpu_custom_call.1} parent=11 // pred_region
        _
      $region40: #{tpu_custom_call.1} parent=11 // pred_fallthru
        _
      // Predicated region
      $region41: #{tpu_custom_call.1} parent=11 // pred_check
        %p584 = pneg %p249
      $region42: #{tpu_custom_call.1} parent=11 // pred_check_branch
        %586 = sbr.rel (%p584) target = $region44
      $region43: #{tpu_custom_call.1} parent=11 // pred_region
        _
      $region44: #{tpu_custom_call.1} parent=11 // pred_fallthru
        _
      // Predicated region
      $region45: #{tpu_custom_call.1} parent=11 // pred_check
        %p587 = pneg %p270
      $region46: #{tpu_custom_call.1} parent=11 // pred_check_branch
        %589 = sbr.rel (%p587) target = $region48
      $region47: #{tpu_custom_call.1} parent=11 // pred_region
        _
      $region48: #{tpu_custom_call.1} parent=11 // pred_fallthru
        _
      // Predicated region
      $region49: #{tpu_custom_call.1} parent=11 // pred_check
        %p590 = pneg %p291
      $region50: #{tpu_custom_call.1} parent=11 // pred_check_branch
        %592 = sbr.rel (%p590) target = $region52
      $region51: #{tpu_custom_call.1} parent=11 // pred_region
        _
      $region52: #{tpu_custom_call.1} parent=11 // pred_fallthru
        _
      // Predicated region
      $region53: #{tpu_custom_call.1} parent=11 // pred_check
        %p593 = pneg %p312
      $region54: #{tpu_custom_call.1} parent=11 // pred_check_branch
        %595 = sbr.rel (%p593) target = $region56
      $region55: #{tpu_custom_call.1} parent=11 // pred_region
        _
      $region56: #{tpu_custom_call.1} parent=11 // pred_fallthru
        _
      // Predicated region
      $region57: #{tpu_custom_call.1} parent=11 // pred_check
        %p596 = pneg %p333
      $region58: #{tpu_custom_call.1} parent=11 // pred_check_branch
        %598 = sbr.rel (%p596) target = $region60
      $region59: #{tpu_custom_call.1} parent=11 // pred_region
        _
      $region60: #{tpu_custom_call.1} parent=11 // pred_fallthru
        _
      // Predicated region
      $region61: #{tpu_custom_call.1} parent=11 // pred_check
        %p599 = pneg %p354
      $region62: #{tpu_custom_call.1} parent=11 // pred_check_branch
        %601 = sbr.rel (%p599) target = $region64
      $region63: #{tpu_custom_call.1} parent=11 // pred_region
        _
      $region64: #{tpu_custom_call.1} parent=11 // pred_fallthru
        _
      // Predicated region
      $region65: #{tpu_custom_call.1} parent=11 // pred_check
        %p602 = pneg %p375
      $region66: #{tpu_custom_call.1} parent=11 // pred_check_branch
        %604 = sbr.rel (%p602) target = $region68
      $region67: #{tpu_custom_call.1} parent=11 // pred_region
        _
      $region68: #{tpu_custom_call.1} parent=11 // pred_fallthru
        _
      // Predicated region
      $region69: #{tpu_custom_call.1} parent=11 // pred_check
        %p605 = pneg %p396
      $region70: #{tpu_custom_call.1} parent=11 // pred_check_branch
        %607 = sbr.rel (%p605) target = $region72
      $region71: #{tpu_custom_call.1} parent=11 // pred_region
        _
      $region72: #{tpu_custom_call.1} parent=11 // pred_fallthru
        _
      // Predicated region
      $region73: #{tpu_custom_call.1} parent=11 // pred_check
        %p608 = pneg %p417
      $region74: #{tpu_custom_call.1} parent=11 // pred_check_branch
        %610 = sbr.rel (%p608) target = $region76
      $region75: #{tpu_custom_call.1} parent=11 // pred_region
        _
      $region76: #{tpu_custom_call.1} parent=11 // pred_fallthru
        _
      // Predicated region
      $region77: #{tpu_custom_call.1} parent=11 // pred_check
        %p611 = pneg %p438
      $region78: #{tpu_custom_call.1} parent=11 // pred_check_branch
        %613 = sbr.rel (%p611) target = $region80
      $region79: #{tpu_custom_call.1} parent=11 // pred_region
        _
      $region80: #{tpu_custom_call.1} parent=11 // pred_fallthru
        _
      // Predicated region
      $region81: #{tpu_custom_call.1} parent=11 // pred_check
        %p614 = pneg %p459
      $region82: #{tpu_custom_call.1} parent=11 // pred_check_branch
        %616 = sbr.rel (%p614) target = $region84
      $region83: #{tpu_custom_call.1} parent=11 // pred_region
        _
      $region84: #{tpu_custom_call.1} parent=11 // pred_fallthru
        _
      // Predicated region
      $region85: #{tpu_custom_call.1} parent=11 // pred_check
        %p617 = pneg %p480
      $region86: #{tpu_custom_call.1} parent=11 // pred_check_branch
        %619 = sbr.rel (%p617) target = $region88
      $region87: #{tpu_custom_call.1} parent=11 // pred_region
        _
      $region88: #{tpu_custom_call.1} parent=11 // pred_fallthru
        _
      // Predicated region
      $region89: #{tpu_custom_call.1} parent=11 // pred_check
        %p620 = pneg %p501
      $region90: #{tpu_custom_call.1} parent=11 // pred_check_branch
        %622 = sbr.rel (%p620) target = $region92
      $region91: #{tpu_custom_call.1} parent=11 // pred_region
        _
      $region92: #{tpu_custom_call.1} parent=11 // pred_fallthru
        _
      // Predicated region
      $region93: #{tpu_custom_call.1} parent=11 // pred_check
        %p623 = pneg %p522
      $region94: #{tpu_custom_call.1} parent=11 // pred_check_branch
        %625 = sbr.rel (%p623) target = $region96
      $region95: #{tpu_custom_call.1} parent=11 // pred_region
        _
      $region96: #{tpu_custom_call.1} parent=11 // pred_fallthru
        _
    $region12: #{tpu_custom_call.1} parent=5 // pred_fallthru
      _
    %p626 = scmp.lt.s32.totalorder %s29, 2
    // Predicated region
    $region97: #{tpu_custom_call.1} parent=5 // pred_check
      %p627 = pneg %p626
    $region98: #{tpu_custom_call.1} parent=5 // pred_check_branch
      %629 = sbr.rel (%p627) target = $region100
    $region99: #{tpu_custom_call.1} parent=5 // pred_region
      // Predicated region
      $region101: #{tpu_custom_call.1} parent=99 // pred_check
        %p630 = pneg %p49
      $region102: #{tpu_custom_call.1} parent=99 // pred_check_branch
        %632 = sbr.rel (%p630) target = $region104
      $region103: #{tpu_custom_call.1} parent=99 // pred_region
        %p633 = scmp.lt.s32.totalorder %s29, 1
        %s634 = scalar_select %p633, %s29, 1
        %s635 = smul.addr %s634, 8
        %s636 = smul.addr %s635, 8
        %s637 = scalar_lea.vmem %s0, %s636
      $region104: #{tpu_custom_call.1} parent=99 // pred_fallthru
        _
      // Predicated region
      $region105: #{tpu_custom_call.1} parent=99 // pred_check
        %p638 = pneg %p75
      $region106: #{tpu_custom_call.1} parent=99 // pred_check_branch
        %640 = sbr.rel (%p638) target = $region108
      $region107: #{tpu_custom_call.1} parent=99 // pred_region
        %p641 = scmp.lt.s32.totalorder %s29, 1
        %s642 = scalar_select %p641, %s29, 1
        %s643 = scalar_lea.vmem %s1, %s642
      $region108: #{tpu_custom_call.1} parent=99 // pred_fallthru
        _
    $region100: #{tpu_custom_call.1} parent=5 // pred_fallthru
      _
    %p644 = scmp.le.s32.totalorder 1, %s29
    %p645 = scmp.lt.s32.totalorder %s29, 3
    %p646 = pnand %p644, %p645
    %p647 = pneg %p646
    // Predicated region
    $region109: #{tpu_custom_call.1} parent=5 // pred_check
      _
    $region110: #{tpu_custom_call.1} parent=5 // pred_check_branch
      %649 = sbr.rel (%p646) target = $region112
    $region111: #{tpu_custom_call.1} parent=5 // pred_region
      %s650 = ssub.s32 %s29, 1
      %p651 = scmp.lt.s32.totalorder %s34, 1
      %s652 = scalar_select %p651, %s34, 1
      %s653 = smul.addr %s652, 8
      %s654 = smul.addr %s653, 8
      %s655 = scalar_lea.vmem %s0, %s654
      %p656 = pneg %p55
      %p657 = pneg %p52
      %p658 = scmp.lt.s32.totalorder %s34, 1
      %s659 = scalar_select %p658, %s34, 1
      %s660 = scalar_lea.vmem %s1, %s659
      %p661 = pneg %p81
      %p662 = pneg %p78
      %p663 = pneg %p102
      %p664 = pneg %p99
      %p665 = pneg %p123
      %p666 = pneg %p120
      %p667 = pneg %p144
      %p668 = pneg %p141
      %p669 = pneg %p165
      %p670 = pneg %p162
      %p671 = pneg %p186
      %p672 = pneg %p183
      %p673 = pneg %p207
      %p674 = pneg %p204
      %p675 = pneg %p228
      %p676 = pneg %p225
      %p677 = pneg %p249
      %p678 = pneg %p246
      %p679 = pneg %p270
      %p680 = pneg %p267
      %p681 = pneg %p291
      %p682 = pneg %p288
      %p683 = pneg %p312
      %p684 = pneg %p309
      %p685 = pneg %p333
      %p686 = pneg %p330
      %p687 = pneg %p354
      %p688 = pneg %p351
      %p689 = pneg %p375
      %p690 = pneg %p372
      %p691 = pneg %p396
      %p692 = pneg %p393
      %p693 = pneg %p417
      %p694 = pneg %p414
      %p695 = pneg %p438
      %p696 = pneg %p435
      %p697 = pneg %p459
      %p698 = pneg %p456
      %p699 = pneg %p480
      %p700 = pneg %p477
      %p701 = pneg %p501
      %p702 = pneg %p498
      %p703 = pneg %p522
      %p704 = pneg %p519
      %p705 = pneg %p548
      %p706 = pneg %p545
      %p707 = scmp.lt.s32.totalorder %s34, 1
      %s708 = scalar_select %p707, %s34, 1
      %s709 = smul.addr %s708, 8
      %s710 = smul.addr %s709, 8
      %s711 = scalar_lea.vmem %s23, %s710
      %p712 = scmp.lt.s32.totalorder %s34, 1
      %s713 = scalar_select %p712, %s34, 1
      %s714 = smul.addr %s713, 8
      %s715 = smul.addr %s714, 8
      %s716 = scalar_lea.vmem %s0, %s715
      %p717 = scmp.lt.s32.totalorder %s34, 1
      %s718 = scalar_select %p717, %s34, 1
      %s719 = scalar_lea.vmem %s1, %s718
      %p720 = scmp.lt.s32.totalorder %s34, 1
      %s721 = scalar_select %p720, %s34, 1
      %s722 = smul.addr %s721, 8
      %s723 = smul.addr %s722, 8
      %s724 = scalar_lea.vmem %s23, %s723
      %v726 = vld [vmem:[%s716] sm:$0xff]
      %v727 = vld [vmem:[%s716 + $0x8] sm:$0xff]
      %v728 = vld [vmem:[%s716 + $0x10] sm:$0xff]
      %v729 = vld [vmem:[%s716 + $0x18] sm:$0xff]
      %v730 = vld [vmem:[%s716 + $0x20] sm:$0xff]
      %v731 = vld [vmem:[%s716 + $0x28] sm:$0xff]
      %v732 = vld [vmem:[%s716 + $0x30] sm:$0xff]
      %v733 = vld [vmem:[%s716 + $0x38] sm:$0xff]
      %vm734 = vcmask 523264
      %v735 = vsel %vm734, %v726, 0.0
      %v736 = vsel %vm734, %v727, 0.0
      %v737 = vadd.f32 %v735, %v736
      %v738 = vsel %vm734, %v728, 0.0
      %v739 = vadd.f32 %v737, %v738
      %v740 = vsel %vm734, %v729, 0.0
      %v741 = vadd.f32 %v739, %v740
      %v742 = vsel %vm734, %v730, 0.0
      %v743 = vadd.f32 %v741, %v742
      %v744 = vsel %vm734, %v731, 0.0
      %v745 = vadd.f32 %v743, %v744
      %v746 = vsel %vm734, %v732, 0.0
      %v747 = vadd.f32 %v745, %v746
      %v748 = vsel %vm734, %v733, 0.0
      %v749 = vadd.f32 %v747, %v748
      %v750 = vrot.slane %v749, 4
      %v751 = vadd.f32 %v749, %v750
      %v752 = vrot.slane %v751, 2
      %v753 = vadd.f32 %v751, %v752
      %v754 = vrot.slane %v753, 1
      %v755 = vadd.f32 %v753, %v754
      %v756 = vmul.f32 %v726, %v726
      %v757 = vmul.f32 %v727, %v727
      %v758 = vmul.f32 %v728, %v728
      %v759 = vmul.f32 %v729, %v729
      %v760 = vmul.f32 %v730, %v730
      %v761 = vmul.f32 %v731, %v731
      %v762 = vmul.f32 %v732, %v732
      %v763 = vmul.f32 %v733, %v733
      %v764 = vsel %vm734, %v756, 0.0
      %v765 = vsel %vm734, %v757, 0.0
      %v766 = vadd.f32 %v764, %v765
      %v767 = vsel %vm734, %v758, 0.0
      %v768 = vadd.f32 %v766, %v767
      %v769 = vsel %vm734, %v759, 0.0
      %v770 = vadd.f32 %v768, %v769
      %v771 = vsel %vm734, %v760, 0.0
      %v772 = vadd.f32 %v770, %v771
      %v773 = vsel %vm734, %v761, 0.0
      %v774 = vadd.f32 %v772, %v773
      %v775 = vsel %vm734, %v762, 0.0
      %v776 = vadd.f32 %v774, %v775
      %v777 = vsel %vm734, %v763, 0.0
      %v778 = vadd.f32 %v776, %v777
      %v779 = vrot.slane %v778, 4
      %v780 = vadd.f32 %v778, %v779
      %v781 = vrot.slane %v780, 2
      %v782 = vadd.f32 %v780, %v781
      %v783 = vrot.slane %v782, 1
      %v784 = vadd.f32 %v782, %v783
      %vm785 = vcmask 1040384
      %v786 = vsel %vm785, %v755, %v784
      %v787 = vld [vmem:[%s3] sm:$0xff]
      %v788 = vld [vmem:[%s3 + $0x8] sm:$0xff]
      %v789 = vld [vmem:[%s3 + $0x10] sm:$0xff]
      %v790 = vld [vmem:[%s3 + $0x18] sm:$0xff]
      %v791 = vld [vmem:[%s3 + $0x20] sm:$0xff]
      %v792 = vld [vmem:[%s3 + $0x28] sm:$0xff]
      %v793 = vld [vmem:[%s3 + $0x30] sm:$0xff]
      %v794 = vld [vmem:[%s3 + $0x38] sm:$0xff]
      %v796 = vsel %vm734, %v786, 0
      %798 = vmatprep.subr.mxu0 0.0
      %799 = vmatpush1.msra.mxu0 %v787
      %800 = vmatprep.subr.mxu0 0.0
      %801 = vmatpush1.msra.mxu0 %v788
      %802 = vmatprep.subr.mxu0 0.0
      %803 = vmatpush1.msra.mxu0 %v789
      %804 = vmatprep.subr.mxu0 0.0
      %805 = vmatpush1.msra.mxu0 %v790
      %806 = vmatprep.subr.mxu0 0.0
      %807 = vmatpush1.msra.mxu0 %v791
      %808 = vmatprep.subr.mxu0 0.0
      %809 = vmatpush1.msra.mxu0 %v792
      %810 = vmatprep.subr.mxu0 0.0
      %811 = vmatpush1.msra.mxu0 %v793
      %812 = vmatprep.subr.mxu0 0.0
      %813 = vmatpush1.msra.mxu0 %v794
      %814 = vmatprep.subr.mxu0 0.0
      %815 = vmatpush1.msra.mxu0 0.0
      %816 = vmatprep.subr.mxu0 0.0
      %817 = vmatpush1.msra.mxu0 0.0
      %818 = vmatprep.subr.mxu0 0.0
      %819 = vmatpush1.msra.mxu0 0.0
      %820 = vmatprep.subr.mxu0 0.0
      %821 = vmatpush1.msra.mxu0 0.0
      %822 = vmatprep.subr.mxu0 0.0
      %823 = vmatpush1.msra.mxu0 0.0
      %824 = vmatprep.subr.mxu0 0.0
      %825 = vmatpush1.msra.mxu0 0.0
      %826 = vmatprep.subr.mxu0 0.0
      %827 = vmatpush1.msra.mxu0 0.0
      %828 = vmatprep.subr.mxu0 0.0
      %829 = vmatpush1.msra.mxu0 0.0
      %830 = vmatprep.subr.mxu0 0.0
      %831 = vmatpush1.msra.mxu0 0.0
      %832 = vmatprep.subr.mxu0 0.0
      %833 = vmatpush1.msra.mxu0 0.0
      %834 = vmatprep.subr.mxu0 0.0
      %835 = vmatpush1.msra.mxu0 0.0
      %836 = vmatprep.subr.mxu0 0.0
      %837 = vmatpush1.msra.mxu0 0.0
      %838 = vmatprep.subr.mxu0 0.0
      %839 = vmatpush1.msra.mxu0 0.0
      %840 = vmatprep.subr.mxu0 0.0
      %841 = vmatpush1.msra.mxu0 0.0
      %842 = vmatprep.subr.mxu0 0.0
      %843 = vmatpush1.msra.mxu0 0.0
      %844 = vmatprep.subr.mxu0 0.0
      %845 = vmatpush1.msra.mxu0 0.0
      %846 = vmatprep.subr.mxu0 0.0
      %847 = vmatpush1.msra.mxu0 0.0
      %848 = vmatprep.subr.mxu0 0.0
      %849 = vmatpush1.msra.mxu0 0.0
      %850 = vmatprep.subr.mxu0 0.0
      %851 = vmatpush1.msra.mxu0 0.0
      %852 = vmatprep.subr.mxu0 0.0
      %853 = vmatpush1.msra.mxu0 0.0
      %854 = vmatprep.subr.mxu0 0.0
      %855 = vmatpush1.msra.mxu0 0.0
      %856 = vmatprep.subr.mxu0 0.0
      %857 = vmatpush1.msra.mxu0 0.0
      %858 = vmatprep.subr.mxu0 0.0
      %859 = vmatpush1.msra.mxu0 0.0
      %860 = vmatprep.subr.mxu0 0.0
      %861 = vmatpush1.msra.mxu0 0.0
      %862 = vmatprep.mubr.f32.mxu0 0.0
      %863 = vmatmul.mubr.f32.gmra.mrb[0].mxu0 %v796
      %v864 = vpop.f32.mrb[0].mxu0
      %v865 = vadd.f32 0.0, %v864
      %v866 = vpop.f32.mrb[0].mxu0
      %867 = vdwg.mxu0
      %v868 = vmul.f32 %v865, 0.00390625
      %v869 = vld [vmem:[%s4] sm:$0xff]
      %v870 = vld [vmem:[%s4 + $0x8] sm:$0xff]
      %vm871 = vcmask 130048
      %v873 = vsel %vm871, %v868, 0
      %875 = vmatprep.subr.mxu0 0.0
      %876 = vmatpush1.msra.mxu0 %v869
      %877 = vmatprep.subr.mxu0 0.0
      %878 = vmatpush1.msra.mxu0 %v870
      %879 = vmatprep.subr.mxu0 0.0
      %880 = vmatpush1.msra.mxu0 0.0
      %881 = vmatprep.subr.mxu0 0.0
      %882 = vmatpush1.msra.mxu0 0.0
      %883 = vmatprep.subr.mxu0 0.0
      %884 = vmatpush1.msra.mxu0 0.0
      %885 = vmatprep.subr.mxu0 0.0
      %886 = vmatpush1.msra.mxu0 0.0
      %887 = vmatprep.subr.mxu0 0.0
      %888 = vmatpush1.msra.mxu0 0.0
      %889 = vmatprep.subr.mxu0 0.0
      %890 = vmatpush1.msra.mxu0 0.0
      %891 = vmatprep.subr.mxu0 0.0
      %892 = vmatpush1.msra.mxu0 0.0
      %893 = vmatprep.subr.mxu0 0.0
      %894 = vmatpush1.msra.mxu0 0.0
      %895 = vmatprep.subr.mxu0 0.0
      %896 = vmatpush1.msra.mxu0 0.0
      %897 = vmatprep.subr.mxu0 0.0
      %898 = vmatpush1.msra.mxu0 0.0
      %899 = vmatprep.subr.mxu0 0.0
      %900 = vmatpush1.msra.mxu0 0.0
      %901 = vmatprep.subr.mxu0 0.0
      %902 = vmatpush1.msra.mxu0 0.0
      %903 = vmatprep.subr.mxu0 0.0
      %904 = vmatpush1.msra.mxu0 0.0
      %905 = vmatprep.subr.mxu0 0.0
      %906 = vmatpush1.msra.mxu0 0.0
      %907 = vmatprep.subr.mxu0 0.0
      %908 = vmatpush1.msra.mxu0 0.0
      %909 = vmatprep.subr.mxu0 0.0
      %910 = vmatpush1.msra.mxu0 0.0
      %911 = vmatprep.subr.mxu0 0.0
      %912 = vmatpush1.msra.mxu0 0.0
      %913 = vmatprep.subr.mxu0 0.0
      %914 = vmatpush1.msra.mxu0 0.0
      %915 = vmatprep.subr.mxu0 0.0
      %916 = vmatpush1.msra.mxu0 0.0
      %917 = vmatprep.subr.mxu0 0.0
      %918 = vmatpush1.msra.mxu0 0.0
      %919 = vmatprep.subr.mxu0 0.0
      %920 = vmatpush1.msra.mxu0 0.0
      %921 = vmatprep.subr.mxu0 0.0
      %922 = vmatpush1.msra.mxu0 0.0
      %923 = vmatprep.subr.mxu0 0.0
      %924 = vmatpush1.msra.mxu0 0.0
      %925 = vmatprep.subr.mxu0 0.0
      %926 = vmatpush1.msra.mxu0 0.0
      %927 = vmatprep.subr.mxu0 0.0
      %928 = vmatpush1.msra.mxu0 0.0
      %929 = vmatprep.subr.mxu0 0.0
      %930 = vmatpush1.msra.mxu0 0.0
      %931 = vmatprep.subr.mxu0 0.0
      %932 = vmatpush1.msra.mxu0 0.0
      %933 = vmatprep.subr.mxu0 0.0
      %934 = vmatpush1.msra.mxu0 0.0
      %935 = vmatprep.subr.mxu0 0.0
      %936 = vmatpush1.msra.mxu0 0.0
      %937 = vmatprep.subr.mxu0 0.0
      %938 = vmatpush1.msra.mxu0 0.0
      %939 = vmatprep.mubr.f32.mxu0 0.0
      %940 = vmatmul.mubr.f32.gmra.mrb[0].mxu0 %v873
      %v941 = vpop.f32.mrb[0].mxu0
      %v942 = vadd.f32 0.0, %v941
      %v943 = vpop.f32.mrb[0].mxu0
      %944 = vdwg.mxu0
      %v945 = vmul.f32 %v942, %v942
      %v947 = vrot.slane %v945, 7
      %v949 = vsub.f32 %v942, %v947
      %v950 = vmax.f32 %v949, 0.0
      %v951 = vlaneseq
      %v952 = vshrl.u32 %v951, 7
      %v953 = vsub.s32 0, %v952
      %v954 = vrot.slane %v942, %v953
      %v955 = vsub.f32 %v726, %v954
      %v956 = vsub.f32 %v727, %v954
      %v957 = vsub.f32 %v728, %v954
      %v958 = vsub.f32 %v729, %v954
      %v959 = vsub.f32 %v730, %v954
      %v960 = vsub.f32 %v731, %v954
      %v961 = vsub.f32 %v732, %v954
      %v962 = vsub.f32 %v733, %v954
      %v963 = vadd.f32 %v950, 1e-05
      %v964 = vrsqrt.pop %v963
      %v965 = vlaneseq
      %v966 = vshrl.u32 %v965, 7
      %v967 = vsub.s32 1, %v966
      %v968 = vrot.slane %v964, %v967
      %v969 = vmul.f32 %v955, %v968
      %v970 = vmul.f32 %v956, %v968
      %v971 = vmul.f32 %v957, %v968
      %v972 = vmul.f32 %v958, %v968
      %v973 = vmul.f32 %v959, %v968
      %v974 = vmul.f32 %v960, %v968
      %v975 = vmul.f32 %v961, %v968
      %v976 = vmul.f32 %v962, %v968
      %v977 = vld [vmem:[%s5] sm:$0x1]
      %v979 = vlaneseq
      %v980 = vshrl.u32 %v979, 7
      %v981 = vsub.s32 0, %v980
      %v982 = vrot.slane %v977, %v981
      %v984 = vmul.f32 %v969, %v982
      %v985 = vmul.f32 %v970, %v982
      %v986 = vmul.f32 %v971, %v982
      %v987 = vmul.f32 %v972, %v982
      %v988 = vmul.f32 %v973, %v982
      %v989 = vmul.f32 %v974, %v982
      %v990 = vmul.f32 %v975, %v982
      %v991 = vmul.f32 %v976, %v982
      %v992 = vld [vmem:[%s6] sm:$0x1]
      %v994 = vlaneseq
      %v995 = vshrl.u32 %v994, 7
      %v996 = vsub.s32 0, %v995
      %v997 = vrot.slane %v992, %v996
      %v999 = vadd.f32 %v984, %v997
      %v1000 = vadd.f32 %v985, %v997
      %v1001 = vadd.f32 %v986, %v997
      %v1002 = vadd.f32 %v987, %v997
      %v1003 = vadd.f32 %v988, %v997
      %v1004 = vadd.f32 %v989, %v997
      %v1005 = vadd.f32 %v990, %v997
      %v1006 = vadd.f32 %v991, %v997
      %v1007 = vxor.u32 %v999, 2147483648
      %v1008 = vxor.u32 %v1000, 2147483648
      %v1009 = vxor.u32 %v1001, 2147483648
      %v1010 = vxor.u32 %v1002, 2147483648
      %v1011 = vxor.u32 %v1003, 2147483648
      %v1012 = vxor.u32 %v1004, 2147483648
      %v1013 = vxor.u32 %v1005, 2147483648
      %v1014 = vxor.u32 %v1006, 2147483648
      %v1015 = vmul.f32 %v1007, 1.442695
      %v1016 = vpow.pop %v1015
      %v1017 = vmul.f32 %v1008, 1.442695
      %v1018 = vpow.pop %v1017
      %v1019 = vmul.f32 %v1009, 1.442695
      %v1020 = vpow.pop %v1019
      %v1021 = vmul.f32 %v1010, 1.442695
      %v1022 = vpow.pop %v1021
      %v1023 = vmul.f32 %v1011, 1.442695
      %v1024 = vpow.pop %v1023
      %v1025 = vmul.f32 %v1012, 1.442695
      %v1026 = vpow.pop %v1025
      %v1027 = vmul.f32 %v1013, 1.442695
      %v1028 = vpow.pop %v1027
      %v1029 = vmul.f32 %v1014, 1.442695
      %v1030 = vpow.pop %v1029
      %v1031 = vadd.f32 %v1016, 1.0
      %v1032 = vadd.f32 %v1018, 1.0
      %v1033 = vadd.f32 %v1020, 1.0
      %v1034 = vadd.f32 %v1022, 1.0
      %v1035 = vadd.f32 %v1024, 1.0
      %v1036 = vadd.f32 %v1026, 1.0
      %v1037 = vadd.f32 %v1028, 1.0
      %v1038 = vadd.f32 %v1030, 1.0
      %v1039 = vrcp.pop %v1031
      %v1040 = vmul.f32 1.0, %v1039
      %v1041 = vrcp.pop %v1032
      %v1042 = vmul.f32 1.0, %v1041
      %v1043 = vrcp.pop %v1033
      %v1044 = vmul.f32 1.0, %v1043
      %v1045 = vrcp.pop %v1034
      %v1046 = vmul.f32 1.0, %v1045
      %v1047 = vrcp.pop %v1035
      %v1048 = vmul.f32 1.0, %v1047
      %v1049 = vrcp.pop %v1036
      %v1050 = vmul.f32 1.0, %v1049
      %v1051 = vrcp.pop %v1037
      %v1052 = vmul.f32 1.0, %v1051
      %v1053 = vrcp.pop %v1038
      %v1054 = vmul.f32 1.0, %v1053
      %v1055 = vmul.f32 %v999, %v1040
      %v1056 = vmul.f32 %v1000, %v1042
      %v1057 = vmul.f32 %v1001, %v1044
      %v1058 = vmul.f32 %v1002, %v1046
      %v1059 = vmul.f32 %v1003, %v1048
      %v1060 = vmul.f32 %v1004, %v1050
      %v1061 = vmul.f32 %v1005, %v1052
      %v1062 = vmul.f32 %v1006, %v1054
      %v1063 = vrot.slane %v1055, 7
      %v1064 = vrot.slane %v1056, 7
      %v1065 = vrot.slane %v1057, 7
      %v1066 = vrot.slane %v1058, 7
      %v1067 = vrot.slane %v1059, 7
      %v1068 = vrot.slane %v1060, 7
      %v1069 = vrot.slane %v1061, 7
      %v1070 = vrot.slane %v1062, 7
      %v1071 = vlaneseq
      %v1072 = vshrl.u32 %v1071, 7
      %vm1073 = vcmp.lt.s32.totalorder %v1072, 1
      %v1074 = vsel %vm1073, %v1069, %v1070
      %v1075 = vsel %vm1073, %v1068, %v1069
      %v1076 = vsel %vm1073, %v1067, %v1068
      %v1077 = vsel %vm1073, %v1066, %v1067
      %v1078 = vsel %vm1073, %v1065, %v1066
      %v1079 = vsel %vm1073, %v1064, %v1065
      %v1080 = vsel %vm1073, %v1063, %v1064
      %v1081 = vsel %vm1073, %v1070, %v1063
      %v1082 = vld [vmem:[%s2] sm:$0xff]
      %v1083 = vld [vmem:[%s2 + $0x8] sm:$0xff]
      %v1084 = vld [vmem:[%s2 + $0x10] sm:$0xff]
      %v1085 = vld [vmem:[%s2 + $0x18] sm:$0xff]
      %v1086 = vld [vmem:[%s2 + $0x20] sm:$0xff]
      %v1087 = vld [vmem:[%s2 + $0x28] sm:$0xff]
      %v1088 = vld [vmem:[%s2 + $0x30] sm:$0xff]
      %v1089 = vld [vmem:[%s2 + $0x38] sm:$0xff]
      %1091 = vset.pattern.permute.xlu0 0
      %1092 = vperm.xlu0 %1091, %v1082
      %v1093 = vpop.permute.xlu0 %1092
      %1096 = vset.pattern.permute.xlu0 0
      %1097 = vperm.xlu0 %1096, %v1083
      %v1098 = vpop.permute.xlu0 %1097
      %1101 = vset.pattern.permute.xlu0 0
      %1102 = vperm.xlu0 %1101, %v1084
      %v1103 = vpop.permute.xlu0 %1102
      %1106 = vset.pattern.permute.xlu0 0
      %1107 = vperm.xlu0 %1106, %v1085
      %v1108 = vpop.permute.xlu0 %1107
      %1111 = vset.pattern.permute.xlu0 0
      %1112 = vperm.xlu0 %1111, %v1086
      %v1113 = vpop.permute.xlu0 %1112
      %1116 = vset.pattern.permute.xlu0 0
      %1117 = vperm.xlu0 %1116, %v1087
      %v1118 = vpop.permute.xlu0 %1117
      %1121 = vset.pattern.permute.xlu0 0
      %1122 = vperm.xlu0 %1121, %v1088
      %v1123 = vpop.permute.xlu0 %1122
      %1126 = vset.pattern.permute.xlu0 0
      %1127 = vperm.xlu0 %1126, %v1089
      %v1128 = vpop.permute.xlu0 %1127
      %v1130 = vmul.f32 %v1074, %v1093
      %v1131 = vmul.f32 %v1081, %v1098
      %v1132 = vmul.f32 %v1080, %v1103
      %v1133 = vmul.f32 %v1079, %v1108
      %v1134 = vmul.f32 %v1078, %v1113
      %v1135 = vmul.f32 %v1077, %v1118
      %v1136 = vmul.f32 %v1076, %v1123
      %v1137 = vmul.f32 %v1075, %v1128
      %v1138 = vpack.c.bf16 %v1131, %v1130
      %v1139 = vpack.c.bf16 %v1133, %v1132
      %v1140 = vpack.c.bf16 %v1135, %v1134
      %v1141 = vpack.c.bf16 %v1137, %v1136
      %s1142 = scalar_lea.vmem %s2, 64
      %v1143 = vld [vmem:[%s1142] sm:$0xff]
      %v1144 = vld [vmem:[%s1142 + $0x8] sm:$0xff]
      %v1145 = vld [vmem:[%s1142 + $0x10] sm:$0xff]
      %v1146 = vld [vmem:[%s1142 + $0x18] sm:$0xff]
      %v1147 = vld [vmem:[%s1142 + $0x20] sm:$0xff]
      %v1148 = vld [vmem:[%s1142 + $0x28] sm:$0xff]
      %v1149 = vld [vmem:[%s1142 + $0x30] sm:$0xff]
      %v1150 = vld [vmem:[%s1142 + $0x38] sm:$0xff]
      %1152 = vset.pattern.permute.xlu0 0
      %1153 = vperm.xlu0 %1152, %v1143
      %v1154 = vpop.permute.xlu0 %1153
      %1157 = vset.pattern.permute.xlu0 0
      %1158 = vperm.xlu0 %1157, %v1144
      %v1159 = vpop.permute.xlu0 %1158
      %1162 = vset.pattern.permute.xlu0 0
      %1163 = vperm.xlu0 %1162, %v1145
      %v1164 = vpop.permute.xlu0 %1163
      %1167 = vset.pattern.permute.xlu0 0
      %1168 = vperm.xlu0 %1167, %v1146
      %v1169 = vpop.permute.xlu0 %1168
      %1172 = vset.pattern.permute.xlu0 0
      %1173 = vperm.xlu0 %1172, %v1147
      %v1174 = vpop.permute.xlu0 %1173
      %1177 = vset.pattern.permute.xlu0 0
      %1178 = vperm.xlu0 %1177, %v1148
      %v1179 = vpop.permute.xlu0 %1178
      %1182 = vset.pattern.permute.xlu0 0
      %1183 = vperm.xlu0 %1182, %v1149
      %v1184 = vpop.permute.xlu0 %1183
      %1187 = vset.pattern.permute.xlu0 0
      %1188 = vperm.xlu0 %1187, %v1150
      %v1189 = vpop.permute.xlu0 %1188
      %v1191 = vmul.f32 %v1062, %v1154
      %v1192 = vmul.f32 %v1055, %v1159
      %v1193 = vmul.f32 %v1056, %v1164
      %v1194 = vmul.f32 %v1057, %v1169
      %v1195 = vmul.f32 %v1058, %v1174
      %v1196 = vmul.f32 %v1059, %v1179
      %v1197 = vmul.f32 %v1060, %v1184
      %v1198 = vmul.f32 %v1061, %v1189
      %v1199 = vpack.c.bf16 %v1192, %v1191
      %v1200 = vpack.c.bf16 %v1194, %v1193
      %v1201 = vpack.c.bf16 %v1196, %v1195
      %v1202 = vpack.c.bf16 %v1198, %v1197
      %v1203 = vrot.slane %v1055, 1
      %v1204 = vrot.slane %v1056, 1
      %v1205 = vrot.slane %v1057, 1
      %v1206 = vrot.slane %v1058, 1
      %v1207 = vrot.slane %v1059, 1
      %v1208 = vrot.slane %v1060, 1
      %v1209 = vrot.slane %v1061, 1
      %v1210 = vrot.slane %v1062, 1
      %vm1211 = vcmp.lt.s32.totalorder %v1072, 7
      %v1212 = vsel %vm1211, %v1209, %v1210
      %v1213 = vsel %vm1211, %v1208, %v1209
      %v1214 = vsel %vm1211, %v1207, %v1208
      %v1215 = vsel %vm1211, %v1206, %v1207
      %v1216 = vsel %vm1211, %v1205, %v1206
      %v1217 = vsel %vm1211, %v1204, %v1205
      %v1218 = vsel %vm1211, %v1203, %v1204
      %v1219 = vsel %vm1211, %v1210, %v1203
      %s1220 = scalar_lea.vmem %s2, 128
      %v1221 = vld [vmem:[%s1220] sm:$0xff]
      %v1222 = vld [vmem:[%s1220 + $0x8] sm:$0xff]
      %v1223 = vld [vmem:[%s1220 + $0x10] sm:$0xff]
      %v1224 = vld [vmem:[%s1220 + $0x18] sm:$0xff]
      %v1225 = vld [vmem:[%s1220 + $0x20] sm:$0xff]
      %v1226 = vld [vmem:[%s1220 + $0x28] sm:$0xff]
      %v1227 = vld [vmem:[%s1220 + $0x30] sm:$0xff]
      %v1228 = vld [vmem:[%s1220 + $0x38] sm:$0xff]
      %1230 = vset.pattern.permute.xlu0 0
      %1231 = vperm.xlu0 %1230, %v1221
      %v1232 = vpop.permute.xlu0 %1231
      %1235 = vset.pattern.permute.xlu0 0
      %1236 = vperm.xlu0 %1235, %v1222
      %v1237 = vpop.permute.xlu0 %1236
      %1240 = vset.pattern.permute.xlu0 0
      %1241 = vperm.xlu0 %1240, %v1223
      %v1242 = vpop.permute.xlu0 %1241
      %1245 = vset.pattern.permute.xlu0 0
      %1246 = vperm.xlu0 %1245, %v1224
      %v1247 = vpop.permute.xlu0 %1246
      %1250 = vset.pattern.permute.xlu0 0
      %1251 = vperm.xlu0 %1250, %v1225
      %v1252 = vpop.permute.xlu0 %1251
      %1255 = vset.pattern.permute.xlu0 0
      %1256 = vperm.xlu0 %1255, %v1226
      %v1257 = vpop.permute.xlu0 %1256
      %1260 = vset.pattern.permute.xlu0 0
      %1261 = vperm.xlu0 %1260, %v1227
      %v1262 = vpop.permute.xlu0 %1261
      %1265 = vset.pattern.permute.xlu0 0
      %1266 = vperm.xlu0 %1265, %v1228
      %v1267 = vpop.permute.xlu0 %1266
      %v1269 = vmul.f32 %v1219, %v1232
      %v1270 = vmul.f32 %v1218, %v1237
      %v1271 = vmul.f32 %v1217, %v1242
      %v1272 = vmul.f32 %v1216, %v1247
      %v1273 = vmul.f32 %v1215, %v1252
      %v1274 = vmul.f32 %v1214, %v1257
      %v1275 = vmul.f32 %v1213, %v1262
      %v1276 = vmul.f32 %v1212, %v1267
      %v1277 = vpack.c.bf16 %v1270, %v1269
      %v1278 = vpack.c.bf16 %v1272, %v1271
      %v1279 = vpack.c.bf16 %v1274, %v1273
      %v1280 = vpack.c.bf16 %v1276, %v1275
      %s1281 = scalar_lea.vmem %s2, 192
      %v1282 = vld [vmem:[%s1281] sm:$0xff]
      %v1283 = vld [vmem:[%s1281 + $0x8] sm:$0xff]
      %v1284 = vld [vmem:[%s1281 + $0x10] sm:$0xff]
      %v1285 = vld [vmem:[%s1281 + $0x18] sm:$0xff]
      %v1286 = vld [vmem:[%s1281 + $0x20] sm:$0xff]
      %v1287 = vld [vmem:[%s1281 + $0x28] sm:$0xff]
      %v1288 = vld [vmem:[%s1281 + $0x30] sm:$0xff]
      %v1289 = vld [vmem:[%s1281 + $0x38] sm:$0xff]
      %1291 = vset.pattern.permute.xlu0 0
      %1292 = vperm.xlu0 %1291, %v1282
      %v1293 = vpop.permute.xlu0 %1292
      %1296 = vset.pattern.permute.xlu0 0
      %1297 = vperm.xlu0 %1296, %v1283
      %v1298 = vpop.permute.xlu0 %1297
      %1301 = vset.pattern.permute.xlu0 0
      %1302 = vperm.xlu0 %1301, %v1284
      %v1303 = vpop.permute.xlu0 %1302
      %1306 = vset.pattern.permute.xlu0 0
      %1307 = vperm.xlu0 %1306, %v1285
      %v1308 = vpop.permute.xlu0 %1307
      %1311 = vset.pattern.permute.xlu0 0
      %1312 = vperm.xlu0 %1311, %v1286
      %v1313 = vpop.permute.xlu0 %1312
      %1316 = vset.pattern.permute.xlu0 0
      %1317 = vperm.xlu0 %1316, %v1287
      %v1318 = vpop.permute.xlu0 %1317
      %1321 = vset.pattern.permute.xlu0 0
      %1322 = vperm.xlu0 %1321, %v1288
      %v1323 = vpop.permute.xlu0 %1322
      %1326 = vset.pattern.permute.xlu0 0
      %1327 = vperm.xlu0 %1326, %v1289
      %v1328 = vpop.permute.xlu0 %1327
      %v1330 = vmul.f32 %v1081, %v1293
      %v1331 = vmul.f32 %v1080, %v1298
      %v1332 = vmul.f32 %v1079, %v1303
      %v1333 = vmul.f32 %v1078, %v1308
      %v1334 = vmul.f32 %v1077, %v1313
      %v1335 = vmul.f32 %v1076, %v1318
      %v1336 = vmul.f32 %v1075, %v1323
      %v1337 = vmul.f32 %v1074, %v1328
      %v1338 = vpack.c.bf16 %v1331, %v1330
      %v1339 = vpack.c.bf16 %v1333, %v1332
      %v1340 = vpack.c.bf16 %v1335, %v1334
      %v1341 = vpack.c.bf16 %v1337, %v1336
      %v1342 = vpack.c.bf16 %v1056, %v1055
      %v1343 = vpack.c.bf16 %v1058, %v1057
      %v1344 = vpack.c.bf16 %v1060, %v1059
      %v1345 = vpack.c.bf16 %v1062, %v1061
      %s1346 = scalar_lea.vmem %s2, 320
      %v1347 = vld [vmem:[%s1346] sm:$0xff]
      %v1348 = vld [vmem:[%s1346 + $0x8] sm:$0xff]
      %v1349 = vld [vmem:[%s1346 + $0x10] sm:$0xff]
      %v1350 = vld [vmem:[%s1346 + $0x18] sm:$0xff]
      %v1351 = vld [vmem:[%s1346 + $0x20] sm:$0xff]
      %v1352 = vld [vmem:[%s1346 + $0x28] sm:$0xff]
      %v1353 = vld [vmem:[%s1346 + $0x30] sm:$0xff]
      %v1354 = vld [vmem:[%s1346 + $0x38] sm:$0xff]
      %1356 = vset.pattern.permute.xlu0 0
      %1357 = vperm.xlu0 %1356, %v1347
      %v1358 = vpop.permute.xlu0 %1357
      %1361 = vset.pattern.permute.xlu0 0
      %1362 = vperm.xlu0 %1361, %v1348
      %v1363 = vpop.permute.xlu0 %1362
      %1366 = vset.pattern.permute.xlu0 0
      %1367 = vperm.xlu0 %1366, %v1349
      %v1368 = vpop.permute.xlu0 %1367
      %1371 = vset.pattern.permute.xlu0 0
      %1372 = vperm.xlu0 %1371, %v1350
      %v1373 = vpop.permute.xlu0 %1372
      %1376 = vset.pattern.permute.xlu0 0
      %1377 = vperm.xlu0 %1376, %v1351
      %v1378 = vpop.permute.xlu0 %1377
      %1381 = vset.pattern.permute.xlu0 0
      %1382 = vperm.xlu0 %1381, %v1352
      %v1383 = vpop.permute.xlu0 %1382
      %1386 = vset.pattern.permute.xlu0 0
      %1387 = vperm.xlu0 %1386, %v1353
      %v1388 = vpop.permute.xlu0 %1387
      %1391 = vset.pattern.permute.xlu0 0
      %1392 = vperm.xlu0 %1391, %v1354
      %v1393 = vpop.permute.xlu0 %1392
      %v1395 = vmul.f32 %v1218, %v1358
      %v1396 = vmul.f32 %v1217, %v1363
      %v1397 = vmul.f32 %v1216, %v1368
      %v1398 = vmul.f32 %v1215, %v1373
      %v1399 = vmul.f32 %v1214, %v1378
      %v1400 = vmul.f32 %v1213, %v1383
      %v1401 = vmul.f32 %v1212, %v1388
      %v1402 = vmul.f32 %v1219, %v1393
      %v1403 = vpack.c.bf16 %v1396, %v1395
      %v1404 = vpack.c.bf16 %v1398, %v1397
      %v1405 = vpack.c.bf16 %v1400, %v1399
      %v1406 = vpack.c.bf16 %v1402, %v1401
      %s1407 = scalar_lea.vmem %s2, 384
      %v1408 = vld [vmem:[%s1407] sm:$0xff]
      %v1409 = vld [vmem:[%s1407 + $0x8] sm:$0xff]
      %v1410 = vld [vmem:[%s1407 + $0x10] sm:$0xff]
      %v1411 = vld [vmem:[%s1407 + $0x18] sm:$0xff]
      %v1412 = vld [vmem:[%s1407 + $0x20] sm:$0xff]
      %v1413 = vld [vmem:[%s1407 + $0x28] sm:$0xff]
      %v1414 = vld [vmem:[%s1407 + $0x30] sm:$0xff]
      %v1415 = vld [vmem:[%s1407 + $0x38] sm:$0xff]
      %1417 = vset.pattern.permute.xlu0 0
      %1418 = vperm.xlu0 %1417, %v1408
      %v1419 = vpop.permute.xlu0 %1418
      %1422 = vset.pattern.permute.xlu0 0
      %1423 = vperm.xlu0 %1422, %v1409
      %v1424 = vpop.permute.xlu0 %1423
      %1427 = vset.pattern.permute.xlu0 0
      %1428 = vperm.xlu0 %1427, %v1410
      %v1429 = vpop.permute.xlu0 %1428
      %1432 = vset.pattern.permute.xlu0 0
      %1433 = vperm.xlu0 %1432, %v1411
      %v1434 = vpop.permute.xlu0 %1433
      %1437 = vset.pattern.permute.xlu0 0
      %1438 = vperm.xlu0 %1437, %v1412
      %v1439 = vpop.permute.xlu0 %1438
      %1442 = vset.pattern.permute.xlu0 0
      %1443 = vperm.xlu0 %1442, %v1413
      %v1444 = vpop.permute.xlu0 %1443
      %1447 = vset.pattern.permute.xlu0 0
      %1448 = vperm.xlu0 %1447, %v1414
      %v1449 = vpop.permute.xlu0 %1448
      %1452 = vset.pattern.permute.xlu0 0
      %1453 = vperm.xlu0 %1452, %v1415
      %v1454 = vpop.permute.xlu0 %1453
      %v1456 = vmul.f32 %v1080, %v1419
      %v1457 = vmul.f32 %v1079, %v1424
      %v1458 = vmul.f32 %v1078, %v1429
      %v1459 = vmul.f32 %v1077, %v1434
      %v1460 = vmul.f32 %v1076, %v1439
      %v1461 = vmul.f32 %v1075, %v1444
      %v1462 = vmul.f32 %v1074, %v1449
      %v1463 = vmul.f32 %v1081, %v1454
      %v1464 = vpack.c.bf16 %v1457, %v1456
      %v1465 = vpack.c.bf16 %v1459, %v1458
      %v1466 = vpack.c.bf16 %v1461, %v1460
      %v1467 = vpack.c.bf16 %v1463, %v1462
      %s1468 = scalar_lea.vmem %s2, 448
      %v1469 = vld [vmem:[%s1468] sm:$0xff]
      %v1470 = vld [vmem:[%s1468 + $0x8] sm:$0xff]
      %v1471 = vld [vmem:[%s1468 + $0x10] sm:$0xff]
      %v1472 = vld [vmem:[%s1468 + $0x18] sm:$0xff]
      %v1473 = vld [vmem:[%s1468 + $0x20] sm:$0xff]
      %v1474 = vld [vmem:[%s1468 + $0x28] sm:$0xff]
      %v1475 = vld [vmem:[%s1468 + $0x30] sm:$0xff]
      %v1476 = vld [vmem:[%s1468 + $0x38] sm:$0xff]
      %1478 = vset.pattern.permute.xlu0 0
      %1479 = vperm.xlu0 %1478, %v1469
      %v1480 = vpop.permute.xlu0 %1479
      %1483 = vset.pattern.permute.xlu0 0
      %1484 = vperm.xlu0 %1483, %v1470
      %v1485 = vpop.permute.xlu0 %1484
      %1488 = vset.pattern.permute.xlu0 0
      %1489 = vperm.xlu0 %1488, %v1471
      %v1490 = vpop.permute.xlu0 %1489
      %1493 = vset.pattern.permute.xlu0 0
      %1494 = vperm.xlu0 %1493, %v1472
      %v1495 = vpop.permute.xlu0 %1494
      %1498 = vset.pattern.permute.xlu0 0
      %1499 = vperm.xlu0 %1498, %v1473
      %v1500 = vpop.permute.xlu0 %1499
      %1503 = vset.pattern.permute.xlu0 0
      %1504 = vperm.xlu0 %1503, %v1474
      %v1505 = vpop.permute.xlu0 %1504
      %1508 = vset.pattern.permute.xlu0 0
      %1509 = vperm.xlu0 %1508, %v1475
      %v1510 = vpop.permute.xlu0 %1509
      %1513 = vset.pattern.permute.xlu0 0
      %1514 = vperm.xlu0 %1513, %v1476
      %v1515 = vpop.permute.xlu0 %1514
      %v1517 = vmul.f32 %v1056, %v1480
      %v1518 = vmul.f32 %v1057, %v1485
      %v1519 = vmul.f32 %v1058, %v1490
      %v1520 = vmul.f32 %v1059, %v1495
      %v1521 = vmul.f32 %v1060, %v1500
      %v1522 = vmul.f32 %v1061, %v1505
      %v1523 = vmul.f32 %v1062, %v1510
      %v1524 = vmul.f32 %v1055, %v1515
      %v1525 = vpack.c.bf16 %v1518, %v1517
      %v1526 = vpack.c.bf16 %v1520, %v1519
      %v1527 = vpack.c.bf16 %v1522, %v1521
      %v1528 = vpack.c.bf16 %v1524, %v1523
      %s1529 = scalar_lea.vmem %s2, 512
      %v1530 = vld [vmem:[%s1529] sm:$0xff]
      %v1531 = vld [vmem:[%s1529 + $0x8] sm:$0xff]
      %v1532 = vld [vmem:[%s1529 + $0x10] sm:$0xff]
      %v1533 = vld [vmem:[%s1529 + $0x18] sm:$0xff]
      %v1534 = vld [vmem:[%s1529 + $0x20] sm:$0xff]
      %v1535 = vld [vmem:[%s1529 + $0x28] sm:$0xff]
      %v1536 = vld [vmem:[%s1529 + $0x30] sm:$0xff]
      %v1537 = vld [vmem:[%s1529 + $0x38] sm:$0xff]
      %1539 = vset.pattern.permute.xlu0 0
      %1540 = vperm.xlu0 %1539, %v1530
      %v1541 = vpop.permute.xlu0 %1540
      %1544 = vset.pattern.permute.xlu0 0
      %1545 = vperm.xlu0 %1544, %v1531
      %v1546 = vpop.permute.xlu0 %1545
      %1549 = vset.pattern.permute.xlu0 0
      %1550 = vperm.xlu0 %1549, %v1532
      %v1551 = vpop.permute.xlu0 %1550
      %1554 = vset.pattern.permute.xlu0 0
      %1555 = vperm.xlu0 %1554, %v1533
      %v1556 = vpop.permute.xlu0 %1555
      %1559 = vset.pattern.permute.xlu0 0
      %1560 = vperm.xlu0 %1559, %v1534
      %v1561 = vpop.permute.xlu0 %1560
      %1564 = vset.pattern.permute.xlu0 0
      %1565 = vperm.xlu0 %1564, %v1535
      %v1566 = vpop.permute.xlu0 %1565
      %1569 = vset.pattern.permute.xlu0 0
      %1570 = vperm.xlu0 %1569, %v1536
      %v1571 = vpop.permute.xlu0 %1570
      %1574 = vset.pattern.permute.xlu0 0
      %1575 = vperm.xlu0 %1574, %v1537
      %v1576 = vpop.permute.xlu0 %1575
      %v1578 = vmul.f32 %v1217, %v1541
      %v1579 = vmul.f32 %v1216, %v1546
      %v1580 = vmul.f32 %v1215, %v1551
      %v1581 = vmul.f32 %v1214, %v1556
      %v1582 = vmul.f32 %v1213, %v1561
      %v1583 = vmul.f32 %v1212, %v1566
      %v1584 = vmul.f32 %v1219, %v1571
      %v1585 = vmul.f32 %v1218, %v1576
      %v1586 = vpack.c.bf16 %v1579, %v1578
      %v1587 = vpack.c.bf16 %v1581, %v1580
      %v1588 = vpack.c.bf16 %v1583, %v1582
      %v1589 = vpack.c.bf16 %v1585, %v1584
      %1594 = vrot.lane.b32.xlu0 %v1199, 64
      %v1595 = vpop.permute.xlu0 %1594
      %1596 = vrot.lane.b32.xlu0 %v1200, 64
      %v1597 = vpop.permute.xlu0 %1596
      %1598 = vrot.lane.b32.xlu0 %v1201, 64
      %v1599 = vpop.permute.xlu0 %1598
      %1600 = vrot.lane.b32.xlu0 %v1202, 64
      %v1601 = vpop.permute.xlu0 %1600
      %1606 = vrot.lane.b32.xlu0 %v1338, 64
      %v1607 = vpop.permute.xlu0 %1606
      %1608 = vrot.lane.b32.xlu0 %v1339, 64
      %v1609 = vpop.permute.xlu0 %1608
      %1610 = vrot.lane.b32.xlu0 %v1340, 64
      %v1611 = vpop.permute.xlu0 %1610
      %1612 = vrot.lane.b32.xlu0 %v1341, 64
      %v1613 = vpop.permute.xlu0 %1612
      %1618 = vrot.lane.b32.xlu0 %v1403, 64
      %v1619 = vpop.permute.xlu0 %1618
      %1620 = vrot.lane.b32.xlu0 %v1404, 64
      %v1621 = vpop.permute.xlu0 %1620
      %1622 = vrot.lane.b32.xlu0 %v1405, 64
      %v1623 = vpop.permute.xlu0 %1622
      %1624 = vrot.lane.b32.xlu0 %v1406, 64
      %v1625 = vpop.permute.xlu0 %1624
      %1630 = vrot.lane.b32.xlu0 %v1525, 64
      %v1631 = vpop.permute.xlu0 %1630
      %1632 = vrot.lane.b32.xlu0 %v1526, 64
      %v1633 = vpop.permute.xlu0 %1632
      %1634 = vrot.lane.b32.xlu0 %v1527, 64
      %v1635 = vpop.permute.xlu0 %1634
      %1636 = vrot.lane.b32.xlu0 %v1528, 64
      %v1637 = vpop.permute.xlu0 %1636
      %v1640 = vsel %vm734, %v1138, %v1595
      %v1644 = vsel %vm734, %v1139, %v1597
      %v1648 = vsel %vm734, %v1140, %v1599
      %v1652 = vsel %vm734, %v1141, %v1601
      %v1656 = vsel %vm734, %v1277, %v1607
      %v1660 = vsel %vm734, %v1278, %v1609
      %v1664 = vsel %vm734, %v1279, %v1611
      %v1668 = vsel %vm734, %v1280, %v1613
      %v1672 = vsel %vm734, %v1342, %v1619
      %v1676 = vsel %vm734, %v1343, %v1621
      %v1680 = vsel %vm734, %v1344, %v1623
      %v1684 = vsel %vm734, %v1345, %v1625
      %v1688 = vsel %vm734, %v1464, %v1631
      %v1692 = vsel %vm734, %v1465, %v1633
      %v1696 = vsel %vm734, %v1466, %v1635
      %v1700 = vsel %vm734, %v1467, %v1637
      %v1702 = vld [vmem:[%s7] sm:$0xf]
      %v1703 = vld [vmem:[%s7 + $0x4] sm:$0xf]
      %v1704 = vld [vmem:[%s7 + $0x8] sm:$0xf]
      %v1705 = vld [vmem:[%s7 + $0xc] sm:$0xf]
      %v1706 = vld [vmem:[%s7 + $0x10] sm:$0xf]
      %v1707 = vld [vmem:[%s7 + $0x14] sm:$0xf]
      %v1708 = vld [vmem:[%s7 + $0x18] sm:$0xf]
      %v1709 = vld [vmem:[%s7 + $0x1c] sm:$0xf]
      %v1710 = vld [vmem:[%s7 + $0x20] sm:$0xf]
      %v1711 = vld [vmem:[%s7 + $0x24] sm:$0xf]
      %v1712 = vld [vmem:[%s7 + $0x28] sm:$0xf]
      %v1713 = vld [vmem:[%s7 + $0x2c] sm:$0xf]
      %v1714 = vld [vmem:[%s7 + $0x30] sm:$0xf]
      %v1715 = vld [vmem:[%s7 + $0x34] sm:$0xf]
      %v1716 = vld [vmem:[%s7 + $0x38] sm:$0xf]
      %v1717 = vld [vmem:[%s7 + $0x3c] sm:$0xf]
      %v1718 = vld [vmem:[%s7 + $0x40] sm:$0xf]
      %v1719 = vld [vmem:[%s7 + $0x44] sm:$0xf]
      %v1720 = vld [vmem:[%s7 + $0x48] sm:$0xf]
      %v1721 = vld [vmem:[%s7 + $0x4c] sm:$0xf]
      %v1722 = vld [vmem:[%s7 + $0x50] sm:$0xf]
      %v1723 = vld [vmem:[%s7 + $0x54] sm:$0xf]
      %v1724 = vld [vmem:[%s7 + $0x58] sm:$0xf]
      %v1725 = vld [vmem:[%s7 + $0x5c] sm:$0xf]
      %v1726 = vld [vmem:[%s7 + $0x60] sm:$0xf]
      %v1727 = vld [vmem:[%s7 + $0x64] sm:$0xf]
      %v1728 = vld [vmem:[%s7 + $0x68] sm:$0xf]
      %v1729 = vld [vmem:[%s7 + $0x6c] sm:$0xf]
      %v1730 = vld [vmem:[%s7 + $0x70] sm:$0xf]
      %v1731 = vld [vmem:[%s7 + $0x74] sm:$0xf]
      %v1732 = vld [vmem:[%s7 + $0x78] sm:$0xf]
      %v1733 = vld [vmem:[%s7 + $0x7c] sm:$0xf]
      %v1734 = vld [vmem:[%s7 + $0x80] sm:$0xf]
      %v1735 = vld [vmem:[%s7 + $0x84] sm:$0xf]
      %v1736 = vld [vmem:[%s7 + $0x88] sm:$0xf]
      %v1737 = vld [vmem:[%s7 + $0x8c] sm:$0xf]
      %v1738 = vld [vmem:[%s7 + $0x90] sm:$0xf]
      %v1739 = vld [vmem:[%s7 + $0x94] sm:$0xf]
      %v1740 = vld [vmem:[%s7 + $0x98] sm:$0xf]
      %v1741 = vld [vmem:[%s7 + $0x9c] sm:$0xf]
      %v1742 = vld [vmem:[%s7 + $0xa0] sm:$0xf]
      %v1743 = vld [vmem:[%s7 + $0xa4] sm:$0xf]
      %v1744 = vld [vmem:[%s7 + $0xa8] sm:$0xf]
      %v1745 = vld [vmem:[%s7 + $0xac] sm:$0xf]
      %v1746 = vld [vmem:[%s7 + $0xb0] sm:$0xf]
      %v1747 = vld [vmem:[%s7 + $0xb4] sm:$0xf]
      %v1748 = vld [vmem:[%s7 + $0xb8] sm:$0xf]
      %v1749 = vld [vmem:[%s7 + $0xbc] sm:$0xf]
      %v1750 = vld [vmem:[%s7 + $0xc0] sm:$0xf]
      %v1751 = vld [vmem:[%s7 + $0xc4] sm:$0xf]
      %v1752 = vld [vmem:[%s7 + $0xc8] sm:$0xf]
      %v1753 = vld [vmem:[%s7 + $0xcc] sm:$0xf]
      %v1754 = vld [vmem:[%s7 + $0xd0] sm:$0xf]
      %v1755 = vld [vmem:[%s7 + $0xd4] sm:$0xf]
      %v1756 = vld [vmem:[%s7 + $0xd8] sm:$0xf]
      %v1757 = vld [vmem:[%s7 + $0xdc] sm:$0xf]
      %v1758 = vld [vmem:[%s7 + $0xe0] sm:$0xf]
      %v1759 = vld [vmem:[%s7 + $0xe4] sm:$0xf]
      %v1760 = vld [vmem:[%s7 + $0xe8] sm:$0xf]
      %v1761 = vld [vmem:[%s7 + $0xec] sm:$0xf]
      %v1762 = vld [vmem:[%s7 + $0xf0] sm:$0xf]
      %v1763 = vld [vmem:[%s7 + $0xf4] sm:$0xf]
      %v1764 = vld [vmem:[%s7 + $0xf8] sm:$0xf]
      %v1765 = vld [vmem:[%s7 + $0xfc] sm:$0xf]
      %v1766 = vld [vmem:[%s7 + $0x100] sm:$0xf]
      %v1767 = vld [vmem:[%s7 + $0x104] sm:$0xf]
      %v1768 = vld [vmem:[%s7 + $0x108] sm:$0xf]
      %v1769 = vld [vmem:[%s7 + $0x10c] sm:$0xf]
      %v1770 = vld [vmem:[%s7 + $0x110] sm:$0xf]
      %v1771 = vld [vmem:[%s7 + $0x114] sm:$0xf]
      %v1772 = vld [vmem:[%s7 + $0x118] sm:$0xf]
      %v1773 = vld [vmem:[%s7 + $0x11c] sm:$0xf]
      %v1846 = vunpack.c.l.b16 %v1702
      %v1847 = vunpack.c.l.b16 %v1703
      %v1848 = vunpack.c.l.b16 %v1704
      %v1849 = vunpack.c.l.b16 %v1705
      %v1850 = vunpack.c.l.b16 %v1706
      %v1851 = vunpack.c.l.b16 %v1707
      %v1852 = vunpack.c.l.b16 %v1708
      %v1853 = vunpack.c.l.b16 %v1709
      %v1854 = vunpack.c.l.b16 %v1710
      %v1855 = vunpack.c.l.b16 %v1711
      %v1856 = vunpack.c.l.b16 %v1712
      %v1857 = vunpack.c.l.b16 %v1713
      %v1858 = vunpack.c.l.b16 %v1714
      %v1859 = vunpack.c.l.b16 %v1715
      %v1860 = vunpack.c.l.b16 %v1716
      %v1861 = vunpack.c.l.b16 %v1717
      %v1862 = vunpack.c.l.b16 %v1718
      %v1863 = vunpack.c.l.b16 %v1719
      %v1864 = vunpack.c.l.b16 %v1720
      %v1865 = vunpack.c.l.b16 %v1721
      %v1866 = vunpack.c.l.b16 %v1722
      %v1867 = vunpack.c.l.b16 %v1723
      %v1868 = vunpack.c.l.b16 %v1724
      %v1869 = vunpack.c.l.b16 %v1725
      %v1870 = vunpack.c.l.b16 %v1726
      %v1871 = vunpack.c.l.b16 %v1727
      %v1872 = vunpack.c.l.b16 %v1728
      %v1873 = vunpack.c.l.b16 %v1729
      %v1874 = vunpack.c.l.b16 %v1730
      %v1875 = vunpack.c.l.b16 %v1731
      %v1876 = vunpack.c.l.b16 %v1732
      %v1877 = vunpack.c.l.b16 %v1733
      %v1878 = vunpack.c.l.b16 %v1734
      %v1879 = vunpack.c.l.b16 %v1735
      %v1880 = vunpack.c.l.b16 %v1736
      %v1881 = vunpack.c.l.b16 %v1737
      %v1882 = vunpack.c.l.b16 %v1738
      %v1883 = vunpack.c.l.b16 %v1739
      %v1884 = vunpack.c.l.b16 %v1740
      %v1885 = vunpack.c.l.b16 %v1741
      %v1886 = vunpack.c.l.b16 %v1742
      %v1887 = vunpack.c.l.b16 %v1743
      %v1888 = vunpack.c.l.b16 %v1744
      %v1889 = vunpack.c.l.b16 %v1745
      %v1890 = vunpack.c.l.b16 %v1746
      %v1891 = vunpack.c.l.b16 %v1747
      %v1892 = vunpack.c.l.b16 %v1748
      %v1893 = vunpack.c.l.b16 %v1749
      %v1894 = vunpack.c.l.b16 %v1750
      %v1895 = vunpack.c.l.b16 %v1751
      %v1896 = vunpack.c.l.b16 %v1752
      %v1897 = vunpack.c.l.b16 %v1753
      %v1898 = vunpack.c.l.b16 %v1754
      %v1899 = vunpack.c.l.b16 %v1755
      %v1900 = vunpack.c.l.b16 %v1756
      %v1901 = vunpack.c.l.b16 %v1757
      %v1902 = vunpack.c.l.b16 %v1758
      %v1903 = vunpack.c.l.b16 %v1759
      %v1904 = vunpack.c.l.b16 %v1760
      %v1905 = vunpack.c.l.b16 %v1761
      %v1906 = vunpack.c.l.b16 %v1762
      %v1907 = vunpack.c.l.b16 %v1763
      %v1908 = vunpack.c.l.b16 %v1764
      %v1909 = vunpack.c.l.b16 %v1765
      %v1910 = vunpack.c.l.b16 %v1766
      %v1911 = vunpack.c.l.b16 %v1767
      %v1912 = vunpack.c.l.b16 %v1768
      %v1913 = vunpack.c.l.b16 %v1769
      %v1914 = vunpack.c.l.b16 %v1770
      %v1915 = vunpack.c.l.b16 %v1771
      %v1916 = vunpack.c.l.b16 %v1772
      %v1917 = vunpack.c.l.b16 %v1773
      %v1918 = vpack.c.b16 %v1847, %v1846
      %v1919 = vpack.c.b16 %v1849, %v1848
      %v1920 = vpack.c.b16 %v1851, %v1850
      %v1921 = vpack.c.b16 %v1853, %v1852
      %v1922 = vpack.c.b16 %v1855, %v1854
      %v1923 = vpack.c.b16 %v1857, %v1856
      %v1924 = vpack.c.b16 %v1859, %v1858
      %v1925 = vpack.c.b16 %v1861, %v1860
      %v1926 = vpack.c.b16 %v1863, %v1862
      %v1927 = vpack.c.b16 %v1865, %v1864
      %v1928 = vpack.c.b16 %v1867, %v1866
      %v1929 = vpack.c.b16 %v1869, %v1868
      %v1930 = vpack.c.b16 %v1871, %v1870
      %v1931 = vpack.c.b16 %v1873, %v1872
      %v1932 = vpack.c.b16 %v1875, %v1874
      %v1933 = vpack.c.b16 %v1877, %v1876
      %v1934 = vpack.c.b16 %v1879, %v1878
      %v1935 = vpack.c.b16 %v1881, %v1880
      %v1936 = vpack.c.b16 %v1883, %v1882
      %v1937 = vpack.c.b16 %v1885, %v1884
      %v1938 = vpack.c.b16 %v1887, %v1886
      %v1939 = vpack.c.b16 %v1889, %v1888
      %v1940 = vpack.c.b16 %v1891, %v1890
      %v1941 = vpack.c.b16 %v1893, %v1892
      %v1942 = vpack.c.b16 %v1895, %v1894
      %v1943 = vpack.c.b16 %v1897, %v1896
      %v1944 = vpack.c.b16 %v1899, %v1898
      %v1945 = vpack.c.b16 %v1901, %v1900
      %v1946 = vpack.c.b16 %v1903, %v1902
      %v1947 = vpack.c.b16 %v1905, %v1904
      %v1948 = vpack.c.b16 %v1907, %v1906
      %v1949 = vpack.c.b16 %v1909, %v1908
      %v1950 = vpack.c.b16 %v1911, %v1910
      %v1951 = vpack.c.b16 %v1913, %v1912
      %v1952 = vpack.c.b16 %v1915, %v1914
      %v1953 = vpack.c.b16 %v1917, %v1916
      %v1991 = vsel %vm734, %v1586, 0
      %v1994 = vsel %vm734, %v1587, 0
      %v1997 = vsel %vm734, %v1588, 0
      %v2000 = vsel %vm734, %v1589, 0
      %2002 = vmatprep.subr.bf16.mxu0 0
      %2003 = vmatpush1.bf16.msra.mxu0 %v1918
      %2004 = vmatprep.subr.bf16.mxu0 0
      %2005 = vmatpush1.bf16.msra.mxu0 %v1919
      %2006 = vmatprep.subr.bf16.mxu0 0
      %2007 = vmatpush1.bf16.msra.mxu0 %v1920
      %2008 = vmatprep.subr.bf16.mxu0 0
      %2009 = vmatpush1.bf16.msra.mxu0 %v1921
      %2010 = vmatprep.subr.bf16.mxu0 0
      %2011 = vmatpush1.bf16.msra.mxu0 %v1922
      %2012 = vmatprep.subr.bf16.mxu0 0
      %2013 = vmatpush1.bf16.msra.mxu0 %v1923
      %2014 = vmatprep.subr.bf16.mxu0 0
      %2015 = vmatpush1.bf16.msra.mxu0 %v1924
      %2016 = vmatprep.subr.bf16.mxu0 0
      %2017 = vmatpush1.bf16.msra.mxu0 %v1925
      %2018 = vmatprep.subr.bf16.mxu0 0
      %2019 = vmatpush1.bf16.msra.mxu0 %v1926
      %2020 = vmatprep.subr.bf16.mxu0 0
      %2021 = vmatpush1.bf16.msra.mxu0 %v1927
      %2022 = vmatprep.subr.bf16.mxu0 0
      %2023 = vmatpush1.bf16.msra.mxu0 %v1928
      %2024 = vmatprep.subr.bf16.mxu0 0
      %2025 = vmatpush1.bf16.msra.mxu0 %v1929
      %2026 = vmatprep.subr.bf16.mxu0 0
      %2027 = vmatpush1.bf16.msra.mxu0 %v1930
      %2028 = vmatprep.subr.bf16.mxu0 0
      %2029 = vmatpush1.bf16.msra.mxu0 %v1931
      %2030 = vmatprep.subr.bf16.mxu0 0
      %2031 = vmatpush1.bf16.msra.mxu0 %v1932
      %2032 = vmatprep.subr.bf16.mxu0 0
      %2033 = vmatpush1.bf16.msra.mxu0 %v1933
      %2034 = vmatprep.mubr.bf16.mxu0 %v1656
      %2035 = vmatmul.mubr.bf16.gmra.mrb[0].mxu0 %v1640
      %v2036 = vpop.f32.mrb[0].mxu0
      %v2037 = vadd.f32 0.0, %v2036
      %v2038 = vpop.f32.mrb[0].mxu0
      %v2039 = vpop.f32.mrb[0].mxu0
      %v2040 = vadd.f32 0.0, %v2039
      %v2041 = vpop.f32.mrb[0].mxu0
      %2042 = vmatprep.mubr.bf16.mxu0 %v1660
      %2043 = vmatmul.mubr.bf16.gmra.mrb[0].mxu0 %v1644
      %v2044 = vpop.f32.mrb[0].mxu0
      %v2045 = vadd.f32 0.0, %v2044
      %v2046 = vpop.f32.mrb[0].mxu0
      %v2047 = vpop.f32.mrb[0].mxu0
      %v2048 = vadd.f32 0.0, %v2047
      %v2049 = vpop.f32.mrb[0].mxu0
      %2050 = vmatprep.mubr.bf16.mxu0 %v1664
      %2051 = vmatmul.mubr.bf16.gmra.mrb[0].mxu0 %v1648
      %v2052 = vpop.f32.mrb[0].mxu0
      %v2053 = vadd.f32 0.0, %v2052
      %v2054 = vpop.f32.mrb[0].mxu0
      %v2055 = vpop.f32.mrb[0].mxu0
      %v2056 = vadd.f32 0.0, %v2055
      %v2057 = vpop.f32.mrb[0].mxu0
      %2058 = vmatprep.mubr.bf16.mxu0 %v1668
      %2059 = vmatmul.mubr.bf16.gmra.mrb[0].mxu0 %v1652
      %v2060 = vpop.f32.mrb[0].mxu0
      %v2061 = vadd.f32 0.0, %v2060
      %v2062 = vpop.f32.mrb[0].mxu0
      %v2063 = vpop.f32.mrb[0].mxu0
      %v2064 = vadd.f32 0.0, %v2063
      %v2065 = vpop.f32.mrb[0].mxu0
      %2066 = vdwg.mxu0
      %2067 = vmatprep.subr.bf16.mxu0 0
      %2068 = vmatpush1.bf16.msra.mxu0 %v1934
      %2069 = vmatprep.subr.bf16.mxu0 0
      %2070 = vmatpush1.bf16.msra.mxu0 %v1935
      %2071 = vmatprep.subr.bf16.mxu0 0
      %2072 = vmatpush1.bf16.msra.mxu0 %v1936
      %2073 = vmatprep.subr.bf16.mxu0 0
      %2074 = vmatpush1.bf16.msra.mxu0 %v1937
      %2075 = vmatprep.subr.bf16.mxu0 0
      %2076 = vmatpush1.bf16.msra.mxu0 %v1938
      %2077 = vmatprep.subr.bf16.mxu0 0
      %2078 = vmatpush1.bf16.msra.mxu0 %v1939
      %2079 = vmatprep.subr.bf16.mxu0 0
      %2080 = vmatpush1.bf16.msra.mxu0 %v1940
      %2081 = vmatprep.subr.bf16.mxu0 0
      %2082 = vmatpush1.bf16.msra.mxu0 %v1941
      %2083 = vmatprep.subr.bf16.mxu0 0
      %2084 = vmatpush1.bf16.msra.mxu0 %v1942
      %2085 = vmatprep.subr.bf16.mxu0 0
      %2086 = vmatpush1.bf16.msra.mxu0 %v1943
      %2087 = vmatprep.subr.bf16.mxu0 0
      %2088 = vmatpush1.bf16.msra.mxu0 %v1944
      %2089 = vmatprep.subr.bf16.mxu0 0
      %2090 = vmatpush1.bf16.msra.mxu0 %v1945
      %2091 = vmatprep.subr.bf16.mxu0 0
      %2092 = vmatpush1.bf16.msra.mxu0 %v1946
      %2093 = vmatprep.subr.bf16.mxu0 0
      %2094 = vmatpush1.bf16.msra.mxu0 %v1947
      %2095 = vmatprep.subr.bf16.mxu0 0
      %2096 = vmatpush1.bf16.msra.mxu0 %v1948
      %2097 = vmatprep.subr.bf16.mxu0 0
      %2098 = vmatpush1.bf16.msra.mxu0 %v1949
      %2099 = vmatprep.mubr.bf16.mxu0 %v1688
      %2100 = vmatmul.mubr.bf16.gmra.mrb[0].mxu0 %v1672
      %v2101 = vpop.f32.mrb[0].mxu0
      %v2102 = vadd.f32 %v2037, %v2101
      %v2103 = vpop.f32.mrb[0].mxu0
      %v2104 = vpop.f32.mrb[0].mxu0
      %v2105 = vadd.f32 %v2040, %v2104
      %v2106 = vpop.f32.mrb[0].mxu0
      %2107 = vmatprep.mubr.bf16.mxu0 %v1692
      %2108 = vmatmul.mubr.bf16.gmra.mrb[0].mxu0 %v1676
      %v2109 = vpop.f32.mrb[0].mxu0
      %v2110 = vadd.f32 %v2045, %v2109
      %v2111 = vpop.f32.mrb[0].mxu0
      %v2112 = vpop.f32.mrb[0].mxu0
      %v2113 = vadd.f32 %v2048, %v2112
      %v2114 = vpop.f32.mrb[0].mxu0
      %2115 = vmatprep.mubr.bf16.mxu0 %v1696
      %2116 = vmatmul.mubr.bf16.gmra.mrb[0].mxu0 %v1680
      %v2117 = vpop.f32.mrb[0].mxu0
      %v2118 = vadd.f32 %v2053, %v2117
      %v2119 = vpop.f32.mrb[0].mxu0
      %v2120 = vpop.f32.mrb[0].mxu0
      %v2121 = vadd.f32 %v2056, %v2120
      %v2122 = vpop.f32.mrb[0].mxu0
      %2123 = vmatprep.mubr.bf16.mxu0 %v1700
      %2124 = vmatmul.mubr.bf16.gmra.mrb[0].mxu0 %v1684
      %v2125 = vpop.f32.mrb[0].mxu0
      %v2126 = vadd.f32 %v2061, %v2125
      %v2127 = vpop.f32.mrb[0].mxu0
      %v2128 = vpop.f32.mrb[0].mxu0
      %v2129 = vadd.f32 %v2064, %v2128
      %v2130 = vpop.f32.mrb[0].mxu0
      %2131 = vdwg.mxu0
      %2132 = vmatprep.subr.bf16.mxu0 0
      %2133 = vmatpush1.bf16.msra.mxu0 %v1950
      %2134 = vmatprep.subr.bf16.mxu0 0
      %2135 = vmatpush1.bf16.msra.mxu0 %v1951
      %2136 = vmatprep.subr.bf16.mxu0 0
      %2137 = vmatpush1.bf16.msra.mxu0 %v1952
      %2138 = vmatprep.subr.bf16.mxu0 0
      %2139 = vmatpush1.bf16.msra.mxu0 %v1953
      %2140 = vmatprep.subr.bf16.mxu0 0
      %2141 = vmatpush1.bf16.msra.mxu0 0
      %2142 = vmatprep.subr.bf16.mxu0 0
      %2143 = vmatpush1.bf16.msra.mxu0 0
      %2144 = vmatprep.subr.bf16.mxu0 0
      %2145 = vmatpush1.bf16.msra.mxu0 0
      %2146 = vmatprep.subr.bf16.mxu0 0
      %2147 = vmatpush1.bf16.msra.mxu0 0
      %2148 = vmatprep.subr.bf16.mxu0 0
      %2149 = vmatpush1.bf16.msra.mxu0 0
      %2150 = vmatprep.subr.bf16.mxu0 0
      %2151 = vmatpush1.bf16.msra.mxu0 0
      %2152 = vmatprep.subr.bf16.mxu0 0
      %2153 = vmatpush1.bf16.msra.mxu0 0
      %2154 = vmatprep.subr.bf16.mxu0 0
      %2155 = vmatpush1.bf16.msra.mxu0 0
      %2156 = vmatprep.subr.bf16.mxu0 0
      %2157 = vmatpush1.bf16.msra.mxu0 0
      %2158 = vmatprep.subr.bf16.mxu0 0
      %2159 = vmatpush1.bf16.msra.mxu0 0
      %2160 = vmatprep.subr.bf16.mxu0 0
      %2161 = vmatpush1.bf16.msra.mxu0 0
      %2162 = vmatprep.subr.bf16.mxu0 0
      %2163 = vmatpush1.bf16.msra.mxu0 0
      %2164 = vmatprep.mubr.bf16.mxu0 0
      %2165 = vmatmul.mubr.bf16.gmra.mrb[0].mxu0 %v1991
      %v2166 = vpop.f32.mrb[0].mxu0
      %v2167 = vadd.f32 %v2102, %v2166
      %v2168 = vpop.f32.mrb[0].mxu0
      %v2169 = vpop.f32.mrb[0].mxu0
      %v2170 = vadd.f32 %v2105, %v2169
      %v2171 = vpop.f32.mrb[0].mxu0
      %2172 = vmatprep.mubr.bf16.mxu0 0
      %2173 = vmatmul.mubr.bf16.gmra.mrb[0].mxu0 %v1994
      %v2174 = vpop.f32.mrb[0].mxu0
      %v2175 = vadd.f32 %v2110, %v2174
      %v2176 = vpop.f32.mrb[0].mxu0
      %v2177 = vpop.f32.mrb[0].mxu0
      %v2178 = vadd.f32 %v2113, %v2177
      %v2179 = vpop.f32.mrb[0].mxu0
      %2180 = vmatprep.mubr.bf16.mxu0 0
      %2181 = vmatmul.mubr.bf16.gmra.mrb[0].mxu0 %v1997
      %v2182 = vpop.f32.mrb[0].mxu0
      %v2183 = vadd.f32 %v2118, %v2182
      %v2184 = vpop.f32.mrb[0].mxu0
      %v2185 = vpop.f32.mrb[0].mxu0
      %v2186 = vadd.f32 %v2121, %v2185
      %v2187 = vpop.f32.mrb[0].mxu0
      %2188 = vmatprep.mubr.bf16.mxu0 0
      %2189 = vmatmul.mubr.bf16.gmra.mrb[0].mxu0 %v2000
      %v2190 = vpop.f32.mrb[0].mxu0
      %v2191 = vadd.f32 %v2126, %v2190
      %v2192 = vpop.f32.mrb[0].mxu0
      %v2193 = vpop.f32.mrb[0].mxu0
      %v2194 = vadd.f32 %v2129, %v2193
      %v2195 = vpop.f32.mrb[0].mxu0
      %2196 = vdwg.mxu0
      %v2197 = vld [vmem:[%s8] sm:$0x1]
      %v2199 = vlaneseq
      %v2200 = vshrl.u32 %v2199, 7
      %v2201 = vsub.s32 0, %v2200
      %v2202 = vrot.slane %v2197, %v2201
      %v2204 = vadd.f32 %v2167, %v2202
      %v2205 = vadd.f32 %v2170, %v2202
      %v2206 = vadd.f32 %v2175, %v2202
      %v2207 = vadd.f32 %v2178, %v2202
      %v2208 = vadd.f32 %v2183, %v2202
      %v2209 = vadd.f32 %v2186, %v2202
      %v2210 = vadd.f32 %v2191, %v2202
      %v2211 = vadd.f32 %v2194, %v2202
      %v2212 = vld [vmem:[%s719] sm:$0x1]
      %v2213 = vxor.u32 %v2212, 2147483648
      %v2214 = vmul.f32 %v2213, 1.442695
      %v2215 = vpow.pop %v2214
      %v2216 = vadd.f32 %v2215, 1.0
      %v2217 = vrcp.pop %v2216
      %v2218 = vmul.f32 1.0, %v2217
      %v2219 = vmul.f32 %v2212, %v2218
      %v2220 = vpack.c.bf16 %v2219, %v2219
      %v2221 = vld [vmem:[%s9] sm:$0xf]
      %v2222 = vld [vmem:[%s9 + $0x4] sm:$0xf]
      %v2223 = vld [vmem:[%s9 + $0x8] sm:$0xf]
      %v2224 = vld [vmem:[%s9 + $0xc] sm:$0xf]
      %v2225 = vld [vmem:[%s10] sm:$0x1]
      %v2230 = vunpack.c.l.b16 %v2221
      %v2231 = vunpack.c.l.b16 %v2222
      %v2232 = vunpack.c.l.b16 %v2223
      %v2233 = vunpack.c.l.b16 %v2224
      %v2234 = vpack.c.b16 %v2231, %v2230
      %v2235 = vpack.c.b16 %v2233, %v2232
      %vm2238 = vcmask 261120
      %v2240 = vsel %vm2238, %v2220, 0
      %2242 = vmatprep.subr.bf16.mxu0 0
      %2243 = vmatpush1.bf16.msra.mxu0 %v2234
      %2244 = vmatprep.subr.bf16.mxu0 0
      %2245 = vmatpush1.bf16.msra.mxu0 %v2235
      %2246 = vmatprep.subr.bf16.mxu0 0
      %2247 = vmatpush1.bf16.msra.mxu0 0
      %2248 = vmatprep.subr.bf16.mxu0 0
      %2249 = vmatpush1.bf16.msra.mxu0 0
      %2250 = vmatprep.subr.bf16.mxu0 0
      %2251 = vmatpush1.bf16.msra.mxu0 0
      %2252 = vmatprep.subr.bf16.mxu0 0
      %2253 = vmatpush1.bf16.msra.mxu0 0
      %2254 = vmatprep.subr.bf16.mxu0 0
      %2255 = vmatpush1.bf16.msra.mxu0 0
      %2256 = vmatprep.subr.bf16.mxu0 0
      %2257 = vmatpush1.bf16.msra.mxu0 0
      %2258 = vmatprep.subr.bf16.mxu0 0
      %2259 = vmatpush1.bf16.msra.mxu0 0
      %2260 = vmatprep.subr.bf16.mxu0 0
      %2261 = vmatpush1.bf16.msra.mxu0 0
      %2262 = vmatprep.subr.bf16.mxu0 0
      %2263 = vmatpush1.bf16.msra.mxu0 0
      %2264 = vmatprep.subr.bf16.mxu0 0
      %2265 = vmatpush1.bf16.msra.mxu0 0
      %2266 = vmatprep.subr.bf16.mxu0 0
      %2267 = vmatpush1.bf16.msra.mxu0 0
      %2268 = vmatprep.subr.bf16.mxu0 0
      %2269 = vmatpush1.bf16.msra.mxu0 0
      %2270 = vmatprep.subr.bf16.mxu0 0
      %2271 = vmatpush1.bf16.msra.mxu0 0
      %2272 = vmatprep.subr.bf16.mxu0 0
      %2273 = vmatpush1.bf16.msra.mxu0 0
      %2274 = vmatprep.mubr.bf16.mxu0 0
      %2275 = vmatmul.mubr.bf16.gmra.mrb[0].mxu0 %v2240
      %v2276 = vpop.f32.mrb[0].mxu0
      %v2277 = vadd.f32 %v2225, %v2276
      %v2278 = vpop.f32.mrb[0].mxu0
      %v2279 = vpop.f32.mrb[0].mxu0
      %v2280 = vpop.f32.mrb[0].mxu0
      %2281 = vdwg.mxu0
      %v2282 = vlaneseq
      %v2283 = vshrl.u32 %v2282, 7
      %v2284 = vsub.s32 0, %v2283
      %v2285 = vrot.slane %v2277, %v2284
      %v2286 = vadd.f32 %v2204, %v2285
      %v2287 = vadd.f32 %v2205, %v2285
      %v2288 = vadd.f32 %v2206, %v2285
      %v2289 = vadd.f32 %v2207, %v2285
      %v2290 = vadd.f32 %v2208, %v2285
      %v2291 = vadd.f32 %v2209, %v2285
      %v2292 = vadd.f32 %v2210, %v2285
      %v2293 = vadd.f32 %v2211, %v2285
      %v2294 = vsel %vm2238, %v2286, 0.0
      %v2295 = vsel %vm2238, %v2287, 0.0
      %v2296 = vadd.f32 %v2294, %v2295
      %v2297 = vsel %vm2238, %v2288, 0.0
      %v2298 = vadd.f32 %v2296, %v2297
      %v2299 = vsel %vm2238, %v2289, 0.0
      %v2300 = vadd.f32 %v2298, %v2299
      %v2301 = vsel %vm2238, %v2290, 0.0
      %v2302 = vadd.f32 %v2300, %v2301
      %v2303 = vsel %vm2238, %v2291, 0.0
      %v2304 = vadd.f32 %v2302, %v2303
      %v2305 = vsel %vm2238, %v2292, 0.0
      %v2306 = vadd.f32 %v2304, %v2305
      %v2307 = vsel %vm2238, %v2293, 0.0
      %v2308 = vadd.f32 %v2306, %v2307
      %v2309 = vrot.slane %v2308, 4
      %v2310 = vadd.f32 %v2308, %v2309
      %v2311 = vrot.slane %v2310, 2
      %v2312 = vadd.f32 %v2310, %v2311
      %v2313 = vrot.slane %v2312, 1
      %v2314 = vadd.f32 %v2312, %v2313
      %v2315 = vmul.f32 %v2286, %v2286
      %v2316 = vmul.f32 %v2287, %v2287
      %v2317 = vmul.f32 %v2288, %v2288
      %v2318 = vmul.f32 %v2289, %v2289
      %v2319 = vmul.f32 %v2290, %v2290
      %v2320 = vmul.f32 %v2291, %v2291
      %v2321 = vmul.f32 %v2292, %v2292
      %v2322 = vmul.f32 %v2293, %v2293
      %v2323 = vsel %vm2238, %v2315, 0.0
      %v2324 = vsel %vm2238, %v2316, 0.0
      %v2325 = vadd.f32 %v2323, %v2324
      %v2326 = vsel %vm2238, %v2317, 0.0
      %v2327 = vadd.f32 %v2325, %v2326
      %v2328 = vsel %vm2238, %v2318, 0.0
      %v2329 = vadd.f32 %v2327, %v2328
      %v2330 = vsel %vm2238, %v2319, 0.0
      %v2331 = vadd.f32 %v2329, %v2330
      %v2332 = vsel %vm2238, %v2320, 0.0
      %v2333 = vadd.f32 %v2331, %v2332
      %v2334 = vsel %vm2238, %v2321, 0.0
      %v2335 = vadd.f32 %v2333, %v2334
      %v2336 = vsel %vm2238, %v2322, 0.0
      %v2337 = vadd.f32 %v2335, %v2336
      %v2338 = vrot.slane %v2337, 4
      %v2339 = vadd.f32 %v2337, %v2338
      %v2340 = vrot.slane %v2339, 2
      %v2341 = vadd.f32 %v2339, %v2340
      %v2342 = vrot.slane %v2341, 1
      %v2343 = vadd.f32 %v2341, %v2342
      %v2344 = vsel %vm785, %v2314, %v2343
      %v2345 = vld [vmem:[%s11] sm:$0xff]
      %v2346 = vld [vmem:[%s11 + $0x8] sm:$0xff]
      %v2347 = vld [vmem:[%s11 + $0x10] sm:$0xff]
      %v2348 = vld [vmem:[%s11 + $0x18] sm:$0xff]
      %v2350 = vsel %vm2238, %v2344, 0
      %2352 = vmatprep.subr.mxu0 0.0
      %2353 = vmatpush1.msra.mxu0 %v2345
      %2354 = vmatprep.subr.mxu0 0.0
      %2355 = vmatpush1.msra.mxu0 %v2346
      %2356 = vmatprep.subr.mxu0 0.0
      %2357 = vmatpush1.msra.mxu0 %v2347
      %2358 = vmatprep.subr.mxu0 0.0
      %2359 = vmatpush1.msra.mxu0 %v2348
      %2360 = vmatprep.subr.mxu0 0.0
      %2361 = vmatpush1.msra.mxu0 0.0
      %2362 = vmatprep.subr.mxu0 0.0
      %2363 = vmatpush1.msra.mxu0 0.0
      %2364 = vmatprep.subr.mxu0 0.0
      %2365 = vmatpush1.msra.mxu0 0.0
      %2366 = vmatprep.subr.mxu0 0.0
      %2367 = vmatpush1.msra.mxu0 0.0
      %2368 = vmatprep.subr.mxu0 0.0
      %2369 = vmatpush1.msra.mxu0 0.0
      %2370 = vmatprep.subr.mxu0 0.0
      %2371 = vmatpush1.msra.mxu0 0.0
      %2372 = vmatprep.subr.mxu0 0.0
      %2373 = vmatpush1.msra.mxu0 0.0
      %2374 = vmatprep.subr.mxu0 0.0
      %2375 = vmatpush1.msra.mxu0 0.0
      %2376 = vmatprep.subr.mxu0 0.0
      %2377 = vmatpush1.msra.mxu0 0.0
      %2378 = vmatprep.subr.mxu0 0.0
      %2379 = vmatpush1.msra.mxu0 0.0
      %2380 = vmatprep.subr.mxu0 0.0
      %2381 = vmatpush1.msra.mxu0 0.0
      %2382 = vmatprep.subr.mxu0 0.0
      %2383 = vmatpush1.msra.mxu0 0.0
      %2384 = vmatprep.subr.mxu0 0.0
      %2385 = vmatpush1.msra.mxu0 0.0
      %2386 = vmatprep.subr.mxu0 0.0
      %2387 = vmatpush1.msra.mxu0 0.0
      %2388 = vmatprep.subr.mxu0 0.0
      %2389 = vmatpush1.msra.mxu0 0.0
      %2390 = vmatprep.subr.mxu0 0.0
      %2391 = vmatpush1.msra.mxu0 0.0
      %2392 = vmatprep.subr.mxu0 0.0
      %2393 = vmatpush1.msra.mxu0 0.0
      %2394 = vmatprep.subr.mxu0 0.0
      %2395 = vmatpush1.msra.mxu0 0.0
      %2396 = vmatprep.subr.mxu0 0.0
      %2397 = vmatpush1.msra.mxu0 0.0
      %2398 = vmatprep.subr.mxu0 0.0
      %2399 = vmatpush1.msra.mxu0 0.0
      %2400 = vmatprep.subr.mxu0 0.0
      %2401 = vmatpush1.msra.mxu0 0.0
      %2402 = vmatprep.subr.mxu0 0.0
      %2403 = vmatpush1.msra.mxu0 0.0
      %2404 = vmatprep.subr.mxu0 0.0
      %2405 = vmatpush1.msra.mxu0 0.0
      %2406 = vmatprep.subr.mxu0 0.0
      %2407 = vmatpush1.msra.mxu0 0.0
      %2408 = vmatprep.subr.mxu0 0.0
      %2409 = vmatpush1.msra.mxu0 0.0
      %2410 = vmatprep.subr.mxu0 0.0
      %2411 = vmatpush1.msra.mxu0 0.0
      %2412 = vmatprep.subr.mxu0 0.0
      %2413 = vmatpush1.msra.mxu0 0.0
      %2414 = vmatprep.subr.mxu0 0.0
      %2415 = vmatpush1.msra.mxu0 0.0
      %2416 = vmatprep.mubr.f32.mxu0 0.0
      %2417 = vmatmul.mubr.f32.gmra.mrb[0].mxu0 %v2350
      %v2418 = vpop.f32.mrb[0].mxu0
      %v2419 = vadd.f32 0.0, %v2418
      %v2420 = vpop.f32.mrb[0].mxu0
      %2421 = vdwg.mxu0
      %v2422 = vmul.f32 %v2419, 0.0078125
      %v2423 = vld [vmem:[%s12] sm:$0xff]
      %v2424 = vld [vmem:[%s12 + $0x8] sm:$0xff]
      %v2426 = vsel %vm871, %v2422, 0
      %2428 = vmatprep.subr.mxu0 0.0
      %2429 = vmatpush1.msra.mxu0 %v2423
      %2430 = vmatprep.subr.mxu0 0.0
      %2431 = vmatpush1.msra.mxu0 %v2424
      %2432 = vmatprep.subr.mxu0 0.0
      %2433 = vmatpush1.msra.mxu0 0.0
      %2434 = vmatprep.subr.mxu0 0.0
      %2435 = vmatpush1.msra.mxu0 0.0
      %2436 = vmatprep.subr.mxu0 0.0
      %2437 = vmatpush1.msra.mxu0 0.0
      %2438 = vmatprep.subr.mxu0 0.0
      %2439 = vmatpush1.msra.mxu0 0.0
      %2440 = vmatprep.subr.mxu0 0.0
      %2441 = vmatpush1.msra.mxu0 0.0
      %2442 = vmatprep.subr.mxu0 0.0
      %2443 = vmatpush1.msra.mxu0 0.0
      %2444 = vmatprep.subr.mxu0 0.0
      %2445 = vmatpush1.msra.mxu0 0.0
      %2446 = vmatprep.subr.mxu0 0.0
      %2447 = vmatpush1.msra.mxu0 0.0
      %2448 = vmatprep.subr.mxu0 0.0
      %2449 = vmatpush1.msra.mxu0 0.0
      %2450 = vmatprep.subr.mxu0 0.0
      %2451 = vmatpush1.msra.mxu0 0.0
      %2452 = vmatprep.subr.mxu0 0.0
      %2453 = vmatpush1.msra.mxu0 0.0
      %2454 = vmatprep.subr.mxu0 0.0
      %2455 = vmatpush1.msra.mxu0 0.0
      %2456 = vmatprep.subr.mxu0 0.0
      %2457 = vmatpush1.msra.mxu0 0.0
      %2458 = vmatprep.subr.mxu0 0.0
      %2459 = vmatpush1.msra.mxu0 0.0
      %2460 = vmatprep.subr.mxu0 0.0
      %2461 = vmatpush1.msra.mxu0 0.0
      %2462 = vmatprep.subr.mxu0 0.0
      %2463 = vmatpush1.msra.mxu0 0.0
      %2464 = vmatprep.subr.mxu0 0.0
      %2465 = vmatpush1.msra.mxu0 0.0
      %2466 = vmatprep.subr.mxu0 0.0
      %2467 = vmatpush1.msra.mxu0 0.0
      %2468 = vmatprep.subr.mxu0 0.0
      %2469 = vmatpush1.msra.mxu0 0.0
      %2470 = vmatprep.subr.mxu0 0.0
      %2471 = vmatpush1.msra.mxu0 0.0
      %2472 = vmatprep.subr.mxu0 0.0
      %2473 = vmatpush1.msra.mxu0 0.0
      %2474 = vmatprep.subr.mxu0 0.0
      %2475 = vmatpush1.msra.mxu0 0.0
      %2476 = vmatprep.subr.mxu0 0.0
      %2477 = vmatpush1.msra.mxu0 0.0
      %2478 = vmatprep.subr.mxu0 0.0
      %2479 = vmatpush1.msra.mxu0 0.0
      %2480 = vmatprep.subr.mxu0 0.0
      %2481 = vmatpush1.msra.mxu0 0.0
      %2482 = vmatprep.subr.mxu0 0.0
      %2483 = vmatpush1.msra.mxu0 0.0
      %2484 = vmatprep.subr.mxu0 0.0
      %2485 = vmatpush1.msra.mxu0 0.0
      %2486 = vmatprep.subr.mxu0 0.0
      %2487 = vmatpush1.msra.mxu0 0.0
      %2488 = vmatprep.subr.mxu0 0.0
      %2489 = vmatpush1.msra.mxu0 0.0
      %2490 = vmatprep.subr.mxu0 0.0
      %2491 = vmatpush1.msra.mxu0 0.0
      %2492 = vmatprep.mubr.f32.mxu0 0.0
      %2493 = vmatmul.mubr.f32.gmra.mrb[0].mxu0 %v2426
      %v2494 = vpop.f32.mrb[0].mxu0
      %v2495 = vadd.f32 0.0, %v2494
      %v2496 = vpop.f32.mrb[0].mxu0
      %2497 = vdwg.mxu0
      %v2498 = vmul.f32 %v2495, %v2495
      %v2500 = vrot.slane %v2498, 7
      %v2502 = vsub.f32 %v2495, %v2500
      %v2503 = vmax.f32 %v2502, 0.0
      %v2504 = vlaneseq
      %v2505 = vshrl.u32 %v2504, 7
      %v2506 = vsub.s32 0, %v2505
      %v2507 = vrot.slane %v2495, %v2506
      %v2508 = vsub.f32 %v2286, %v2507
      %v2509 = vsub.f32 %v2287, %v2507
      %v2510 = vsub.f32 %v2288, %v2507
      %v2511 = vsub.f32 %v2289, %v2507
      %v2512 = vsub.f32 %v2290, %v2507
      %v2513 = vsub.f32 %v2291, %v2507
      %v2514 = vsub.f32 %v2292, %v2507
      %v2515 = vsub.f32 %v2293, %v2507
      %v2516 = vadd.f32 %v2503, 1e-05
      %v2517 = vrsqrt.pop %v2516
      %v2518 = vlaneseq
      %v2519 = vshrl.u32 %v2518, 7
      %v2520 = vsub.s32 1, %v2519
      %v2521 = vrot.slane %v2517, %v2520
      %v2522 = vmul.f32 %v2508, %v2521
      %v2523 = vmul.f32 %v2509, %v2521
      %v2524 = vmul.f32 %v2510, %v2521
      %v2525 = vmul.f32 %v2511, %v2521
      %v2526 = vmul.f32 %v2512, %v2521
      %v2527 = vmul.f32 %v2513, %v2521
      %v2528 = vmul.f32 %v2514, %v2521
      %v2529 = vmul.f32 %v2515, %v2521
      %v2530 = vld [vmem:[%s13] sm:$0x1]
      %v2532 = vlaneseq
      %v2533 = vshrl.u32 %v2532, 7
      %v2534 = vsub.s32 0, %v2533
      %v2535 = vrot.slane %v2530, %v2534
      %v2537 = vmul.f32 %v2522, %v2535
      %v2538 = vmul.f32 %v2523, %v2535
      %v2539 = vmul.f32 %v2524, %v2535
      %v2540 = vmul.f32 %v2525, %v2535
      %v2541 = vmul.f32 %v2526, %v2535
      %v2542 = vmul.f32 %v2527, %v2535
      %v2543 = vmul.f32 %v2528, %v2535
      %v2544 = vmul.f32 %v2529, %v2535
      %v2545 = vld [vmem:[%s14] sm:$0x1]
      %v2547 = vlaneseq
      %v2548 = vshrl.u32 %v2547, 7
      %v2549 = vsub.s32 0, %v2548
      %v2550 = vrot.slane %v2545, %v2549
      %v2552 = vadd.f32 %v2537, %v2550
      %v2553 = vadd.f32 %v2538, %v2550
      %v2554 = vadd.f32 %v2539, %v2550
      %v2555 = vadd.f32 %v2540, %v2550
      %v2556 = vadd.f32 %v2541, %v2550
      %v2557 = vadd.f32 %v2542, %v2550
      %v2558 = vadd.f32 %v2543, %v2550
      %v2559 = vadd.f32 %v2544, %v2550
      %v2560 = vxor.u32 %v2552, 2147483648
      %v2561 = vxor.u32 %v2553, 2147483648
      %v2562 = vxor.u32 %v2554, 2147483648
      %v2563 = vxor.u32 %v2555, 2147483648
      %v2564 = vxor.u32 %v2556, 2147483648
      %v2565 = vxor.u32 %v2557, 2147483648
      %v2566 = vxor.u32 %v2558, 2147483648
      %v2567 = vxor.u32 %v2559, 2147483648
      %v2568 = vmul.f32 %v2560, 1.442695
      %v2569 = vpow.pop %v2568
      %v2570 = vmul.f32 %v2561, 1.442695
      %v2571 = vpow.pop %v2570
      %v2572 = vmul.f32 %v2562, 1.442695
      %v2573 = vpow.pop %v2572
      %v2574 = vmul.f32 %v2563, 1.442695
      %v2575 = vpow.pop %v2574
      %v2576 = vmul.f32 %v2564, 1.442695
      %v2577 = vpow.pop %v2576
      %v2578 = vmul.f32 %v2565, 1.442695
      %v2579 = vpow.pop %v2578
      %v2580 = vmul.f32 %v2566, 1.442695
      %v2581 = vpow.pop %v2580
      %v2582 = vmul.f32 %v2567, 1.442695
      %v2583 = vpow.pop %v2582
      %v2584 = vadd.f32 %v2569, 1.0
      %v2585 = vadd.f32 %v2571, 1.0
      %v2586 = vadd.f32 %v2573, 1.0
      %v2587 = vadd.f32 %v2575, 1.0
      %v2588 = vadd.f32 %v2577, 1.0
      %v2589 = vadd.f32 %v2579, 1.0
      %v2590 = vadd.f32 %v2581, 1.0
      %v2591 = vadd.f32 %v2583, 1.0
      %v2592 = vrcp.pop %v2584
      %v2593 = vmul.f32 1.0, %v2592
      %v2594 = vrcp.pop %v2585
      %v2595 = vmul.f32 1.0, %v2594
      %v2596 = vrcp.pop %v2586
      %v2597 = vmul.f32 1.0, %v2596
      %v2598 = vrcp.pop %v2587
      %v2599 = vmul.f32 1.0, %v2598
      %v2600 = vrcp.pop %v2588
      %v2601 = vmul.f32 1.0, %v2600
      %v2602 = vrcp.pop %v2589
      %v2603 = vmul.f32 1.0, %v2602
      %v2604 = vrcp.pop %v2590
      %v2605 = vmul.f32 1.0, %v2604
      %v2606 = vrcp.pop %v2591
      %v2607 = vmul.f32 1.0, %v2606
      %v2608 = vmul.f32 %v2552, %v2593
      %v2609 = vmul.f32 %v2553, %v2595
      %v2610 = vmul.f32 %v2554, %v2597
      %v2611 = vmul.f32 %v2555, %v2599
      %v2612 = vmul.f32 %v2556, %v2601
      %v2613 = vmul.f32 %v2557, %v2603
      %v2614 = vmul.f32 %v2558, %v2605
      %v2615 = vmul.f32 %v2559, %v2607
      %v2616 = vrot.slane %v2608, 7
      %v2617 = vrot.slane %v2609, 7
      %v2618 = vrot.slane %v2610, 7
      %v2619 = vrot.slane %v2611, 7
      %v2620 = vrot.slane %v2612, 7
      %v2621 = vrot.slane %v2613, 7
      %v2622 = vrot.slane %v2614, 7
      %v2623 = vrot.slane %v2615, 7
      %v2624 = vsel %vm1073, %v2622, %v2623
      %v2625 = vsel %vm1073, %v2621, %v2622
      %v2626 = vsel %vm1073, %v2620, %v2621
      %v2627 = vsel %vm1073, %v2619, %v2620
      %v2628 = vsel %vm1073, %v2618, %v2619
      %v2629 = vsel %vm1073, %v2617, %v2618
      %v2630 = vsel %vm1073, %v2616, %v2617
      %v2631 = vsel %vm1073, %v2623, %v2616
      %v2632 = vmul.f32 %v2624, %v1093
      %v2633 = vmul.f32 %v2631, %v1098
      %v2634 = vmul.f32 %v2630, %v1103
      %v2635 = vmul.f32 %v2629, %v1108
      %v2636 = vmul.f32 %v2628, %v1113
      %v2637 = vmul.f32 %v2627, %v1118
      %v2638 = vmul.f32 %v2626, %v1123
      %v2639 = vmul.f32 %v2625, %v1128
      %v2640 = vpack.c.bf16 %v2633, %v2632
      %v2641 = vpack.c.bf16 %v2635, %v2634
      %v2642 = vpack.c.bf16 %v2637, %v2636
      %v2643 = vpack.c.bf16 %v2639, %v2638
      %v2644 = vmul.f32 %v2615, %v1154
      %v2645 = vmul.f32 %v2608, %v1159
      %v2646 = vmul.f32 %v2609, %v1164
      %v2647 = vmul.f32 %v2610, %v1169
      %v2648 = vmul.f32 %v2611, %v1174
      %v2649 = vmul.f32 %v2612, %v1179
      %v2650 = vmul.f32 %v2613, %v1184
      %v2651 = vmul.f32 %v2614, %v1189
      %v2652 = vpack.c.bf16 %v2645, %v2644
      %v2653 = vpack.c.bf16 %v2647, %v2646
      %v2654 = vpack.c.bf16 %v2649, %v2648
      %v2655 = vpack.c.bf16 %v2651, %v2650
      %v2656 = vrot.slane %v2608, 1
      %v2657 = vrot.slane %v2609, 1
      %v2658 = vrot.slane %v2610, 1
      %v2659 = vrot.slane %v2611, 1
      %v2660 = vrot.slane %v2612, 1
      %v2661 = vrot.slane %v2613, 1
      %v2662 = vrot.slane %v2614, 1
      %v2663 = vrot.slane %v2615, 1
      %v2664 = vsel %vm1211, %v2662, %v2663
      %v2665 = vsel %vm1211, %v2661, %v2662
      %v2666 = vsel %vm1211, %v2660, %v2661
      %v2667 = vsel %vm1211, %v2659, %v2660
      %v2668 = vsel %vm1211, %v2658, %v2659
      %v2669 = vsel %vm1211, %v2657, %v2658
      %v2670 = vsel %vm1211, %v2656, %v2657
      %v2671 = vsel %vm1211, %v2663, %v2656
      %v2672 = vmul.f32 %v2671, %v1232
      %v2673 = vmul.f32 %v2670, %v1237
      %v2674 = vmul.f32 %v2669, %v1242
      %v2675 = vmul.f32 %v2668, %v1247
      %v2676 = vmul.f32 %v2667, %v1252
      %v2677 = vmul.f32 %v2666, %v1257
      %v2678 = vmul.f32 %v2665, %v1262
      %v2679 = vmul.f32 %v2664, %v1267
      %v2680 = vpack.c.bf16 %v2673, %v2672
      %v2681 = vpack.c.bf16 %v2675, %v2674
      %v2682 = vpack.c.bf16 %v2677, %v2676
      %v2683 = vpack.c.bf16 %v2679, %v2678
      %v2684 = vmul.f32 %v2631, %v1293
      %v2685 = vmul.f32 %v2630, %v1298
      %v2686 = vmul.f32 %v2629, %v1303
      %v2687 = vmul.f32 %v2628, %v1308
      %v2688 = vmul.f32 %v2627, %v1313
      %v2689 = vmul.f32 %v2626, %v1318
      %v2690 = vmul.f32 %v2625, %v1323
      %v2691 = vmul.f32 %v2624, %v1328
      %v2692 = vpack.c.bf16 %v2685, %v2684
      %v2693 = vpack.c.bf16 %v2687, %v2686
      %v2694 = vpack.c.bf16 %v2689, %v2688
      %v2695 = vpack.c.bf16 %v2691, %v2690
      %v2696 = vpack.c.bf16 %v2609, %v2608
      %v2697 = vpack.c.bf16 %v2611, %v2610
      %v2698 = vpack.c.bf16 %v2613, %v2612
      %v2699 = vpack.c.bf16 %v2615, %v2614
      %v2700 = vmul.f32 %v2670, %v1358
      %v2701 = vmul.f32 %v2669, %v1363
      %v2702 = vmul.f32 %v2668, %v1368
      %v2703 = vmul.f32 %v2667, %v1373
      %v2704 = vmul.f32 %v2666, %v1378
      %v2705 = vmul.f32 %v2665, %v1383
      %v2706 = vmul.f32 %v2664, %v1388
      %v2707 = vmul.f32 %v2671, %v1393
      %v2708 = vpack.c.bf16 %v2701, %v2700
      %v2709 = vpack.c.bf16 %v2703, %v2702
      %v2710 = vpack.c.bf16 %v2705, %v2704
      %v2711 = vpack.c.bf16 %v2707, %v2706
      %v2712 = vmul.f32 %v2630, %v1419
      %v2713 = vmul.f32 %v2629, %v1424
      %v2714 = vmul.f32 %v2628, %v1429
      %v2715 = vmul.f32 %v2627, %v1434
      %v2716 = vmul.f32 %v2626, %v1439
      %v2717 = vmul.f32 %v2625, %v1444
      %v2718 = vmul.f32 %v2624, %v1449
      %v2719 = vmul.f32 %v2631, %v1454
      %v2720 = vpack.c.bf16 %v2713, %v2712
      %v2721 = vpack.c.bf16 %v2715, %v2714
      %v2722 = vpack.c.bf16 %v2717, %v2716
      %v2723 = vpack.c.bf16 %v2719, %v2718
      %v2724 = vmul.f32 %v2609, %v1480
      %v2725 = vmul.f32 %v2610, %v1485
      %v2726 = vmul.f32 %v2611, %v1490
      %v2727 = vmul.f32 %v2612, %v1495
      %v2728 = vmul.f32 %v2613, %v1500
      %v2729 = vmul.f32 %v2614, %v1505
      %v2730 = vmul.f32 %v2615, %v1510
      %v2731 = vmul.f32 %v2608, %v1515
      %v2732 = vpack.c.bf16 %v2725, %v2724
      %v2733 = vpack.c.bf16 %v2727, %v2726
      %v2734 = vpack.c.bf16 %v2729, %v2728
      %v2735 = vpack.c.bf16 %v2731, %v2730
      %v2736 = vmul.f32 %v2669, %v1541
      %v2737 = vmul.f32 %v2668, %v1546
      %v2738 = vmul.f32 %v2667, %v1551
      %v2739 = vmul.f32 %v2666, %v1556
      %v2740 = vmul.f32 %v2665, %v1561
      %v2741 = vmul.f32 %v2664, %v1566
      %v2742 = vmul.f32 %v2671, %v1571
      %v2743 = vmul.f32 %v2670, %v1576
      %v2744 = vpack.c.bf16 %v2737, %v2736
      %v2745 = vpack.c.bf16 %v2739, %v2738
      %v2746 = vpack.c.bf16 %v2741, %v2740
      %v2747 = vpack.c.bf16 %v2743, %v2742
      %2752 = vrot.lane.b32.xlu0 %v2652, 32
      %v2753 = vpop.permute.xlu0 %2752
      %2754 = vrot.lane.b32.xlu0 %v2653, 32
      %v2755 = vpop.permute.xlu0 %2754
      %2756 = vrot.lane.b32.xlu0 %v2654, 32
      %v2757 = vpop.permute.xlu0 %2756
      %2758 = vrot.lane.b32.xlu0 %v2655, 32
      %v2759 = vpop.permute.xlu0 %2758
      %2764 = vrot.lane.b32.xlu0 %v2680, 64
      %v2765 = vpop.permute.xlu0 %2764
      %2766 = vrot.lane.b32.xlu0 %v2681, 64
      %v2767 = vpop.permute.xlu0 %2766
      %2768 = vrot.lane.b32.xlu0 %v2682, 64
      %v2769 = vpop.permute.xlu0 %2768
      %2770 = vrot.lane.b32.xlu0 %v2683, 64
      %v2771 = vpop.permute.xlu0 %2770
      %2776 = vrot.lane.b32.xlu0 %v2692, 96
      %v2777 = vpop.permute.xlu0 %2776
      %2778 = vrot.lane.b32.xlu0 %v2693, 96
      %v2779 = vpop.permute.xlu0 %2778
      %2780 = vrot.lane.b32.xlu0 %v2694, 96
      %v2781 = vpop.permute.xlu0 %2780
      %2782 = vrot.lane.b32.xlu0 %v2695, 96
      %v2783 = vpop.permute.xlu0 %2782
      %2788 = vrot.lane.b32.xlu0 %v2708, 32
      %v2789 = vpop.permute.xlu0 %2788
      %2790 = vrot.lane.b32.xlu0 %v2709, 32
      %v2791 = vpop.permute.xlu0 %2790
      %2792 = vrot.lane.b32.xlu0 %v2710, 32
      %v2793 = vpop.permute.xlu0 %2792
      %2794 = vrot.lane.b32.xlu0 %v2711, 32
      %v2795 = vpop.permute.xlu0 %2794
      %2800 = vrot.lane.b32.xlu0 %v2720, 64
      %v2801 = vpop.permute.xlu0 %2800
      %2802 = vrot.lane.b32.xlu0 %v2721, 64
      %v2803 = vpop.permute.xlu0 %2802
      %2804 = vrot.lane.b32.xlu0 %v2722, 64
      %v2805 = vpop.permute.xlu0 %2804
      %2806 = vrot.lane.b32.xlu0 %v2723, 64
      %v2807 = vpop.permute.xlu0 %2806
      %2812 = vrot.lane.b32.xlu0 %v2732, 96
      %v2813 = vpop.permute.xlu0 %2812
      %2814 = vrot.lane.b32.xlu0 %v2733, 96
      %v2815 = vpop.permute.xlu0 %2814
      %2816 = vrot.lane.b32.xlu0 %v2734, 96
      %v2817 = vpop.permute.xlu0 %2816
      %2818 = vrot.lane.b32.xlu0 %v2735, 96
      %v2819 = vpop.permute.xlu0 %2818
      %v2822 = vsel %vm2238, %v2640, %v2753
      %v2825 = vsel %vm2238, %v2641, %v2755
      %v2828 = vsel %vm2238, %v2642, %v2757
      %v2831 = vsel %vm2238, %v2643, %v2759
      %v2833 = vsel %vm734, %v2822, %v2765
      %v2835 = vsel %vm734, %v2825, %v2767
      %v2837 = vsel %vm734, %v2828, %v2769
      %v2839 = vsel %vm734, %v2831, %v2771
      %vm2840 = vcmask 785408
      %v2842 = vsel %vm2840, %v2833, %v2777
      %v2845 = vsel %vm2840, %v2835, %v2779
      %v2848 = vsel %vm2840, %v2837, %v2781
      %v2851 = vsel %vm2840, %v2839, %v2783
      %v2855 = vsel %vm2238, %v2696, %v2789
      %v2858 = vsel %vm2238, %v2697, %v2791
      %v2861 = vsel %vm2238, %v2698, %v2793
      %v2864 = vsel %vm2238, %v2699, %v2795
      %v2866 = vsel %vm734, %v2855, %v2801
      %v2868 = vsel %vm734, %v2858, %v2803
      %v2870 = vsel %vm734, %v2861, %v2805
      %v2872 = vsel %vm734, %v2864, %v2807
      %v2874 = vsel %vm2840, %v2866, %v2813
      %v2877 = vsel %vm2840, %v2868, %v2815
      %v2880 = vsel %vm2840, %v2870, %v2817
      %v2883 = vsel %vm2840, %v2872, %v2819
      %v2885 = vld [vmem:[%s15] sm:$0xf]
      %v2886 = vld [vmem:[%s15 + $0x4] sm:$0xf]
      %v2887 = vld [vmem:[%s15 + $0x8] sm:$0xf]
      %v2888 = vld [vmem:[%s15 + $0xc] sm:$0xf]
      %v2889 = vld [vmem:[%s15 + $0x10] sm:$0xf]
      %v2890 = vld [vmem:[%s15 + $0x14] sm:$0xf]
      %v2891 = vld [vmem:[%s15 + $0x18] sm:$0xf]
      %v2892 = vld [vmem:[%s15 + $0x1c] sm:$0xf]
      %v2893 = vld [vmem:[%s15 + $0x20] sm:$0xf]
      %v2894 = vld [vmem:[%s15 + $0x24] sm:$0xf]
      %v2895 = vld [vmem:[%s15 + $0x28] sm:$0xf]
      %v2896 = vld [vmem:[%s15 + $0x2c] sm:$0xf]
      %v2897 = vld [vmem:[%s15 + $0x30] sm:$0xf]
      %v2898 = vld [vmem:[%s15 + $0x34] sm:$0xf]
      %v2899 = vld [vmem:[%s15 + $0x38] sm:$0xf]
      %v2900 = vld [vmem:[%s15 + $0x3c] sm:$0xf]
      %v2901 = vld [vmem:[%s15 + $0x40] sm:$0xf]
      %v2902 = vld [vmem:[%s15 + $0x44] sm:$0xf]
      %v2903 = vld [vmem:[%s15 + $0x48] sm:$0xf]
      %v2904 = vld [vmem:[%s15 + $0x4c] sm:$0xf]
      %v2905 = vld [vmem:[%s15 + $0x50] sm:$0xf]
      %v2906 = vld [vmem:[%s15 + $0x54] sm:$0xf]
      %v2907 = vld [vmem:[%s15 + $0x58] sm:$0xf]
      %v2908 = vld [vmem:[%s15 + $0x5c] sm:$0xf]
      %v2909 = vld [vmem:[%s15 + $0x60] sm:$0xf]
      %v2910 = vld [vmem:[%s15 + $0x64] sm:$0xf]
      %v2911 = vld [vmem:[%s15 + $0x68] sm:$0xf]
      %v2912 = vld [vmem:[%s15 + $0x6c] sm:$0xf]
      %v2913 = vld [vmem:[%s15 + $0x70] sm:$0xf]
      %v2914 = vld [vmem:[%s15 + $0x74] sm:$0xf]
      %v2915 = vld [vmem:[%s15 + $0x78] sm:$0xf]
      %v2916 = vld [vmem:[%s15 + $0x7c] sm:$0xf]
      %v2917 = vld [vmem:[%s15 + $0x80] sm:$0xf]
      %v2918 = vld [vmem:[%s15 + $0x84] sm:$0xf]
      %v2919 = vld [vmem:[%s15 + $0x88] sm:$0xf]
      %v2920 = vld [vmem:[%s15 + $0x8c] sm:$0xf]
      %v2957 = vunpack.c.l.b16 %v2885
      %v2958 = vunpack.c.l.b16 %v2886
      %v2959 = vunpack.c.l.b16 %v2887
      %v2960 = vunpack.c.l.b16 %v2888
      %v2961 = vunpack.c.l.b16 %v2889
      %v2962 = vunpack.c.l.b16 %v2890
      %v2963 = vunpack.c.l.b16 %v2891
      %v2964 = vunpack.c.l.b16 %v2892
      %v2965 = vunpack.c.l.b16 %v2893
      %v2966 = vunpack.c.l.b16 %v2894
      %v2967 = vunpack.c.l.b16 %v2895
      %v2968 = vunpack.c.l.b16 %v2896
      %v2969 = vunpack.c.l.b16 %v2897
      %v2970 = vunpack.c.l.b16 %v2898
      %v2971 = vunpack.c.l.b16 %v2899
      %v2972 = vunpack.c.l.b16 %v2900
      %v2973 = vunpack.c.l.b16 %v2901
      %v2974 = vunpack.c.l.b16 %v2902
      %v2975 = vunpack.c.l.b16 %v2903
      %v2976 = vunpack.c.l.b16 %v2904
      %v2977 = vunpack.c.l.b16 %v2905
      %v2978 = vunpack.c.l.b16 %v2906
      %v2979 = vunpack.c.l.b16 %v2907
      %v2980 = vunpack.c.l.b16 %v2908
      %v2981 = vunpack.c.l.b16 %v2909
      %v2982 = vunpack.c.l.b16 %v2910
      %v2983 = vunpack.c.l.b16 %v2911
      %v2984 = vunpack.c.l.b16 %v2912
      %v2985 = vunpack.c.l.b16 %v2913
      %v2986 = vunpack.c.l.b16 %v2914
      %v2987 = vunpack.c.l.b16 %v2915
      %v2988 = vunpack.c.l.b16 %v2916
      %v2989 = vunpack.c.l.b16 %v2917
      %v2990 = vunpack.c.l.b16 %v2918
      %v2991 = vunpack.c.l.b16 %v2919
      %v2992 = vunpack.c.l.b16 %v2920
      %v2993 = vpack.c.b16 %v2958, %v2957
      %v2994 = vpack.c.b16 %v2960, %v2959
      %v2995 = vpack.c.b16 %v2962, %v2961
      %v2996 = vpack.c.b16 %v2964, %v2963
      %v2997 = vpack.c.b16 %v2966, %v2965
      %v2998 = vpack.c.b16 %v2968, %v2967
      %v2999 = vpack.c.b16 %v2970, %v2969
      %v3000 = vpack.c.b16 %v2972, %v2971
      %v3001 = vpack.c.b16 %v2974, %v2973
      %v3002 = vpack.c.b16 %v2976, %v2975
      %v3003 = vpack.c.b16 %v2978, %v2977
      %v3004 = vpack.c.b16 %v2980, %v2979
      %v3005 = vpack.c.b16 %v2982, %v2981
      %v3006 = vpack.c.b16 %v2984, %v2983
      %v3007 = vpack.c.b16 %v2986, %v2985
      %v3008 = vpack.c.b16 %v2988, %v2987
      %v3009 = vpack.c.b16 %v2990, %v2989
      %v3010 = vpack.c.b16 %v2992, %v2991
      %v3030 = vsel %vm2238, %v2744, 0
      %v3033 = vsel %vm2238, %v2745, 0
      %v3036 = vsel %vm2238, %v2746, 0
      %v3039 = vsel %vm2238, %v2747, 0
      %3041 = vmatprep.subr.bf16.mxu0 0
      %3042 = vmatpush1.bf16.msra.mxu0 %v2993
      %3043 = vmatprep.subr.bf16.mxu0 0
      %3044 = vmatpush1.bf16.msra.mxu0 %v2994
      %3045 = vmatprep.subr.bf16.mxu0 0
      %3046 = vmatpush1.bf16.msra.mxu0 %v2995
      %3047 = vmatprep.subr.bf16.mxu0 0
      %3048 = vmatpush1.bf16.msra.mxu0 %v2996
      %3049 = vmatprep.subr.bf16.mxu0 0
      %3050 = vmatpush1.bf16.msra.mxu0 %v2997
      %3051 = vmatprep.subr.bf16.mxu0 0
      %3052 = vmatpush1.bf16.msra.mxu0 %v2998
      %3053 = vmatprep.subr.bf16.mxu0 0
      %3054 = vmatpush1.bf16.msra.mxu0 %v2999
      %3055 = vmatprep.subr.bf16.mxu0 0
      %3056 = vmatpush1.bf16.msra.mxu0 %v3000
      %3057 = vmatprep.subr.bf16.mxu0 0
      %3058 = vmatpush1.bf16.msra.mxu0 %v3001
      %3059 = vmatprep.subr.bf16.mxu0 0
      %3060 = vmatpush1.bf16.msra.mxu0 %v3002
      %3061 = vmatprep.subr.bf16.mxu0 0
      %3062 = vmatpush1.bf16.msra.mxu0 %v3003
      %3063 = vmatprep.subr.bf16.mxu0 0
      %3064 = vmatpush1.bf16.msra.mxu0 %v3004
      %3065 = vmatprep.subr.bf16.mxu0 0
      %3066 = vmatpush1.bf16.msra.mxu0 %v3005
      %3067 = vmatprep.subr.bf16.mxu0 0
      %3068 = vmatpush1.bf16.msra.mxu0 %v3006
      %3069 = vmatprep.subr.bf16.mxu0 0
      %3070 = vmatpush1.bf16.msra.mxu0 %v3007
      %3071 = vmatprep.subr.bf16.mxu0 0
      %3072 = vmatpush1.bf16.msra.mxu0 %v3008
      %3073 = vmatprep.mubr.bf16.mxu0 %v2874
      %3074 = vmatmul.mubr.bf16.gmra.mrb[0].mxu0 %v2842
      %v3075 = vpop.f32.mrb[0].mxu0
      %v3076 = vadd.f32 0.0, %v3075
      %v3077 = vpop.f32.mrb[0].mxu0
      %v3078 = vpop.f32.mrb[0].mxu0
      %v3079 = vadd.f32 0.0, %v3078
      %v3080 = vpop.f32.mrb[0].mxu0
      %3081 = vmatprep.mubr.bf16.mxu0 %v2877
      %3082 = vmatmul.mubr.bf16.gmra.mrb[0].mxu0 %v2845
      %v3083 = vpop.f32.mrb[0].mxu0
      %v3084 = vadd.f32 0.0, %v3083
      %v3085 = vpop.f32.mrb[0].mxu0
      %v3086 = vpop.f32.mrb[0].mxu0
      %v3087 = vadd.f32 0.0, %v3086
      %v3088 = vpop.f32.mrb[0].mxu0
      %3089 = vmatprep.mubr.bf16.mxu0 %v2880
      %3090 = vmatmul.mubr.bf16.gmra.mrb[0].mxu0 %v2848
      %v3091 = vpop.f32.mrb[0].mxu0
      %v3092 = vadd.f32 0.0, %v3091
      %v3093 = vpop.f32.mrb[0].mxu0
      %v3094 = vpop.f32.mrb[0].mxu0
      %v3095 = vadd.f32 0.0, %v3094
      %v3096 = vpop.f32.mrb[0].mxu0
      %3097 = vmatprep.mubr.bf16.mxu0 %v2883
      %3098 = vmatmul.mubr.bf16.gmra.mrb[0].mxu0 %v2851
      %v3099 = vpop.f32.mrb[0].mxu0
      %v3100 = vadd.f32 0.0, %v3099
      %v3101 = vpop.f32.mrb[0].mxu0
      %v3102 = vpop.f32.mrb[0].mxu0
      %v3103 = vadd.f32 0.0, %v3102
      %v3104 = vpop.f32.mrb[0].mxu0
      %3105 = vdwg.mxu0
      %3106 = vmatprep.subr.bf16.mxu0 0
      %3107 = vmatpush1.bf16.msra.mxu0 %v3009
      %3108 = vmatprep.subr.bf16.mxu0 0
      %3109 = vmatpush1.bf16.msra.mxu0 %v3010
      %3110 = vmatprep.subr.bf16.mxu0 0
      %3111 = vmatpush1.bf16.msra.mxu0 0
      %3112 = vmatprep.subr.bf16.mxu0 0
      %3113 = vmatpush1.bf16.msra.mxu0 0
      %3114 = vmatprep.subr.bf16.mxu0 0
      %3115 = vmatpush1.bf16.msra.mxu0 0
      %3116 = vmatprep.subr.bf16.mxu0 0
      %3117 = vmatpush1.bf16.msra.mxu0 0
      %3118 = vmatprep.subr.bf16.mxu0 0
      %3119 = vmatpush1.bf16.msra.mxu0 0
      %3120 = vmatprep.subr.bf16.mxu0 0
      %3121 = vmatpush1.bf16.msra.mxu0 0
      %3122 = vmatprep.subr.bf16.mxu0 0
      %3123 = vmatpush1.bf16.msra.mxu0 0
      %3124 = vmatprep.subr.bf16.mxu0 0
      %3125 = vmatpush1.bf16.msra.mxu0 0
      %3126 = vmatprep.subr.bf16.mxu0 0
      %3127 = vmatpush1.bf16.msra.mxu0 0
      %3128 = vmatprep.subr.bf16.mxu0 0
      %3129 = vmatpush1.bf16.msra.mxu0 0
      %3130 = vmatprep.subr.bf16.mxu0 0
      %3131 = vmatpush1.bf16.msra.mxu0 0
      %3132 = vmatprep.subr.bf16.mxu0 0
      %3133 = vmatpush1.bf16.msra.mxu0 0
      %3134 = vmatprep.subr.bf16.mxu0 0
      %3135 = vmatpush1.bf16.msra.mxu0 0
      %3136 = vmatprep.subr.bf16.mxu0 0
      %3137 = vmatpush1.bf16.msra.mxu0 0
      %3138 = vmatprep.mubr.bf16.mxu0 0
      %3139 = vmatmul.mubr.bf16.gmra.mrb[0].mxu0 %v3030
      %v3140 = vpop.f32.mrb[0].mxu0
      %v3141 = vadd.f32 %v3076, %v3140
      %v3142 = vpop.f32.mrb[0].mxu0
      %v3143 = vpop.f32.mrb[0].mxu0
      %v3144 = vadd.f32 %v3079, %v3143
      %v3145 = vpop.f32.mrb[0].mxu0
      %3146 = vmatprep.mubr.bf16.mxu0 0
      %3147 = vmatmul.mubr.bf16.gmra.mrb[0].mxu0 %v3033
      %v3148 = vpop.f32.mrb[0].mxu0
      %v3149 = vadd.f32 %v3084, %v3148
      %v3150 = vpop.f32.mrb[0].mxu0
      %v3151 = vpop.f32.mrb[0].mxu0
      %v3152 = vadd.f32 %v3087, %v3151
      %v3153 = vpop.f32.mrb[0].mxu0
      %3154 = vmatprep.mubr.bf16.mxu0 0
      %3155 = vmatmul.mubr.bf16.gmra.mrb[0].mxu0 %v3036
      %v3156 = vpop.f32.mrb[0].mxu0
      %v3157 = vadd.f32 %v3092, %v3156
      %v3158 = vpop.f32.mrb[0].mxu0
      %v3159 = vpop.f32.mrb[0].mxu0
      %v3160 = vadd.f32 %v3095, %v3159
      %v3161 = vpop.f32.mrb[0].mxu0
      %3162 = vmatprep.mubr.bf16.mxu0 0
      %3163 = vmatmul.mubr.bf16.gmra.mrb[0].mxu0 %v3039
      %v3164 = vpop.f32.mrb[0].mxu0
      %v3165 = vadd.f32 %v3100, %v3164
      %v3166 = vpop.f32.mrb[0].mxu0
      %v3167 = vpop.f32.mrb[0].mxu0
      %v3168 = vadd.f32 %v3103, %v3167
      %v3169 = vpop.f32.mrb[0].mxu0
      %3170 = vdwg.mxu0
      %v3171 = vld [vmem:[%s16] sm:$0x1]
      %v3173 = vlaneseq
      %v3174 = vshrl.u32 %v3173, 7
      %v3175 = vsub.s32 0, %v3174
      %v3176 = vrot.slane %v3171, %v3175
      %v3178 = vadd.f32 %v3141, %v3176
      %v3179 = vadd.f32 %v3144, %v3176
      %v3180 = vadd.f32 %v3149, %v3176
      %v3181 = vadd.f32 %v3152, %v3176
      %v3182 = vadd.f32 %v3157, %v3176
      %v3183 = vadd.f32 %v3160, %v3176
      %v3184 = vadd.f32 %v3165, %v3176
      %v3185 = vadd.f32 %v3168, %v3176
      %v3186 = vpack.c.bf16 %v727, %v726
      %v3187 = vpack.c.bf16 %v729, %v728
      %v3188 = vpack.c.bf16 %v731, %v730
      %v3189 = vpack.c.bf16 %v733, %v732
      %v3190 = vld [vmem:[%s17] sm:$0xf]
      %v3191 = vld [vmem:[%s17 + $0x4] sm:$0xf]
      %v3192 = vld [vmem:[%s17 + $0x8] sm:$0xf]
      %v3193 = vld [vmem:[%s17 + $0xc] sm:$0xf]
      %v3194 = vld [vmem:[%s17 + $0x10] sm:$0xf]
      %v3195 = vld [vmem:[%s17 + $0x14] sm:$0xf]
      %v3196 = vld [vmem:[%s17 + $0x18] sm:$0xf]
      %v3197 = vld [vmem:[%s17 + $0x1c] sm:$0xf]
      %v3206 = vunpack.c.l.b16 %v3190
      %v3207 = vunpack.c.l.b16 %v3191
      %v3208 = vunpack.c.l.b16 %v3192
      %v3209 = vunpack.c.l.b16 %v3193
      %v3210 = vunpack.c.l.b16 %v3194
      %v3211 = vunpack.c.l.b16 %v3195
      %v3212 = vunpack.c.l.b16 %v3196
      %v3213 = vunpack.c.l.b16 %v3197
      %v3214 = vpack.c.b16 %v3207, %v3206
      %v3215 = vpack.c.b16 %v3209, %v3208
      %v3216 = vpack.c.b16 %v3211, %v3210
      %v3217 = vpack.c.b16 %v3213, %v3212
      %v3223 = vsel %vm734, %v3186, 0
      %v3226 = vsel %vm734, %v3187, 0
      %v3229 = vsel %vm734, %v3188, 0
      %v3232 = vsel %vm734, %v3189, 0
      %3234 = vmatprep.subr.bf16.mxu0 0
      %3235 = vmatpush1.bf16.msra.mxu0 %v3214
      %3236 = vmatprep.subr.bf16.mxu0 0
      %3237 = vmatpush1.bf16.msra.mxu0 %v3215
      %3238 = vmatprep.subr.bf16.mxu0 0
      %3239 = vmatpush1.bf16.msra.mxu0 %v3216
      %3240 = vmatprep.subr.bf16.mxu0 0
      %3241 = vmatpush1.bf16.msra.mxu0 %v3217
      %3242 = vmatprep.subr.bf16.mxu0 0
      %3243 = vmatpush1.bf16.msra.mxu0 0
      %3244 = vmatprep.subr.bf16.mxu0 0
      %3245 = vmatpush1.bf16.msra.mxu0 0
      %3246 = vmatprep.subr.bf16.mxu0 0
      %3247 = vmatpush1.bf16.msra.mxu0 0
      %3248 = vmatprep.subr.bf16.mxu0 0
      %3249 = vmatpush1.bf16.msra.mxu0 0
      %3250 = vmatprep.subr.bf16.mxu0 0
      %3251 = vmatpush1.bf16.msra.mxu0 0
      %3252 = vmatprep.subr.bf16.mxu0 0
      %3253 = vmatpush1.bf16.msra.mxu0 0
      %3254 = vmatprep.subr.bf16.mxu0 0
      %3255 = vmatpush1.bf16.msra.mxu0 0
      %3256 = vmatprep.subr.bf16.mxu0 0
      %3257 = vmatpush1.bf16.msra.mxu0 0
      %3258 = vmatprep.subr.bf16.mxu0 0
      %3259 = vmatpush1.bf16.msra.mxu0 0
      %3260 = vmatprep.subr.bf16.mxu0 0
      %3261 = vmatpush1.bf16.msra.mxu0 0
      %3262 = vmatprep.subr.bf16.mxu0 0
      %3263 = vmatpush1.bf16.msra.mxu0 0
      %3264 = vmatprep.subr.bf16.mxu0 0
      %3265 = vmatpush1.bf16.msra.mxu0 0
      %3266 = vmatprep.mubr.bf16.mxu0 0
      %3267 = vmatmul.mubr.bf16.gmra.mrb[0].mxu0 %v3223
      %v3268 = vpop.f32.mrb[0].mxu0
      %v3269 = vadd.f32 0.0, %v3268
      %v3270 = vpop.f32.mrb[0].mxu0
      %v3271 = vpop.f32.mrb[0].mxu0
      %v3272 = vadd.f32 0.0, %v3271
      %v3273 = vpop.f32.mrb[0].mxu0
      %3274 = vmatprep.mubr.bf16.mxu0 0
      %3275 = vmatmul.mubr.bf16.gmra.mrb[0].mxu0 %v3226
      %v3276 = vpop.f32.mrb[0].mxu0
      %v3277 = vadd.f32 0.0, %v3276
      %v3278 = vpop.f32.mrb[0].mxu0
      %v3279 = vpop.f32.mrb[0].mxu0
      %v3280 = vadd.f32 0.0, %v3279
      %v3281 = vpop.f32.mrb[0].mxu0
      %3282 = vmatprep.mubr.bf16.mxu0 0
      %3283 = vmatmul.mubr.bf16.gmra.mrb[0].mxu0 %v3229
      %v3284 = vpop.f32.mrb[0].mxu0
      %v3285 = vadd.f32 0.0, %v3284
      %v3286 = vpop.f32.mrb[0].mxu0
      %v3287 = vpop.f32.mrb[0].mxu0
      %v3288 = vadd.f32 0.0, %v3287
      %v3289 = vpop.f32.mrb[0].mxu0
      %3290 = vmatprep.mubr.bf16.mxu0 0
      %3291 = vmatmul.mubr.bf16.gmra.mrb[0].mxu0 %v3232
      %v3292 = vpop.f32.mrb[0].mxu0
      %v3293 = vadd.f32 0.0, %v3292
      %v3294 = vpop.f32.mrb[0].mxu0
      %v3295 = vpop.f32.mrb[0].mxu0
      %v3296 = vadd.f32 0.0, %v3295
      %v3297 = vpop.f32.mrb[0].mxu0
      %3298 = vdwg.mxu0
      %v3299 = vld [vmem:[%s18] sm:$0x1]
      %v3301 = vlaneseq
      %v3302 = vshrl.u32 %v3301, 7
      %v3303 = vsub.s32 0, %v3302
      %v3304 = vrot.slane %v3299, %v3303
      %v3306 = vadd.f32 %v3269, %v3304
      %v3307 = vadd.f32 %v3272, %v3304
      %v3308 = vadd.f32 %v3277, %v3304
      %v3309 = vadd.f32 %v3280, %v3304
      %v3310 = vadd.f32 %v3285, %v3304
      %v3311 = vadd.f32 %v3288, %v3304
      %v3312 = vadd.f32 %v3293, %v3304
      %v3313 = vadd.f32 %v3296, %v3304
      %v3314 = vadd.f32 %v3178, %v3306
      %v3315 = vadd.f32 %v3179, %v3307
      %v3316 = vadd.f32 %v3180, %v3308
      %v3317 = vadd.f32 %v3181, %v3309
      %v3318 = vadd.f32 %v3182, %v3310
      %v3319 = vadd.f32 %v3183, %v3311
      %v3320 = vadd.f32 %v3184, %v3312
      %v3321 = vadd.f32 %v3185, %v3313
      %v3322 = vpack.c.bf16 %v3315, %v3314
      %v3323 = vpack.c.bf16 %v3317, %v3316
      %v3324 = vpack.c.bf16 %v3319, %v3318
      %v3325 = vpack.c.bf16 %v3321, %v3320
      %v3326 = vld [vmem:[%s19] sm:$0xf]
      %v3327 = vld [vmem:[%s19 + $0x4] sm:$0xf]
      %v3328 = vld [vmem:[%s19 + $0x8] sm:$0xf]
      %v3329 = vld [vmem:[%s19 + $0xc] sm:$0xf]
      %v3334 = vunpack.c.l.b16 %v3326
      %v3335 = vunpack.c.l.b16 %v3327
      %v3336 = vunpack.c.l.b16 %v3328
      %v3337 = vunpack.c.l.b16 %v3329
      %v3338 = vpack.c.b16 %v3335, %v3334
      %v3339 = vpack.c.b16 %v3337, %v3336
      %v3343 = vsel %vm2238, %v3322, 0
      %v3346 = vsel %vm2238, %v3323, 0
      %v3349 = vsel %vm2238, %v3324, 0
      %v3352 = vsel %vm2238, %v3325, 0
      %3354 = vmatprep.subr.bf16.mxu0 0
      %3355 = vmatpush1.bf16.msra.mxu0 %v3338
      %3356 = vmatprep.subr.bf16.mxu0 0
      %3357 = vmatpush1.bf16.msra.mxu0 %v3339
      %3358 = vmatprep.subr.bf16.mxu0 0
      %3359 = vmatpush1.bf16.msra.mxu0 0
      %3360 = vmatprep.subr.bf16.mxu0 0
      %3361 = vmatpush1.bf16.msra.mxu0 0
      %3362 = vmatprep.subr.bf16.mxu0 0
      %3363 = vmatpush1.bf16.msra.mxu0 0
      %3364 = vmatprep.subr.bf16.mxu0 0
      %3365 = vmatpush1.bf16.msra.mxu0 0
      %3366 = vmatprep.subr.bf16.mxu0 0
      %3367 = vmatpush1.bf16.msra.mxu0 0
      %3368 = vmatprep.subr.bf16.mxu0 0
      %3369 = vmatpush1.bf16.msra.mxu0 0
      %3370 = vmatprep.subr.bf16.mxu0 0
      %3371 = vmatpush1.bf16.msra.mxu0 0
      %3372 = vmatprep.subr.bf16.mxu0 0
      %3373 = vmatpush1.bf16.msra.mxu0 0
      %3374 = vmatprep.subr.bf16.mxu0 0
      %3375 = vmatpush1.bf16.msra.mxu0 0
      %3376 = vmatprep.subr.bf16.mxu0 0
      %3377 = vmatpush1.bf16.msra.mxu0 0
      %3378 = vmatprep.subr.bf16.mxu0 0
      %3379 = vmatpush1.bf16.msra.mxu0 0
      %3380 = vmatprep.subr.bf16.mxu0 0
      %3381 = vmatpush1.bf16.msra.mxu0 0
      %3382 = vmatprep.subr.bf16.mxu0 0
      %3383 = vmatpush1.bf16.msra.mxu0 0
      %3384 = vmatprep.subr.bf16.mxu0 0
      %3385 = vmatpush1.bf16.msra.mxu0 0
      %3386 = vmatprep.mubr.bf16.mxu0 0
      %3387 = vmatmul.mubr.bf16.gmra.mrb[0].mxu0 %v3343
      %v3388 = vpop.f32.mrb[0].mxu0
      %v3389 = vadd.f32 0.0, %v3388
      %v3390 = vpop.f32.mrb[0].mxu0
      %v3391 = vpop.f32.mrb[0].mxu0
      %v3392 = vadd.f32 0.0, %v3391
      %v3393 = vpop.f32.mrb[0].mxu0
      %3394 = vmatprep.mubr.bf16.mxu0 0
      %3395 = vmatmul.mubr.bf16.gmra.mrb[0].mxu0 %v3346
      %v3396 = vpop.f32.mrb[0].mxu0
      %v3397 = vadd.f32 0.0, %v3396
      %v3398 = vpop.f32.mrb[0].mxu0
      %v3399 = vpop.f32.mrb[0].mxu0
      %v3400 = vadd.f32 0.0, %v3399
      %v3401 = vpop.f32.mrb[0].mxu0
      %3402 = vmatprep.mubr.bf16.mxu0 0
      %3403 = vmatmul.mubr.bf16.gmra.mrb[0].mxu0 %v3349
      %v3404 = vpop.f32.mrb[0].mxu0
      %v3405 = vadd.f32 0.0, %v3404
      %v3406 = vpop.f32.mrb[0].mxu0
      %v3407 = vpop.f32.mrb[0].mxu0
      %v3408 = vadd.f32 0.0, %v3407
      %v3409 = vpop.f32.mrb[0].mxu0
      %3410 = vmatprep.mubr.bf16.mxu0 0
      %3411 = vmatmul.mubr.bf16.gmra.mrb[0].mxu0 %v3352
      %v3412 = vpop.f32.mrb[0].mxu0
      %v3413 = vadd.f32 0.0, %v3412
      %v3414 = vpop.f32.mrb[0].mxu0
      %v3415 = vpop.f32.mrb[0].mxu0
      %v3416 = vadd.f32 0.0, %v3415
      %v3417 = vpop.f32.mrb[0].mxu0
      %3418 = vdwg.mxu0
      %v3419 = vld [vmem:[%s20] sm:$0x1]
      %v3421 = vlaneseq
      %v3422 = vshrl.u32 %v3421, 7
      %v3423 = vsub.s32 0, %v3422
      %v3424 = vrot.slane %v3419, %v3423
      %v3426 = vadd.f32 %v3389, %v3424
      %v3427 = vadd.f32 %v3392, %v3424
      %v3428 = vadd.f32 %v3397, %v3424
      %v3429 = vadd.f32 %v3400, %v3424
      %v3430 = vadd.f32 %v3405, %v3424
      %v3431 = vadd.f32 %v3408, %v3424
      %v3432 = vadd.f32 %v3413, %v3424
      %v3433 = vadd.f32 %v3416, %v3424
      %v3434 = vpack.c.bf16 %v3427, %v3426
      %v3435 = vpack.c.bf16 %v3429, %v3428
      %v3436 = vpack.c.bf16 %v3431, %v3430
      %v3437 = vpack.c.bf16 %v3433, %v3432
      %3442 = vrot.lane.b32.xlu0 %v3434, 96
      %v3443 = vpop.permute.xlu0 %3442
      %3444 = vrot.lane.b32.xlu0 %v3435, 96
      %v3445 = vpop.permute.xlu0 %3444
      %3446 = vrot.lane.b32.xlu0 %v3436, 96
      %v3447 = vpop.permute.xlu0 %3446
      %3448 = vrot.lane.b32.xlu0 %v3437, 96
      %v3449 = vpop.permute.xlu0 %3448
      %v3451 = vsel %vm2238, %v3434, 0
      %v3454 = vsel %vm2238, %v3435, 0
      %v3457 = vsel %vm2238, %v3436, 0
      %v3460 = vsel %vm2238, %v3437, 0
      %v3463 = vsel %vm2238, %v3443, 0
      %v3466 = vsel %vm2238, %v3445, 0
      %v3469 = vsel %vm2238, %v3447, 0
      %v3472 = vsel %vm2238, %v3449, 0
      %3474 = vmatprep.subr.bf16.mxu0 0
      %3475 = vmatpush1.bf16.xpose.msra.mxu0 %v3463
      %3476 = vmatprep.subr.bf16.mxu0 0
      %3477 = vmatpush1.bf16.xpose.msra.mxu0 %v3466
      %3478 = vmatprep.subr.bf16.mxu0 0
      %3479 = vmatpush1.bf16.xpose.msra.mxu0 %v3469
      %3480 = vmatprep.subr.bf16.mxu0 0
      %3481 = vmatpush1.bf16.xpose.msra.mxu0 %v3472
      %3482 = vmatprep.subr.bf16.mxu0 0
      %3483 = vmatpush1.bf16.xpose.msra.mxu0 0
      %3484 = vmatprep.subr.bf16.mxu0 0
      %3485 = vmatpush1.bf16.xpose.msra.mxu0 0
      %3486 = vmatprep.subr.bf16.mxu0 0
      %3487 = vmatpush1.bf16.xpose.msra.mxu0 0
      %3488 = vmatprep.subr.bf16.mxu0 0
      %3489 = vmatpush1.bf16.xpose.msra.mxu0 0
      %3490 = vmatprep.subr.bf16.mxu0 0
      %3491 = vmatpush1.bf16.xpose.msra.mxu0 0
      %3492 = vmatprep.subr.bf16.mxu0 0
      %3493 = vmatpush1.bf16.xpose.msra.mxu0 0
      %3494 = vmatprep.subr.bf16.mxu0 0
      %3495 = vmatpush1.bf16.xpose.msra.mxu0 0
      %3496 = vmatprep.subr.bf16.mxu0 0
      %3497 = vmatpush1.bf16.xpose.msra.mxu0 0
      %3498 = vmatprep.subr.bf16.mxu0 0
      %3499 = vmatpush1.bf16.xpose.msra.mxu0 0
      %3500 = vmatprep.subr.bf16.mxu0 0
      %3501 = vmatpush1.bf16.xpose.msra.mxu0 0
      %3502 = vmatprep.subr.bf16.mxu0 0
      %3503 = vmatpush1.bf16.xpose.msra.mxu0 0
      %3504 = vmatprep.subr.bf16.mxu0 0
      %3505 = vmatpush1.bf16.xpose.msra.mxu0 0
      %3506 = vmatprep.mubr.bf16.mxu0 0
      %3507 = vmatmul.mubr.bf16.gmra.mrb[0].mxu0 %v3451
      %v3508 = vpop.f32.mrb[0].mxu0
      %v3509 = vadd.f32 0.0, %v3508
      %v3510 = vpop.f32.mrb[0].mxu0
      %v3511 = vpop.f32.mrb[0].mxu0
      %v3512 = vadd.f32 0.0, %v3511
      %v3513 = vpop.f32.mrb[0].mxu0
      %3514 = vmatprep.mubr.bf16.mxu0 0
      %3515 = vmatmul.mubr.bf16.gmra.mrb[0].mxu0 %v3454
      %v3516 = vpop.f32.mrb[0].mxu0
      %v3517 = vadd.f32 0.0, %v3516
      %v3518 = vpop.f32.mrb[0].mxu0
      %v3519 = vpop.f32.mrb[0].mxu0
      %v3520 = vadd.f32 0.0, %v3519
      %v3521 = vpop.f32.mrb[0].mxu0
      %3522 = vmatprep.mubr.bf16.mxu0 0
      %3523 = vmatmul.mubr.bf16.gmra.mrb[0].mxu0 %v3457
      %v3524 = vpop.f32.mrb[0].mxu0
      %v3525 = vadd.f32 0.0, %v3524
      %v3526 = vpop.f32.mrb[0].mxu0
      %v3527 = vpop.f32.mrb[0].mxu0
      %v3528 = vadd.f32 0.0, %v3527
      %v3529 = vpop.f32.mrb[0].mxu0
      %3530 = vmatprep.mubr.bf16.mxu0 0
      %3531 = vmatmul.mubr.bf16.gmra.mrb[0].mxu0 %v3460
      %v3532 = vpop.f32.mrb[0].mxu0
      %v3533 = vadd.f32 0.0, %v3532
      %v3534 = vpop.f32.mrb[0].mxu0
      %v3535 = vpop.f32.mrb[0].mxu0
      %v3536 = vadd.f32 0.0, %v3535
      %v3537 = vpop.f32.mrb[0].mxu0
      %3538 = vdwg.mxu0
      %v3539 = vmul.f32 %v3509, 0.17677669
      %v3540 = vmul.f32 %v3512, 0.17677669
      %v3541 = vmul.f32 %v3517, 0.17677669
      %v3542 = vmul.f32 %v3520, 0.17677669
      %v3543 = vmul.f32 %v3525, 0.17677669
      %v3544 = vmul.f32 %v3528, 0.17677669
      %v3545 = vmul.f32 %v3533, 0.17677669
      %v3546 = vmul.f32 %v3536, 0.17677669
      %v3547 = vsel %vm734, %v3539, -inf
      %3548 = vmax.xlane.f32.xlu0 %v3547
      %v3549 = vpop.xlane.xlu0 %3548
      %v3550 = vsel %vm734, %v3540, -inf
      %3551 = vmax.xlane.f32.xlu0 %v3550
      %v3552 = vpop.xlane.xlu0 %3551
      %v3553 = vsel %vm734, %v3541, -inf
      %3554 = vmax.xlane.f32.xlu0 %v3553
      %v3555 = vpop.xlane.xlu0 %3554
      %v3556 = vsel %vm734, %v3542, -inf
      %3557 = vmax.xlane.f32.xlu0 %v3556
      %v3558 = vpop.xlane.xlu0 %3557
      %v3559 = vsel %vm734, %v3543, -inf
      %3560 = vmax.xlane.f32.xlu0 %v3559
      %v3561 = vpop.xlane.xlu0 %3560
      %v3562 = vsel %vm734, %v3544, -inf
      %3563 = vmax.xlane.f32.xlu0 %v3562
      %v3564 = vpop.xlane.xlu0 %3563
      %v3565 = vsel %vm734, %v3545, -inf
      %3566 = vmax.xlane.f32.xlu0 %v3565
      %v3567 = vpop.xlane.xlu0 %3566
      %v3568 = vsel %vm734, %v3546, -inf
      %3569 = vmax.xlane.f32.xlu0 %v3568
      %v3570 = vpop.xlane.xlu0 %3569
      %v3571 = vsub.f32 %v3539, %v3549
      %v3572 = vsub.f32 %v3540, %v3552
      %v3573 = vsub.f32 %v3541, %v3555
      %v3574 = vsub.f32 %v3542, %v3558
      %v3575 = vsub.f32 %v3543, %v3561
      %v3576 = vsub.f32 %v3544, %v3564
      %v3577 = vsub.f32 %v3545, %v3567
      %v3578 = vsub.f32 %v3546, %v3570
      %v3579 = vmul.f32 %v3571, 1.442695
      %v3580 = vpow.pop %v3579
      %v3581 = vmul.f32 %v3572, 1.442695
      %v3582 = vpow.pop %v3581
      %v3583 = vmul.f32 %v3573, 1.442695
      %v3584 = vpow.pop %v3583
      %v3585 = vmul.f32 %v3574, 1.442695
      %v3586 = vpow.pop %v3585
      %v3587 = vmul.f32 %v3575, 1.442695
      %v3588 = vpow.pop %v3587
      %v3589 = vmul.f32 %v3576, 1.442695
      %v3590 = vpow.pop %v3589
      %v3591 = vmul.f32 %v3577, 1.442695
      %v3592 = vpow.pop %v3591
      %v3593 = vmul.f32 %v3578, 1.442695
      %v3594 = vpow.pop %v3593
      %v3595 = vsel %vm734, %v3580, 0.0
      %3596 = vadd.xlane.f32.xlu0 %v3595
      %v3597 = vpop.xlane.xlu0 %3596
      %v3598 = vsel %vm734, %v3582, 0.0
      %3599 = vadd.xlane.f32.xlu0 %v3598
      %v3600 = vpop.xlane.xlu0 %3599
      %v3601 = vsel %vm734, %v3584, 0.0
      %3602 = vadd.xlane.f32.xlu0 %v3601
      %v3603 = vpop.xlane.xlu0 %3602
      %v3604 = vsel %vm734, %v3586, 0.0
      %3605 = vadd.xlane.f32.xlu0 %v3604
      %v3606 = vpop.xlane.xlu0 %3605
      %v3607 = vsel %vm734, %v3588, 0.0
      %3608 = vadd.xlane.f32.xlu0 %v3607
      %v3609 = vpop.xlane.xlu0 %3608
      %v3610 = vsel %vm734, %v3590, 0.0
      %3611 = vadd.xlane.f32.xlu0 %v3610
      %v3612 = vpop.xlane.xlu0 %3611
      %v3613 = vsel %vm734, %v3592, 0.0
      %3614 = vadd.xlane.f32.xlu0 %v3613
      %v3615 = vpop.xlane.xlu0 %3614
      %v3616 = vsel %vm734, %v3594, 0.0
      %3617 = vadd.xlane.f32.xlu0 %v3616
      %v3618 = vpop.xlane.xlu0 %3617
      %v3619 = vrcp.pop %v3597
      %v3620 = vrcp.pop %v3600
      %v3621 = vrcp.pop %v3603
      %v3622 = vrcp.pop %v3606
      %v3623 = vrcp.pop %v3609
      %v3624 = vrcp.pop %v3612
      %v3625 = vrcp.pop %v3615
      %v3626 = vrcp.pop %v3618
      %v3627 = vmul.f32 %v3580, %v3619
      %v3628 = vmul.f32 %v3582, %v3620
      %v3629 = vmul.f32 %v3584, %v3621
      %v3630 = vmul.f32 %v3586, %v3622
      %v3631 = vmul.f32 %v3588, %v3623
      %v3632 = vmul.f32 %v3590, %v3624
      %v3633 = vmul.f32 %v3592, %v3625
      %v3634 = vmul.f32 %v3594, %v3626
      %v3635 = vpack.c.bf16 %v3628, %v3627
      %v3636 = vpack.c.bf16 %v3630, %v3629
      %v3637 = vpack.c.bf16 %v3632, %v3631
      %v3638 = vpack.c.bf16 %v3634, %v3633
      %3639 = vrot.lane.b32.xlu0 %v3434, 64
      %v3640 = vpop.permute.xlu0 %3639
      %3641 = vrot.lane.b32.xlu0 %v3435, 64
      %v3642 = vpop.permute.xlu0 %3641
      %3643 = vrot.lane.b32.xlu0 %v3436, 64
      %v3644 = vpop.permute.xlu0 %3643
      %3645 = vrot.lane.b32.xlu0 %v3437, 64
      %v3646 = vpop.permute.xlu0 %3645
      %v3652 = vsel %vm734, %v3635, 0
      %v3655 = vsel %vm734, %v3636, 0
      %v3658 = vsel %vm734, %v3637, 0
      %v3661 = vsel %vm734, %v3638, 0
      %3663 = vmatprep.subr.bf16.mxu0 0
      %3664 = vmatpush1.bf16.msra.mxu0 %v3640
      %3665 = vmatprep.subr.bf16.mxu0 0
      %3666 = vmatpush1.bf16.msra.mxu0 %v3642
      %3667 = vmatprep.subr.bf16.mxu0 0
      %3668 = vmatpush1.bf16.msra.mxu0 %v3644
      %3669 = vmatprep.subr.bf16.mxu0 0
      %3670 = vmatpush1.bf16.msra.mxu0 %v3646
      %3671 = vmatprep.subr.bf16.mxu0 0
      %3672 = vmatpush1.bf16.msra.mxu0 0
      %3673 = vmatprep.subr.bf16.mxu0 0
      %3674 = vmatpush1.bf16.msra.mxu0 0
      %3675 = vmatprep.subr.bf16.mxu0 0
      %3676 = vmatpush1.bf16.msra.mxu0 0
      %3677 = vmatprep.subr.bf16.mxu0 0
      %3678 = vmatpush1.bf16.msra.mxu0 0
      %3679 = vmatprep.subr.bf16.mxu0 0
      %3680 = vmatpush1.bf16.msra.mxu0 0
      %3681 = vmatprep.subr.bf16.mxu0 0
      %3682 = vmatpush1.bf16.msra.mxu0 0
      %3683 = vmatprep.subr.bf16.mxu0 0
      %3684 = vmatpush1.bf16.msra.mxu0 0
      %3685 = vmatprep.subr.bf16.mxu0 0
      %3686 = vmatpush1.bf16.msra.mxu0 0
      %3687 = vmatprep.subr.bf16.mxu0 0
      %3688 = vmatpush1.bf16.msra.mxu0 0
      %3689 = vmatprep.subr.bf16.mxu0 0
      %3690 = vmatpush1.bf16.msra.mxu0 0
      %3691 = vmatprep.subr.bf16.mxu0 0
      %3692 = vmatpush1.bf16.msra.mxu0 0
      %3693 = vmatprep.subr.bf16.mxu0 0
      %3694 = vmatpush1.bf16.msra.mxu0 0
      %3695 = vmatprep.mubr.bf16.mxu0 0
      %3696 = vmatmul.mubr.bf16.gmra.mrb[0].mxu0 %v3652
      %v3697 = vpop.f32.mrb[0].mxu0
      %v3698 = vadd.f32 0.0, %v3697
      %v3699 = vpop.f32.mrb[0].mxu0
      %v3700 = vpop.f32.mrb[0].mxu0
      %v3701 = vadd.f32 0.0, %v3700
      %v3702 = vpop.f32.mrb[0].mxu0
      %3703 = vmatprep.mubr.bf16.mxu0 0
      %3704 = vmatmul.mubr.bf16.gmra.mrb[0].mxu0 %v3655
      %v3705 = vpop.f32.mrb[0].mxu0
      %v3706 = vadd.f32 0.0, %v3705
      %v3707 = vpop.f32.mrb[0].mxu0
      %v3708 = vpop.f32.mrb[0].mxu0
      %v3709 = vadd.f32 0.0, %v3708
      %v3710 = vpop.f32.mrb[0].mxu0
      %3711 = vmatprep.mubr.bf16.mxu0 0
      %3712 = vmatmul.mubr.bf16.gmra.mrb[0].mxu0 %v3658
      %v3713 = vpop.f32.mrb[0].mxu0
      %v3714 = vadd.f32 0.0, %v3713
      %v3715 = vpop.f32.mrb[0].mxu0
      %v3716 = vpop.f32.mrb[0].mxu0
      %v3717 = vadd.f32 0.0, %v3716
      %v3718 = vpop.f32.mrb[0].mxu0
      %3719 = vmatprep.mubr.bf16.mxu0 0
      %3720 = vmatmul.mubr.bf16.gmra.mrb[0].mxu0 %v3661
      %v3721 = vpop.f32.mrb[0].mxu0
      %v3722 = vadd.f32 0.0, %v3721
      %v3723 = vpop.f32.mrb[0].mxu0
      %v3724 = vpop.f32.mrb[0].mxu0
      %v3725 = vadd.f32 0.0, %v3724
      %v3726 = vpop.f32.mrb[0].mxu0
      %3727 = vdwg.mxu0
      %v3728 = vpack.c.bf16 %v3701, %v3698
      %v3729 = vpack.c.bf16 %v3709, %v3706
      %v3730 = vpack.c.bf16 %v3717, %v3714
      %v3731 = vpack.c.bf16 %v3725, %v3722
      %v3732 = vld [vmem:[%s21] sm:$0xf]
      %v3733 = vld [vmem:[%s21 + $0x4] sm:$0xf]
      %v3734 = vld [vmem:[%s21 + $0x8] sm:$0xf]
      %v3735 = vld [vmem:[%s21 + $0xc] sm:$0xf]
      %v3740 = vunpack.c.l.b16 %v3732
      %v3741 = vunpack.c.l.b16 %v3733
      %v3742 = vunpack.c.l.b16 %v3734
      %v3743 = vunpack.c.l.b16 %v3735
      %v3744 = vpack.c.b16 %v3741, %v3740
      %v3745 = vpack.c.b16 %v3743, %v3742
      %v3749 = vsel %vm2238, %v3728, 0
      %v3752 = vsel %vm2238, %v3729, 0
      %v3755 = vsel %vm2238, %v3730, 0
      %v3758 = vsel %vm2238, %v3731, 0
      %3760 = vmatprep.subr.bf16.mxu0 0
      %3761 = vmatpush1.bf16.msra.mxu0 %v3744
      %3762 = vmatprep.subr.bf16.mxu0 0
      %3763 = vmatpush1.bf16.msra.mxu0 %v3745
      %3764 = vmatprep.subr.bf16.mxu0 0
      %3765 = vmatpush1.bf16.msra.mxu0 0
      %3766 = vmatprep.subr.bf16.mxu0 0
      %3767 = vmatpush1.bf16.msra.mxu0 0
      %3768 = vmatprep.subr.bf16.mxu0 0
      %3769 = vmatpush1.bf16.msra.mxu0 0
      %3770 = vmatprep.subr.bf16.mxu0 0
      %3771 = vmatpush1.bf16.msra.mxu0 0
      %3772 = vmatprep.subr.bf16.mxu0 0
      %3773 = vmatpush1.bf16.msra.mxu0 0
      %3774 = vmatprep.subr.bf16.mxu0 0
      %3775 = vmatpush1.bf16.msra.mxu0 0
      %3776 = vmatprep.subr.bf16.mxu0 0
      %3777 = vmatpush1.bf16.msra.mxu0 0
      %3778 = vmatprep.subr.bf16.mxu0 0
      %3779 = vmatpush1.bf16.msra.mxu0 0
      %3780 = vmatprep.subr.bf16.mxu0 0
      %3781 = vmatpush1.bf16.msra.mxu0 0
      %3782 = vmatprep.subr.bf16.mxu0 0
      %3783 = vmatpush1.bf16.msra.mxu0 0
      %3784 = vmatprep.subr.bf16.mxu0 0
      %3785 = vmatpush1.bf16.msra.mxu0 0
      %3786 = vmatprep.subr.bf16.mxu0 0
      %3787 = vmatpush1.bf16.msra.mxu0 0
      %3788 = vmatprep.subr.bf16.mxu0 0
      %3789 = vmatpush1.bf16.msra.mxu0 0
      %3790 = vmatprep.subr.bf16.mxu0 0
      %3791 = vmatpush1.bf16.msra.mxu0 0
      %3792 = vmatprep.mubr.bf16.mxu0 0
      %3793 = vmatmul.mubr.bf16.gmra.mrb[0].mxu0 %v3749
      %v3794 = vpop.f32.mrb[0].mxu0
      %v3795 = vadd.f32 0.0, %v3794
      %v3796 = vpop.f32.mrb[0].mxu0
      %v3797 = vpop.f32.mrb[0].mxu0
      %v3798 = vadd.f32 0.0, %v3797
      %v3799 = vpop.f32.mrb[0].mxu0
      %3800 = vmatprep.mubr.bf16.mxu0 0
      %3801 = vmatmul.mubr.bf16.gmra.mrb[0].mxu0 %v3752
      %v3802 = vpop.f32.mrb[0].mxu0
      %v3803 = vadd.f32 0.0, %v3802
      %v3804 = vpop.f32.mrb[0].mxu0
      %v3805 = vpop.f32.mrb[0].mxu0
      %v3806 = vadd.f32 0.0, %v3805
      %v3807 = vpop.f32.mrb[0].mxu0
      %3808 = vmatprep.mubr.bf16.mxu0 0
      %3809 = vmatmul.mubr.bf16.gmra.mrb[0].mxu0 %v3755
      %v3810 = vpop.f32.mrb[0].mxu0
      %v3811 = vadd.f32 0.0, %v3810
      %v3812 = vpop.f32.mrb[0].mxu0
      %v3813 = vpop.f32.mrb[0].mxu0
      %v3814 = vadd.f32 0.0, %v3813
      %v3815 = vpop.f32.mrb[0].mxu0
      %3816 = vmatprep.mubr.bf16.mxu0 0
      %3817 = vmatmul.mubr.bf16.gmra.mrb[0].mxu0 %v3758
      %v3818 = vpop.f32.mrb[0].mxu0
      %v3819 = vadd.f32 0.0, %v3818
      %v3820 = vpop.f32.mrb[0].mxu0
      %v3821 = vpop.f32.mrb[0].mxu0
      %v3822 = vadd.f32 0.0, %v3821
      %v3823 = vpop.f32.mrb[0].mxu0
      %3824 = vdwg.mxu0
      %v3825 = vld [vmem:[%s22] sm:$0x1]
      %v3827 = vlaneseq
      %v3828 = vshrl.u32 %v3827, 7
      %v3829 = vsub.s32 0, %v3828
      %v3830 = vrot.slane %v3825, %v3829
      %v3832 = vadd.f32 %v3795, %v3830
      %v3833 = vadd.f32 %v3798, %v3830
      %v3834 = vadd.f32 %v3803, %v3830
      %v3835 = vadd.f32 %v3806, %v3830
      %v3836 = vadd.f32 %v3811, %v3830
      %v3837 = vadd.f32 %v3814, %v3830
      %v3838 = vadd.f32 %v3819, %v3830
      %v3839 = vadd.f32 %v3822, %v3830
      %v3840 = vadd.f32 %v3832, %v3314
      %v3841 = vadd.f32 %v3833, %v3315
      %v3842 = vadd.f32 %v3834, %v3316
      %v3843 = vadd.f32 %v3835, %v3317
      %v3844 = vadd.f32 %v3836, %v3318
      %v3845 = vadd.f32 %v3837, %v3319
      %v3846 = vadd.f32 %v3838, %v3320
      %v3847 = vadd.f32 %v3839, %v3321
      %3848 = vst.msk [vmem:[%s724] sm:$0xff] %vm2238, %v3840
      %3849 = vst.msk [vmem:[%s724 + $0x8] sm:$0xff] %vm2238, %v3841
      %3850 = vst.msk [vmem:[%s724 + $0x10] sm:$0xff] %vm2238, %v3842
      %3851 = vst.msk [vmem:[%s724 + $0x18] sm:$0xff] %vm2238, %v3843
      %3852 = vst.msk [vmem:[%s724 + $0x20] sm:$0xff] %vm2238, %v3844
      %3853 = vst.msk [vmem:[%s724 + $0x28] sm:$0xff] %vm2238, %v3845
      %3854 = vst.msk [vmem:[%s724 + $0x30] sm:$0xff] %vm2238, %v3846
      %3855 = vst.msk [vmem:[%s724 + $0x38] sm:$0xff] %vm2238, %v3847
      %p3856 = scmp.lt.s32.totalorder %s34, 1
      %s3857 = scalar_select %p3856, %s34, 1
      %s3858 = smul.addr %s3857, 8
      %s3859 = smul.addr %s3858, 8
      %s3860 = scalar_lea.vmem %s23, %s3859
      // Predicated region
      $region113: #{tpu_custom_call.1} parent=111 // pred_check
        %p3861 = pneg %p545
      $region114: #{tpu_custom_call.1} parent=111 // pred_check_branch
        %3863 = sbr.rel (%p3861) target = $region116
      $region115: #{tpu_custom_call.1} parent=111 // pred_region
        _
      $region116: #{tpu_custom_call.1} parent=111 // pred_fallthru
        _
    $region112: #{tpu_custom_call.1} parent=5 // pred_fallthru
      _
    %p3864 = scmp.le.s32.totalorder 2, %s29
    // Predicated region
    $region117: #{tpu_custom_call.1} parent=5 // pred_check
      %p3865 = pneg %p3864
    $region118: #{tpu_custom_call.1} parent=5 // pred_check_branch
      %3867 = sbr.rel (%p3865) target = $region120
    $region119: #{tpu_custom_call.1} parent=5 // pred_region
      %s3868 = ssub.s32 %s29, 2
      // Predicated region
      $region121: #{tpu_custom_call.1} parent=119 // pred_check
        %p3869 = pneg %p551
      $region122: #{tpu_custom_call.1} parent=119 // pred_check_branch
        %3871 = sbr.rel (%p3869) target = $region124
      $region123: #{tpu_custom_call.1} parent=119 // pred_region
        %p3872 = scmp.lt.s32.totalorder %s35, 1
        %s3873 = scalar_select %p3872, %s35, 1
        %s3874 = smul.addr %s3873, 8
        %s3875 = smul.addr %s3874, 8
        %s3876 = scalar_lea.vmem %s23, %s3875
      $region124: #{tpu_custom_call.1} parent=119 // pred_fallthru
        _
    $region120: #{tpu_custom_call.1} parent=5 // pred_fallthru
      _
  $region6: #{tpu_custom_call.1} parent=0 // loop_footer
    %s33 = sadd.s32 1, %s29
  $region7: #{tpu_custom_call.1} parent=0 // loop_footer_branch
    %28 = sbr.rel target = $region3
  $region8: #{tpu_custom_call.1} parent=0 // loop_exit
    _

</llo_original>
